<compile_context>
chip_gen: v7x
topology: tpu7x:2x2x1
jax: 0.10.0
libtpu: 0.0.40
codegen_flags: <defaults>
</compile_context>

<pallas_src>
import jax
import jax.numpy as jnp
from jax import lax
from jax.experimental import pallas as pl
from jax.experimental.pallas import tpu as pltpu

_TB = 128   # batch-tile width on the lane axis (keep a multiple of 128)


# ----------------------------- Pallas kernel -------------------------------

def _autoenc_kernel(pp_ref, x_ref, o_ref):
    """One batch tile (TB lanes) per grid step.

    pp_ref : (128, 128)      packed parameters (see _pack_params)
    x_ref  : (1, L*TB)       input, lane index = l*TB + b
    o_ref  : (4, (L/4)*TB)   o_ref[q, l*TB + b] == y[b, 4*l + q]
    """
    f32 = jnp.float32
    B = _TB
    L = x_ref.shape[1] // B

    def leaky(v):
        # leaky_relu(v, 0.2) == max(v, 0.2*v) since 0.2 < 1 (mul + max on VPU).
        return jnp.maximum(v, 0.2 * v)

    def shift_dn(v):
        # out[:, l*B+b] = v[:, (l-1)*B+b]; zeros for l == 0   (i.e. x[l-1])
        z = jnp.zeros((v.shape[0], B), f32)
        return jnp.concatenate([z, v[:, :-B]], axis=1)

    def shift_up(v):
        # out[:, l*B+b] = v[:, (l+1)*B+b]; zeros for the last l (i.e. x[l+1])
        z = jnp.zeros((v.shape[0], B), f32)
        return jnp.concatenate([v[:, B:], z], axis=1)

    def maxpool2(v, lc):
        # MaxPool1d(2,2) over the l index of a (C, lc*B) block-flat array.
        # Static, 128-lane-aligned slices only (no relayout-risky reshapes).
        pieces = [jnp.maximum(v[:, (2 * m) * B:(2 * m + 1) * B],
                              v[:, (2 * m + 1) * B:(2 * m + 2) * B])
                  for m in range(lc // 2)]
        return pieces[0] if len(pieces) == 1 else jnp.concatenate(pieces, axis=1)

    x = x_ref[...]                                          # (1, L*B) f32

    # conv1 (Cin=1): VPU broadcast multiply-add over 32 output channels.
    w1 = pp_ref[0:32, 0:3]                                  # (32, 3) taps
    b1 = pp_ref[0:32, 3:4]                                  # (32, 1)
    h1 = leaky(w1[:, 0:1] * shift_dn(x)
               + w1[:, 1:2] * x
               + w1[:, 2:3] * shift_up(x) + b1)             # (32, L*B)
    p1 = maxpool2(h1, L)                                    # (32, L/2*B)

    # conv2: all three taps fused into one MXU matmul (K = 3*32 = 96).
    w2 = pp_ref[32:44, 0:96]                                # (12, 96)
    b2 = pp_ref[32:44, 96:97]                               # (12, 1)
    xc = jnp.concatenate([shift_dn(p1), p1, shift_up(p1)], axis=0)   # (96, L/2*B)
    h2 = leaky(jnp.dot(w2, xc, preferred_element_type=f32) + b2)     # (12, L/2*B)
    p2 = maxpool2(h2, L // 2)                               # (12, L/4*B)

    # t_conv1: both stride-2 taps fused -> rows s*32 + co.
    wt1 = pp_ref[48:112, 0:12]                              # (64, 12)
    tb1 = pp_ref[48:112, 12:13]                             # (64, 1)
    t1 = leaky(jnp.dot(wt1, p2, preferred_element_type=f32) + tb1)   # (64, L/4*B)

    # t_conv2: block-diagonal fused taps -> 4 rows q = 2*s + t (output phase).
    wt2 = pp_ref[112:116, 0:64]                             # (4, 64)
    tb2 = pp_ref[112:116, 64:65]                            # (4, 1)
    o_ref[...] = jnp.tanh(jnp.dot(wt2, t1, preferred_element_type=f32) + tb2)


# ------------------------------- wrapper ------------------------------------

def _pack_params(params):
    """Pack all weights/biases into one (128, 128) f32 block.

    rows   0:32 , cols 0:3   conv1 taps  w1[co, 0, k]         ; col 3   b1
    rows  32:44 , cols 0:96  conv2 fused W2[co, k*32 + ci]    ; col 96  b2
    rows  48:112, cols 0:12  t_conv1 fused Wt1[s*32 + co, ci] ; col 12  tb1
    rows 112:116, cols 0:64  t_conv2 block-diag Wt2[2s+t, .]  ; col 64  tb2
    """
    w1, b1, w2, b2, tw1, tb1, tw2, tb2 = [p.astype(jnp.float32) for p in params]
    pp = jnp.zeros((128, 128), jnp.float32)
    pp = pp.at[0:32, 0:3].set(w1[:, 0, :])
    pp = pp.at[0:32, 3].set(b1)
    pp = pp.at[32:44, 0:96].set(jnp.transpose(w2, (0, 2, 1)).reshape(12, 96))
    pp = pp.at[32:44, 96].set(b2)
    pp = pp.at[48:112, 0:12].set(jnp.transpose(tw1, (2, 1, 0)).reshape(64, 12))
    pp = pp.at[48:112, 12].set(jnp.concatenate([tb1, tb1]))
    wt2m = tw2[:, 0, :].T                                    # (2, 32): [t, ci]
    pp = pp.at[112:114, 0:32].set(wt2m)                      # s=0 -> q in {0,1}
    pp = pp.at[114:116, 32:64].set(wt2m)                     # s=1 -> q in {2,3}
    pp = pp.at[112:116, 64].set(tb2[0])
    return pp


def conv_autoencoder_forward(x, params):
    """x: (N, 1, L) float32 (PyTorch NCL).  Returns (N, 1, L)."""
    n, cin, length = x.shape
    assert cin == 1 and length % 4 == 0
    tb = _TB
    g = -(-n // tb)                       # number of 128-wide batch tiles
    npad = g * tb
    l4 = length // 4

    pp = _pack_params(params)

    # (N, 1, L) -> (G, 1, L*TB) with lane index l*TB + b (batch on lanes).
    xf = x[:, 0, :].astype(jnp.float32)
    xf = jnp.pad(xf, ((0, npad - n), (0, 0)))
    xf = xf.reshape(g, tb, length).transpose(0, 2, 1).reshape(g, 1, length * tb)

    # TODO(synk): on v7x a single grid step (tiny N) leaves one TensorCore
    #             idle; large N gives g >= 2 "parallel" steps automatically.
    out4 = pl.pallas_call(
        _autoenc_kernel,
        out_shape=jax.ShapeDtypeStruct((g, 4, l4 * tb), jnp.float32),
        grid=(g,),
        in_specs=[
            pl.BlockSpec((128, 128), lambda i: (0, 0)),                 # params
            pl.BlockSpec((None, 1, length * tb), lambda i: (i, 0, 0)),  # x tile
        ],
        out_specs=pl.BlockSpec((None, 4, l4 * tb), lambda i: (i, 0, 0)),
        compiler_params=pltpu.CompilerParams(dimension_semantics=("parallel",)),
    )(pp, xf)

    # out4[gi, q, l*TB + b] == y[gi*TB + b, 4*l + q]
    y = out4.reshape(g, 4, l4, tb).transpose(0, 3, 2, 1).reshape(npad, length)
    return y[:n, None, :]


# --------------------------- pure-JAX reference ------------------------------

def reference_forward(x, params):
    w1, b1, w2, b2, tw1, tb1, tw2, tb2 = params

    def conv1d(v, w, b):
        y = lax.conv_general_dilated(v, w, window_strides=(1,), padding=((1, 1),),
                                     dimension_numbers=("NCH", "OIH", "NCH"))
        return y + b[None, :, None]

    def leaky(v):
        return jnp.where(v > 0, v, 0.2 * v)

    def pool(v):
        nb, c, lv = v.shape
        return v.reshape(nb, c, lv // 2, 2).max(-1)

    def tconv(v, w, b):  # stride=2, kernel=2 transposed conv, w: (Cin, Cout, 2)
        y = jnp.einsum("ncl,cok->nolk", v, w)
        nb, co, lv, k = y.shape
        return y.reshape(nb, co, lv * k) + b[None, :, None]

    h = pool(leaky(conv1d(x, w1, b1)))
    h = pool(leaky(conv1d(h, w2, b2)))
    h = leaky(tconv(h, tw1, tb1))
    return jnp.tanh(tconv(h, tw2, tb2))


# ---------------------------------- main -------------------------------------

def init_params(key):
    ks = jax.random.split(key, 8)

    def u(k, shape, fan):
        bound = 1.0 / jnp.sqrt(jnp.float32(fan))
        return jax.random.uniform(k, shape, jnp.float32, -bound, bound)

    w1 = u(ks[0], (32, 1, 3), 1 * 3)     # Conv1d(1, 32, 3)
    b1 = u(ks[1], (32,), 1 * 3)
    w2 = u(ks[2], (12, 32, 3), 32 * 3)   # Conv1d(32, 12, 3)
    b2 = u(ks[3], (12,), 32 * 3)
    tw1 = u(ks[4], (12, 32, 2), 12 * 2)  # ConvTranspose1d(12, 32, 2, stride=2)
    tb1 = u(ks[5], (32,), 12 * 2)
    tw2 = u(ks[6], (32, 1, 2), 32 * 2)   # ConvTranspose1d(32, 1, 2, stride=2)
    tb2 = u(ks[7], (1,), 32 * 2)
    return (w1, b1, w2, b2, tw1, tb1, tw2, tb2)


if __name__ == "__main__":
    key = jax.random.PRNGKey(0)
    pkey, xkey = jax.random.split(key)
    params = init_params(pkey)

    N, L = 2, 64
    x = jax.random.normal(xkey, (N, 1, L), jnp.float32)

    out = jax.jit(conv_autoencoder_forward)(x, params)
    out = jax.block_until_ready(out)

    ref = jax.block_until_ready(reference_forward(x, params))
    assert out.shape == (N, 1, L)
    assert jnp.allclose(out, ref, atol=2e-3, rtol=2e-3), "mismatch vs reference"

    print("KERNEL_OK")
</pallas_src>

<mosaic_0001>
module attributes {stable_mosaic.version = 11 : i64} {
  func.func @_autoenc_kernel(%arg0: i32, %arg1: memref<128x128xf32, #tpu.memory_space<vmem>>, %arg2: memref<1x1x8192xf32, #tpu.memory_space<vmem>>, %arg3: memref<1x4x2048xf32, #tpu.memory_space<vmem>>) attributes {dimension_semantics = [#tpu.dimension_semantics<parallel>], iteration_bounds = array<i64: 1>, scalar_prefetch = 0 : i64, scratch_operands = 0 : i64, tpu.core_type = #tpu.core_type<tc>, window_params = [{pipeline_mode = #tpu.pipeline_mode<synchronous>, transform_indices = @transform_0, window_bounds = array<i64: 128, 128>}, {transform_indices = @transform_1, window_bounds = array<i64: 1, 1, 8192>}, {transform_indices = @transform_2, window_bounds = array<i64: 1, 4, 2048>}]} {
    %c0 = arith.constant 0 : index
    %c0_0 = arith.constant 0 : index
    %c0_1 = arith.constant 0 : index
    %0 = vector.load %arg2[%c0, %c0_0, %c0_1] : memref<1x1x8192xf32, #tpu.memory_space<vmem>>, vector<1x1x8192xf32>
    %1 = vector.shape_cast %0 : vector<1x1x8192xf32> to vector<1x8192xf32>
    %c0_2 = arith.constant 0 : index
    %c0_3 = arith.constant 0 : index
    %2 = vector.load %arg1[%c0_2, %c0_3] : memref<128x128xf32, #tpu.memory_space<vmem>>, vector<32x3xf32>
    %c0_4 = arith.constant 0 : index
    %c3 = arith.constant 3 : index
    %3 = vector.load %arg1[%c0_4, %c3] : memref<128x128xf32, #tpu.memory_space<vmem>>, vector<32x1xf32>
    %4 = vector.extract_strided_slice %2 {offsets = [0, 0], sizes = [32, 1], strides = [1, 1]} : vector<32x3xf32> to vector<32x1xf32>
    %cst = arith.constant 0.000000e+00 : f32
    %5 = vector.broadcast %cst : f32 to vector<1x128xf32>
    %6 = vector.extract_strided_slice %1 {offsets = [0, 0], sizes = [1, 8064], strides = [1, 1]} : vector<1x8192xf32> to vector<1x8064xf32>
    %7 = tpu.concatenate %5, %6 in 1 : vector<1x128xf32>, vector<1x8064xf32> -> vector<1x8192xf32>
    %8 = vector.broadcast %4 : vector<32x1xf32> to vector<32x8192xf32>
    %9 = vector.broadcast %7 : vector<1x8192xf32> to vector<32x8192xf32>
    %10 = arith.mulf %8, %9 : vector<32x8192xf32>
    %11 = vector.extract_strided_slice %2 {offsets = [0, 1], sizes = [32, 1], strides = [1, 1]} : vector<32x3xf32> to vector<32x1xf32>
    %12 = vector.broadcast %11 : vector<32x1xf32> to vector<32x8192xf32>
    %13 = vector.broadcast %1 : vector<1x8192xf32> to vector<32x8192xf32>
    %14 = arith.mulf %12, %13 : vector<32x8192xf32>
    %15 = arith.addf %10, %14 : vector<32x8192xf32>
    %16 = vector.extract_strided_slice %2 {offsets = [0, 2], sizes = [32, 1], strides = [1, 1]} : vector<32x3xf32> to vector<32x1xf32>
    %cst_5 = arith.constant 0.000000e+00 : f32
    %17 = vector.broadcast %cst_5 : f32 to vector<1x128xf32>
    %18 = vector.extract_strided_slice %1 {offsets = [0, 128], sizes = [1, 8064], strides = [1, 1]} : vector<1x8192xf32> to vector<1x8064xf32>
    %19 = tpu.concatenate %18, %17 in 1 : vector<1x8064xf32>, vector<1x128xf32> -> vector<1x8192xf32>
    %20 = vector.broadcast %16 : vector<32x1xf32> to vector<32x8192xf32>
    %21 = vector.broadcast %19 : vector<1x8192xf32> to vector<32x8192xf32>
    %22 = arith.mulf %20, %21 : vector<32x8192xf32>
    %23 = arith.addf %15, %22 : vector<32x8192xf32>
    %24 = vector.broadcast %3 : vector<32x1xf32> to vector<32x8192xf32>
    %25 = arith.addf %23, %24 : vector<32x8192xf32>
    %cst_6 = arith.constant 2.000000e-01 : f32
    %26 = vector.broadcast %cst_6 : f32 to vector<32x8192xf32>
    %27 = arith.mulf %26, %25 : vector<32x8192xf32>
    %28 = arith.maximumf %25, %27 : vector<32x8192xf32>
    %29 = vector.extract_strided_slice %28 {offsets = [0, 0], sizes = [32, 128], strides = [1, 1]} : vector<32x8192xf32> to vector<32x128xf32>
    %30 = vector.extract_strided_slice %28 {offsets = [0, 128], sizes = [32, 128], strides = [1, 1]} : vector<32x8192xf32> to vector<32x128xf32>
    %31 = arith.maximumf %29, %30 : vector<32x128xf32>
    %32 = vector.extract_strided_slice %28 {offsets = [0, 256], sizes = [32, 128], strides = [1, 1]} : vector<32x8192xf32> to vector<32x128xf32>
    %33 = vector.extract_strided_slice %28 {offsets = [0, 384], sizes = [32, 128], strides = [1, 1]} : vector<32x8192xf32> to vector<32x128xf32>
    %34 = arith.maximumf %32, %33 : vector<32x128xf32>
    %35 = vector.extract_strided_slice %28 {offsets = [0, 512], sizes = [32, 128], strides = [1, 1]} : vector<32x8192xf32> to vector<32x128xf32>
    %36 = vector.extract_strided_slice %28 {offsets = [0, 640], sizes = [32, 128], strides = [1, 1]} : vector<32x8192xf32> to vector<32x128xf32>
    %37 = arith.maximumf %35, %36 : vector<32x128xf32>
    %38 = vector.extract_strided_slice %28 {offsets = [0, 768], sizes = [32, 128], strides = [1, 1]} : vector<32x8192xf32> to vector<32x128xf32>
    %39 = vector.extract_strided_slice %28 {offsets = [0, 896], sizes = [32, 128], strides = [1, 1]} : vector<32x8192xf32> to vector<32x128xf32>
    %40 = arith.maximumf %38, %39 : vector<32x128xf32>
    %41 = vector.extract_strided_slice %28 {offsets = [0, 1024], sizes = [32, 128], strides = [1, 1]} : vector<32x8192xf32> to vector<32x128xf32>
    %42 = vector.extract_strided_slice %28 {offsets = [0, 1152], sizes = [32, 128], strides = [1, 1]} : vector<32x8192xf32> to vector<32x128xf32>
    %43 = arith.maximumf %41, %42 : vector<32x128xf32>
    %44 = vector.extract_strided_slice %28 {offsets = [0, 1280], sizes = [32, 128], strides = [1, 1]} : vector<32x8192xf32> to vector<32x128xf32>
    %45 = vector.extract_strided_slice %28 {offsets = [0, 1408], sizes = [32, 128], strides = [1, 1]} : vector<32x8192xf32> to vector<32x128xf32>
    %46 = arith.maximumf %44, %45 : vector<32x128xf32>
    %47 = vector.extract_strided_slice %28 {offsets = [0, 1536], sizes = [32, 128], strides = [1, 1]} : vector<32x8192xf32> to vector<32x128xf32>
    %48 = vector.extract_strided_slice %28 {offsets = [0, 1664], sizes = [32, 128], strides = [1, 1]} : vector<32x8192xf32> to vector<32x128xf32>
    %49 = arith.maximumf %47, %48 : vector<32x128xf32>
    %50 = vector.extract_strided_slice %28 {offsets = [0, 1792], sizes = [32, 128], strides = [1, 1]} : vector<32x8192xf32> to vector<32x128xf32>
    %51 = vector.extract_strided_slice %28 {offsets = [0, 1920], sizes = [32, 128], strides = [1, 1]} : vector<32x8192xf32> to vector<32x128xf32>
    %52 = arith.maximumf %50, %51 : vector<32x128xf32>
    %53 = vector.extract_strided_slice %28 {offsets = [0, 2048], sizes = [32, 128], strides = [1, 1]} : vector<32x8192xf32> to vector<32x128xf32>
    %54 = vector.extract_strided_slice %28 {offsets = [0, 2176], sizes = [32, 128], strides = [1, 1]} : vector<32x8192xf32> to vector<32x128xf32>
    %55 = arith.maximumf %53, %54 : vector<32x128xf32>
    %56 = vector.extract_strided_slice %28 {offsets = [0, 2304], sizes = [32, 128], strides = [1, 1]} : vector<32x8192xf32> to vector<32x128xf32>
    %57 = vector.extract_strided_slice %28 {offsets = [0, 2432], sizes = [32, 128], strides = [1, 1]} : vector<32x8192xf32> to vector<32x128xf32>
    %58 = arith.maximumf %56, %57 : vector<32x128xf32>
    %59 = vector.extract_strided_slice %28 {offsets = [0, 2560], sizes = [32, 128], strides = [1, 1]} : vector<32x8192xf32> to vector<32x128xf32>
    %60 = vector.extract_strided_slice %28 {offsets = [0, 2688], sizes = [32, 128], strides = [1, 1]} : vector<32x8192xf32> to vector<32x128xf32>
    %61 = arith.maximumf %59, %60 : vector<32x128xf32>
    %62 = vector.extract_strided_slice %28 {offsets = [0, 2816], sizes = [32, 128], strides = [1, 1]} : vector<32x8192xf32> to vector<32x128xf32>
    %63 = vector.extract_strided_slice %28 {offsets = [0, 2944], sizes = [32, 128], strides = [1, 1]} : vector<32x8192xf32> to vector<32x128xf32>
    %64 = arith.maximumf %62, %63 : vector<32x128xf32>
    %65 = vector.extract_strided_slice %28 {offsets = [0, 3072], sizes = [32, 128], strides = [1, 1]} : vector<32x8192xf32> to vector<32x128xf32>
    %66 = vector.extract_strided_slice %28 {offsets = [0, 3200], sizes = [32, 128], strides = [1, 1]} : vector<32x8192xf32> to vector<32x128xf32>
    %67 = arith.maximumf %65, %66 : vector<32x128xf32>
    %68 = vector.extract_strided_slice %28 {offsets = [0, 3328], sizes = [32, 128], strides = [1, 1]} : vector<32x8192xf32> to vector<32x128xf32>
    %69 = vector.extract_strided_slice %28 {offsets = [0, 3456], sizes = [32, 128], strides = [1, 1]} : vector<32x8192xf32> to vector<32x128xf32>
    %70 = arith.maximumf %68, %69 : vector<32x128xf32>
    %71 = vector.extract_strided_slice %28 {offsets = [0, 3584], sizes = [32, 128], strides = [1, 1]} : vector<32x8192xf32> to vector<32x128xf32>
    %72 = vector.extract_strided_slice %28 {offsets = [0, 3712], sizes = [32, 128], strides = [1, 1]} : vector<32x8192xf32> to vector<32x128xf32>
    %73 = arith.maximumf %71, %72 : vector<32x128xf32>
    %74 = vector.extract_strided_slice %28 {offsets = [0, 3840], sizes = [32, 128], strides = [1, 1]} : vector<32x8192xf32> to vector<32x128xf32>
    %75 = vector.extract_strided_slice %28 {offsets = [0, 3968], sizes = [32, 128], strides = [1, 1]} : vector<32x8192xf32> to vector<32x128xf32>
    %76 = arith.maximumf %74, %75 : vector<32x128xf32>
    %77 = vector.extract_strided_slice %28 {offsets = [0, 4096], sizes = [32, 128], strides = [1, 1]} : vector<32x8192xf32> to vector<32x128xf32>
    %78 = vector.extract_strided_slice %28 {offsets = [0, 4224], sizes = [32, 128], strides = [1, 1]} : vector<32x8192xf32> to vector<32x128xf32>
    %79 = arith.maximumf %77, %78 : vector<32x128xf32>
    %80 = vector.extract_strided_slice %28 {offsets = [0, 4352], sizes = [32, 128], strides = [1, 1]} : vector<32x8192xf32> to vector<32x128xf32>
    %81 = vector.extract_strided_slice %28 {offsets = [0, 4480], sizes = [32, 128], strides = [1, 1]} : vector<32x8192xf32> to vector<32x128xf32>
    %82 = arith.maximumf %80, %81 : vector<32x128xf32>
    %83 = vector.extract_strided_slice %28 {offsets = [0, 4608], sizes = [32, 128], strides = [1, 1]} : vector<32x8192xf32> to vector<32x128xf32>
    %84 = vector.extract_strided_slice %28 {offsets = [0, 4736], sizes = [32, 128], strides = [1, 1]} : vector<32x8192xf32> to vector<32x128xf32>
    %85 = arith.maximumf %83, %84 : vector<32x128xf32>
    %86 = vector.extract_strided_slice %28 {offsets = [0, 4864], sizes = [32, 128], strides = [1, 1]} : vector<32x8192xf32> to vector<32x128xf32>
    %87 = vector.extract_strided_slice %28 {offsets = [0, 4992], sizes = [32, 128], strides = [1, 1]} : vector<32x8192xf32> to vector<32x128xf32>
    %88 = arith.maximumf %86, %87 : vector<32x128xf32>
    %89 = vector.extract_strided_slice %28 {offsets = [0, 5120], sizes = [32, 128], strides = [1, 1]} : vector<32x8192xf32> to vector<32x128xf32>
    %90 = vector.extract_strided_slice %28 {offsets = [0, 5248], sizes = [32, 128], strides = [1, 1]} : vector<32x8192xf32> to vector<32x128xf32>
    %91 = arith.maximumf %89, %90 : vector<32x128xf32>
    %92 = vector.extract_strided_slice %28 {offsets = [0, 5376], sizes = [32, 128], strides = [1, 1]} : vector<32x8192xf32> to vector<32x128xf32>
    %93 = vector.extract_strided_slice %28 {offsets = [0, 5504], sizes = [32, 128], strides = [1, 1]} : vector<32x8192xf32> to vector<32x128xf32>
    %94 = arith.maximumf %92, %93 : vector<32x128xf32>
    %95 = vector.extract_strided_slice %28 {offsets = [0, 5632], sizes = [32, 128], strides = [1, 1]} : vector<32x8192xf32> to vector<32x128xf32>
    %96 = vector.extract_strided_slice %28 {offsets = [0, 5760], sizes = [32, 128], strides = [1, 1]} : vector<32x8192xf32> to vector<32x128xf32>
    %97 = arith.maximumf %95, %96 : vector<32x128xf32>
    %98 = vector.extract_strided_slice %28 {offsets = [0, 5888], sizes = [32, 128], strides = [1, 1]} : vector<32x8192xf32> to vector<32x128xf32>
    %99 = vector.extract_strided_slice %28 {offsets = [0, 6016], sizes = [32, 128], strides = [1, 1]} : vector<32x8192xf32> to vector<32x128xf32>
    %100 = arith.maximumf %98, %99 : vector<32x128xf32>
    %101 = vector.extract_strided_slice %28 {offsets = [0, 6144], sizes = [32, 128], strides = [1, 1]} : vector<32x8192xf32> to vector<32x128xf32>
    %102 = vector.extract_strided_slice %28 {offsets = [0, 6272], sizes = [32, 128], strides = [1, 1]} : vector<32x8192xf32> to vector<32x128xf32>
    %103 = arith.maximumf %101, %102 : vector<32x128xf32>
    %104 = vector.extract_strided_slice %28 {offsets = [0, 6400], sizes = [32, 128], strides = [1, 1]} : vector<32x8192xf32> to vector<32x128xf32>
    %105 = vector.extract_strided_slice %28 {offsets = [0, 6528], sizes = [32, 128], strides = [1, 1]} : vector<32x8192xf32> to vector<32x128xf32>
    %106 = arith.maximumf %104, %105 : vector<32x128xf32>
    %107 = vector.extract_strided_slice %28 {offsets = [0, 6656], sizes = [32, 128], strides = [1, 1]} : vector<32x8192xf32> to vector<32x128xf32>
    %108 = vector.extract_strided_slice %28 {offsets = [0, 6784], sizes = [32, 128], strides = [1, 1]} : vector<32x8192xf32> to vector<32x128xf32>
    %109 = arith.maximumf %107, %108 : vector<32x128xf32>
    %110 = vector.extract_strided_slice %28 {offsets = [0, 6912], sizes = [32, 128], strides = [1, 1]} : vector<32x8192xf32> to vector<32x128xf32>
    %111 = vector.extract_strided_slice %28 {offsets = [0, 7040], sizes = [32, 128], strides = [1, 1]} : vector<32x8192xf32> to vector<32x128xf32>
    %112 = arith.maximumf %110, %111 : vector<32x128xf32>
    %113 = vector.extract_strided_slice %28 {offsets = [0, 7168], sizes = [32, 128], strides = [1, 1]} : vector<32x8192xf32> to vector<32x128xf32>
    %114 = vector.extract_strided_slice %28 {offsets = [0, 7296], sizes = [32, 128], strides = [1, 1]} : vector<32x8192xf32> to vector<32x128xf32>
    %115 = arith.maximumf %113, %114 : vector<32x128xf32>
    %116 = vector.extract_strided_slice %28 {offsets = [0, 7424], sizes = [32, 128], strides = [1, 1]} : vector<32x8192xf32> to vector<32x128xf32>
    %117 = vector.extract_strided_slice %28 {offsets = [0, 7552], sizes = [32, 128], strides = [1, 1]} : vector<32x8192xf32> to vector<32x128xf32>
    %118 = arith.maximumf %116, %117 : vector<32x128xf32>
    %119 = vector.extract_strided_slice %28 {offsets = [0, 7680], sizes = [32, 128], strides = [1, 1]} : vector<32x8192xf32> to vector<32x128xf32>
    %120 = vector.extract_strided_slice %28 {offsets = [0, 7808], sizes = [32, 128], strides = [1, 1]} : vector<32x8192xf32> to vector<32x128xf32>
    %121 = arith.maximumf %119, %120 : vector<32x128xf32>
    %122 = vector.extract_strided_slice %28 {offsets = [0, 7936], sizes = [32, 128], strides = [1, 1]} : vector<32x8192xf32> to vector<32x128xf32>
    %123 = vector.extract_strided_slice %28 {offsets = [0, 8064], sizes = [32, 128], strides = [1, 1]} : vector<32x8192xf32> to vector<32x128xf32>
    %124 = arith.maximumf %122, %123 : vector<32x128xf32>
    %125 = tpu.concatenate %31, %34, %37, %40, %43, %46, %49, %52, %55, %58, %61, %64, %67, %70, %73, %76 in 1 : vector<32x128xf32>, vector<32x128xf32>, vector<32x128xf32>, vector<32x128xf32>, vector<32x128xf32>, vector<32x128xf32>, vector<32x128xf32>, vector<32x128xf32>, vector<32x128xf32>, vector<32x128xf32>, vector<32x128xf32>, vector<32x128xf32>, vector<32x128xf32>, vector<32x128xf32>, vector<32x128xf32>, vector<32x128xf32> -> vector<32x2048xf32>
    %126 = tpu.concatenate %79, %82, %85, %88, %91, %94, %97, %100, %103, %106, %109, %112, %115, %118, %121, %124 in 1 : vector<32x128xf32>, vector<32x128xf32>, vector<32x128xf32>, vector<32x128xf32>, vector<32x128xf32>, vector<32x128xf32>, vector<32x128xf32>, vector<32x128xf32>, vector<32x128xf32>, vector<32x128xf32>, vector<32x128xf32>, vector<32x128xf32>, vector<32x128xf32>, vector<32x128xf32>, vector<32x128xf32>, vector<32x128xf32> -> vector<32x2048xf32>
    %127 = tpu.concatenate %125, %126 in 1 : vector<32x2048xf32>, vector<32x2048xf32> -> vector<32x4096xf32>
    %c32 = arith.constant 32 : index
    %c0_7 = arith.constant 0 : index
    %128 = vector.load %arg1[%c32, %c0_7] : memref<128x128xf32, #tpu.memory_space<vmem>>, vector<12x96xf32>
    %c32_8 = arith.constant 32 : index
    %c96 = arith.constant 96 : index
    %129 = vector.load %arg1[%c32_8, %c96] : memref<128x128xf32, #tpu.memory_space<vmem>>, vector<12x1xf32>
    %cst_9 = arith.constant 0.000000e+00 : f32
    %130 = vector.broadcast %cst_9 : f32 to vector<32x128xf32>
    %131 = vector.extract_strided_slice %127 {offsets = [0, 0], sizes = [32, 3968], strides = [1, 1]} : vector<32x4096xf32> to vector<32x3968xf32>
    %132 = tpu.concatenate %130, %131 in 1 : vector<32x128xf32>, vector<32x3968xf32> -> vector<32x4096xf32>
    %cst_10 = arith.constant 0.000000e+00 : f32
    %133 = vector.broadcast %cst_10 : f32 to vector<32x128xf32>
    %134 = vector.extract_strided_slice %127 {offsets = [0, 128], sizes = [32, 3968], strides = [1, 1]} : vector<32x4096xf32> to vector<32x3968xf32>
    %135 = tpu.concatenate %134, %133 in 1 : vector<32x3968xf32>, vector<32x128xf32> -> vector<32x4096xf32>
    %136 = tpu.concatenate %132, %127, %135 in 0 : vector<32x4096xf32>, vector<32x4096xf32>, vector<32x4096xf32> -> vector<96x4096xf32>
    %cst_11 = arith.constant dense<0.000000e+00> : vector<12x4096xf32>
    %137 = tpu.matmul %128, %136, %cst_11 {dimension_numbers = #tpu.dot_dimension_numbers<[1], [0], [0], [1], [0, 0, 1, 1], [], []>} : vector<12x96xf32>, vector<96x4096xf32>, vector<12x4096xf32> -> vector<12x4096xf32>
    %138 = vector.broadcast %129 : vector<12x1xf32> to vector<12x4096xf32>
    %139 = arith.addf %137, %138 : vector<12x4096xf32>
    %cst_12 = arith.constant 2.000000e-01 : f32
    %140 = vector.broadcast %cst_12 : f32 to vector<12x4096xf32>
    %141 = arith.mulf %140, %139 : vector<12x4096xf32>
    %142 = arith.maximumf %139, %141 : vector<12x4096xf32>
    %143 = vector.extract_strided_slice %142 {offsets = [0, 0], sizes = [12, 128], strides = [1, 1]} : vector<12x4096xf32> to vector<12x128xf32>
    %144 = vector.extract_strided_slice %142 {offsets = [0, 128], sizes = [12, 128], strides = [1, 1]} : vector<12x4096xf32> to vector<12x128xf32>
    %145 = arith.maximumf %143, %144 : vector<12x128xf32>
    %146 = vector.extract_strided_slice %142 {offsets = [0, 256], sizes = [12, 128], strides = [1, 1]} : vector<12x4096xf32> to vector<12x128xf32>
    %147 = vector.extract_strided_slice %142 {offsets = [0, 384], sizes = [12, 128], strides = [1, 1]} : vector<12x4096xf32> to vector<12x128xf32>
    %148 = arith.maximumf %146, %147 : vector<12x128xf32>
    %149 = vector.extract_strided_slice %142 {offsets = [0, 512], sizes = [12, 128], strides = [1, 1]} : vector<12x4096xf32> to vector<12x128xf32>
    %150 = vector.extract_strided_slice %142 {offsets = [0, 640], sizes = [12, 128], strides = [1, 1]} : vector<12x4096xf32> to vector<12x128xf32>
    %151 = arith.maximumf %149, %150 : vector<12x128xf32>
    %152 = vector.extract_strided_slice %142 {offsets = [0, 768], sizes = [12, 128], strides = [1, 1]} : vector<12x4096xf32> to vector<12x128xf32>
    %153 = vector.extract_strided_slice %142 {offsets = [0, 896], sizes = [12, 128], strides = [1, 1]} : vector<12x4096xf32> to vector<12x128xf32>
    %154 = arith.maximumf %152, %153 : vector<12x128xf32>
    %155 = vector.extract_strided_slice %142 {offsets = [0, 1024], sizes = [12, 128], strides = [1, 1]} : vector<12x4096xf32> to vector<12x128xf32>
    %156 = vector.extract_strided_slice %142 {offsets = [0, 1152], sizes = [12, 128], strides = [1, 1]} : vector<12x4096xf32> to vector<12x128xf32>
    %157 = arith.maximumf %155, %156 : vector<12x128xf32>
    %158 = vector.extract_strided_slice %142 {offsets = [0, 1280], sizes = [12, 128], strides = [1, 1]} : vector<12x4096xf32> to vector<12x128xf32>
    %159 = vector.extract_strided_slice %142 {offsets = [0, 1408], sizes = [12, 128], strides = [1, 1]} : vector<12x4096xf32> to vector<12x128xf32>
    %160 = arith.maximumf %158, %159 : vector<12x128xf32>
    %161 = vector.extract_strided_slice %142 {offsets = [0, 1536], sizes = [12, 128], strides = [1, 1]} : vector<12x4096xf32> to vector<12x128xf32>
    %162 = vector.extract_strided_slice %142 {offsets = [0, 1664], sizes = [12, 128], strides = [1, 1]} : vector<12x4096xf32> to vector<12x128xf32>
    %163 = arith.maximumf %161, %162 : vector<12x128xf32>
    %164 = vector.extract_strided_slice %142 {offsets = [0, 1792], sizes = [12, 128], strides = [1, 1]} : vector<12x4096xf32> to vector<12x128xf32>
    %165 = vector.extract_strided_slice %142 {offsets = [0, 1920], sizes = [12, 128], strides = [1, 1]} : vector<12x4096xf32> to vector<12x128xf32>
    %166 = arith.maximumf %164, %165 : vector<12x128xf32>
    %167 = vector.extract_strided_slice %142 {offsets = [0, 2048], sizes = [12, 128], strides = [1, 1]} : vector<12x4096xf32> to vector<12x128xf32>
    %168 = vector.extract_strided_slice %142 {offsets = [0, 2176], sizes = [12, 128], strides = [1, 1]} : vector<12x4096xf32> to vector<12x128xf32>
    %169 = arith.maximumf %167, %168 : vector<12x128xf32>
    %170 = vector.extract_strided_slice %142 {offsets = [0, 2304], sizes = [12, 128], strides = [1, 1]} : vector<12x4096xf32> to vector<12x128xf32>
    %171 = vector.extract_strided_slice %142 {offsets = [0, 2432], sizes = [12, 128], strides = [1, 1]} : vector<12x4096xf32> to vector<12x128xf32>
    %172 = arith.maximumf %170, %171 : vector<12x128xf32>
    %173 = vector.extract_strided_slice %142 {offsets = [0, 2560], sizes = [12, 128], strides = [1, 1]} : vector<12x4096xf32> to vector<12x128xf32>
    %174 = vector.extract_strided_slice %142 {offsets = [0, 2688], sizes = [12, 128], strides = [1, 1]} : vector<12x4096xf32> to vector<12x128xf32>
    %175 = arith.maximumf %173, %174 : vector<12x128xf32>
    %176 = vector.extract_strided_slice %142 {offsets = [0, 2816], sizes = [12, 128], strides = [1, 1]} : vector<12x4096xf32> to vector<12x128xf32>
    %177 = vector.extract_strided_slice %142 {offsets = [0, 2944], sizes = [12, 128], strides = [1, 1]} : vector<12x4096xf32> to vector<12x128xf32>
    %178 = arith.maximumf %176, %177 : vector<12x128xf32>
    %179 = vector.extract_strided_slice %142 {offsets = [0, 3072], sizes = [12, 128], strides = [1, 1]} : vector<12x4096xf32> to vector<12x128xf32>
    %180 = vector.extract_strided_slice %142 {offsets = [0, 3200], sizes = [12, 128], strides = [1, 1]} : vector<12x4096xf32> to vector<12x128xf32>
    %181 = arith.maximumf %179, %180 : vector<12x128xf32>
    %182 = vector.extract_strided_slice %142 {offsets = [0, 3328], sizes = [12, 128], strides = [1, 1]} : vector<12x4096xf32> to vector<12x128xf32>
    %183 = vector.extract_strided_slice %142 {offsets = [0, 3456], sizes = [12, 128], strides = [1, 1]} : vector<12x4096xf32> to vector<12x128xf32>
    %184 = arith.maximumf %182, %183 : vector<12x128xf32>
    %185 = vector.extract_strided_slice %142 {offsets = [0, 3584], sizes = [12, 128], strides = [1, 1]} : vector<12x4096xf32> to vector<12x128xf32>
    %186 = vector.extract_strided_slice %142 {offsets = [0, 3712], sizes = [12, 128], strides = [1, 1]} : vector<12x4096xf32> to vector<12x128xf32>
    %187 = arith.maximumf %185, %186 : vector<12x128xf32>
    %188 = vector.extract_strided_slice %142 {offsets = [0, 3840], sizes = [12, 128], strides = [1, 1]} : vector<12x4096xf32> to vector<12x128xf32>
    %189 = vector.extract_strided_slice %142 {offsets = [0, 3968], sizes = [12, 128], strides = [1, 1]} : vector<12x4096xf32> to vector<12x128xf32>
    %190 = arith.maximumf %188, %189 : vector<12x128xf32>
    %191 = tpu.concatenate %145, %148, %151, %154, %157, %160, %163, %166, %169, %172, %175, %178, %181, %184, %187, %190 in 1 : vector<12x128xf32>, vector<12x128xf32>, vector<12x128xf32>, vector<12x128xf32>, vector<12x128xf32>, vector<12x128xf32>, vector<12x128xf32>, vector<12x128xf32>, vector<12x128xf32>, vector<12x128xf32>, vector<12x128xf32>, vector<12x128xf32>, vector<12x128xf32>, vector<12x128xf32>, vector<12x128xf32>, vector<12x128xf32> -> vector<12x2048xf32>
    %c48 = arith.constant 48 : index
    %c0_13 = arith.constant 0 : index
    %192 = vector.load %arg1[%c48, %c0_13] : memref<128x128xf32, #tpu.memory_space<vmem>>, vector<64x12xf32>
    %c48_14 = arith.constant 48 : index
    %c12 = arith.constant 12 : index
    %193 = vector.load %arg1[%c48_14, %c12] : memref<128x128xf32, #tpu.memory_space<vmem>>, vector<64x1xf32>
    %cst_15 = arith.constant dense<0.000000e+00> : vector<64x2048xf32>
    %194 = tpu.matmul %192, %191, %cst_15 {dimension_numbers = #tpu.dot_dimension_numbers<[1], [0], [0], [1], [0, 0, 1, 1], [], []>} : vector<64x12xf32>, vector<12x2048xf32>, vector<64x2048xf32> -> vector<64x2048xf32>
    %195 = vector.broadcast %193 : vector<64x1xf32> to vector<64x2048xf32>
    %196 = arith.addf %194, %195 : vector<64x2048xf32>
    %cst_16 = arith.constant 2.000000e-01 : f32
    %197 = vector.broadcast %cst_16 : f32 to vector<64x2048xf32>
    %198 = arith.mulf %197, %196 : vector<64x2048xf32>
    %199 = arith.maximumf %196, %198 : vector<64x2048xf32>
    %c112 = arith.constant 112 : index
    %c0_17 = arith.constant 0 : index
    %200 = vector.load %arg1[%c112, %c0_17] : memref<128x128xf32, #tpu.memory_space<vmem>>, vector<4x64xf32>
    %c112_18 = arith.constant 112 : index
    %c64 = arith.constant 64 : index
    %201 = vector.load %arg1[%c112_18, %c64] : memref<128x128xf32, #tpu.memory_space<vmem>>, vector<4x1xf32>
    %cst_19 = arith.constant dense<0.000000e+00> : vector<4x2048xf32>
    %202 = tpu.matmul %200, %199, %cst_19 {dimension_numbers = #tpu.dot_dimension_numbers<[1], [0], [0], [1], [0, 0, 1, 1], [], []>} : vector<4x64xf32>, vector<64x2048xf32>, vector<4x2048xf32> -> vector<4x2048xf32>
    %203 = vector.broadcast %201 : vector<4x1xf32> to vector<4x2048xf32>
    %204 = arith.addf %202, %203 : vector<4x2048xf32>
    %205 = math.tanh %204 : vector<4x2048xf32>
    %c0_20 = arith.constant 0 : index
    %c0_21 = arith.constant 0 : index
    %c0_22 = arith.constant 0 : index
    %206 = vector.load %arg3[%c0_20, %c0_21, %c0_22] : memref<1x4x2048xf32, #tpu.memory_space<vmem>>, vector<1x4x2048xf32>
    %207 = vector.shape_cast %206 : vector<1x4x2048xf32> to vector<4x2048xf32>
    %208 = vector.shape_cast %205 : vector<4x2048xf32> to vector<1x4x2048xf32>
    tpu.vector_store %arg3[%c0_20, %c0_21, %c0_22], %208 {strides = array<i32>} : memref<1x4x2048xf32, #tpu.memory_space<vmem>>, vector<1x4x2048xf32>,
    return
  }
  func.func @transform_0(%arg0: i32) -> (i32, i32) {
    %c0_i32 = arith.constant 0 : i32
    %c0_i32_0 = arith.constant 0 : i32
    %c0_i32_1 = arith.constant 0 : i32
    return %c0_i32, %c0_i32_0 : i32, i32
  }
  func.func @transform_1(%arg0: i32) -> (i32, i32, i32) {
    %c0_i32 = arith.constant 0 : i32
    %c0_i32_0 = arith.constant 0 : i32
    %c0_i32_1 = arith.constant 0 : i32
    return %arg0, %c0_i32, %c0_i32_0 : i32, i32, i32
  }
  func.func @transform_2(%arg0: i32) -> (i32, i32, i32) {
    %c0_i32 = arith.constant 0 : i32
    %c0_i32_0 = arith.constant 0 : i32
    %c0_i32_1 = arith.constant 0 : i32
    return %arg0, %c0_i32, %c0_i32_0 : i32, i32, i32
  }
}

</mosaic_0001>

<llo_original>
// kernel: conv_autoencoder_forward.1
$region0: #{conv_autoencoder_forward.1}
  #allocation0 [shape = 'u32[]', space=smem, size = 0x4, offset = 0x4, fixed_abs, tag = 'smem constant byte address 0x4 - core index']
  #allocation1 [shape = 'u32[144,128]{1,0:T(1,128)}', space=vmem, size = 0x12000, scoped, tag = 'internal scratch']
  %s0 = inlined_call_operand.vmem [shape: f32[128,128], index: 0, kind: input, shape index: {}]
  %s1 = inlined_call_operand.vmem [shape: f32[1,1,8192], index: 1, kind: input, shape index: {}]
  %s2 = inlined_call_operand.vmem [shape: f32[1,4,2048], index: 2, kind: output, shape index: {}]
  %s3 = sld [smem:[#allocation0]]
  $region18: #{conv_autoencoder_forward.1} parent=0
    _
  %s5 = ssub.s32 1, %s3
  %s6 = scalar_select 0, %s5, %s3
  // Predicated region
  $region2: #{conv_autoencoder_forward.1} parent=0 // pred_check
    _
  $region3: #{conv_autoencoder_forward.1} parent=0 // pred_check_branch
    %8 = sbr.rel (0) target = $region5
  $region4: #{conv_autoencoder_forward.1} parent=0 // pred_region
    _
  $region5: #{conv_autoencoder_forward.1} parent=0 // pred_fallthru
    _
  // Predicated region
  $region6: #{conv_autoencoder_forward.1} parent=0 // pred_check
    _
  $region7: #{conv_autoencoder_forward.1} parent=0 // pred_check_branch
    %10 = sbr.rel (0) target = $region9
  $region8: #{conv_autoencoder_forward.1} parent=0 // pred_region
    _
  $region9: #{conv_autoencoder_forward.1} parent=0 // pred_fallthru
    _
  %v11 = vld [vmem:[%s1] sm:$0xff]
  %v12 = vld [vmem:[%s1 + $0x8] sm:$0xff]
  %v13 = vld [vmem:[%s1 + $0x10] sm:$0xff]
  %v14 = vld [vmem:[%s1 + $0x18] sm:$0xff]
  %v15 = vld [vmem:[%s1 + $0x20] sm:$0xff]
  %v16 = vld [vmem:[%s1 + $0x28] sm:$0xff]
  %v17 = vld [vmem:[%s1 + $0x30] sm:$0xff]
  %v18 = vld [vmem:[%s1 + $0x38] sm:$0xff]
  %v19 = vld [vmem:[%s0] sm:$0xff]
  %v20 = vld [vmem:[%s0 + $0x8] sm:$0xff]
  %v21 = vld [vmem:[%s0 + $0x10] sm:$0xff]
  %v22 = vld [vmem:[%s0 + $0x18] sm:$0xff]
  %v31 = vlaneseq
  %v32 = vshrl.u32 %v31, 7
  %v33 = vsub.s32 0, %v32
  %v34 = vrot.slane %v11, %v33
  %v35 = vlaneseq
  %v36 = vshrl.u32 %v35, 7
  %v37 = vsub.s32 1, %v36
  %v38 = vrot.slane %v11, %v37
  %v39 = vlaneseq
  %v40 = vshrl.u32 %v39, 7
  %v41 = vsub.s32 2, %v40
  %v42 = vrot.slane %v11, %v41
  %v43 = vlaneseq
  %v44 = vshrl.u32 %v43, 7
  %v45 = vsub.s32 3, %v44
  %v46 = vrot.slane %v11, %v45
  %v47 = vlaneseq
  %v48 = vshrl.u32 %v47, 7
  %v49 = vsub.s32 4, %v48
  %v50 = vrot.slane %v11, %v49
  %v51 = vlaneseq
  %v52 = vshrl.u32 %v51, 7
  %v53 = vsub.s32 5, %v52
  %v54 = vrot.slane %v11, %v53
  %v55 = vlaneseq
  %v56 = vshrl.u32 %v55, 7
  %v57 = vsub.s32 6, %v56
  %v58 = vrot.slane %v11, %v57
  %v59 = vlaneseq
  %v60 = vshrl.u32 %v59, 7
  %v61 = vsub.s32 7, %v60
  %v62 = vrot.slane %v11, %v61
  %v63 = vlaneseq
  %v64 = vshrl.u32 %v63, 7
  %v65 = vsub.s32 0, %v64
  %v66 = vrot.slane %v12, %v65
  %v67 = vlaneseq
  %v68 = vshrl.u32 %v67, 7
  %v69 = vsub.s32 1, %v68
  %v70 = vrot.slane %v12, %v69
  %v71 = vlaneseq
  %v72 = vshrl.u32 %v71, 7
  %v73 = vsub.s32 2, %v72
  %v74 = vrot.slane %v12, %v73
  %v75 = vlaneseq
  %v76 = vshrl.u32 %v75, 7
  %v77 = vsub.s32 3, %v76
  %v78 = vrot.slane %v12, %v77
  %v79 = vlaneseq
  %v80 = vshrl.u32 %v79, 7
  %v81 = vsub.s32 4, %v80
  %v82 = vrot.slane %v12, %v81
  %v83 = vlaneseq
  %v84 = vshrl.u32 %v83, 7
  %v85 = vsub.s32 5, %v84
  %v86 = vrot.slane %v12, %v85
  %v87 = vlaneseq
  %v88 = vshrl.u32 %v87, 7
  %v89 = vsub.s32 6, %v88
  %v90 = vrot.slane %v12, %v89
  %v91 = vlaneseq
  %v92 = vshrl.u32 %v91, 7
  %v93 = vsub.s32 7, %v92
  %v94 = vrot.slane %v12, %v93
  %v95 = vlaneseq
  %v96 = vshrl.u32 %v95, 7
  %v97 = vsub.s32 0, %v96
  %v98 = vrot.slane %v13, %v97
  %v99 = vlaneseq
  %v100 = vshrl.u32 %v99, 7
  %v101 = vsub.s32 1, %v100
  %v102 = vrot.slane %v13, %v101
  %v103 = vlaneseq
  %v104 = vshrl.u32 %v103, 7
  %v105 = vsub.s32 2, %v104
  %v106 = vrot.slane %v13, %v105
  %v107 = vlaneseq
  %v108 = vshrl.u32 %v107, 7
  %v109 = vsub.s32 3, %v108
  %v110 = vrot.slane %v13, %v109
  %v111 = vlaneseq
  %v112 = vshrl.u32 %v111, 7
  %v113 = vsub.s32 4, %v112
  %v114 = vrot.slane %v13, %v113
  %v115 = vlaneseq
  %v116 = vshrl.u32 %v115, 7
  %v117 = vsub.s32 5, %v116
  %v118 = vrot.slane %v13, %v117
  %v119 = vlaneseq
  %v120 = vshrl.u32 %v119, 7
  %v121 = vsub.s32 6, %v120
  %v122 = vrot.slane %v13, %v121
  %v123 = vlaneseq
  %v124 = vshrl.u32 %v123, 7
  %v125 = vsub.s32 7, %v124
  %v126 = vrot.slane %v13, %v125
  %v127 = vlaneseq
  %v128 = vshrl.u32 %v127, 7
  %v129 = vsub.s32 0, %v128
  %v130 = vrot.slane %v14, %v129
  %v131 = vlaneseq
  %v132 = vshrl.u32 %v131, 7
  %v133 = vsub.s32 1, %v132
  %v134 = vrot.slane %v14, %v133
  %v135 = vlaneseq
  %v136 = vshrl.u32 %v135, 7
  %v137 = vsub.s32 2, %v136
  %v138 = vrot.slane %v14, %v137
  %v139 = vlaneseq
  %v140 = vshrl.u32 %v139, 7
  %v141 = vsub.s32 3, %v140
  %v142 = vrot.slane %v14, %v141
  %v143 = vlaneseq
  %v144 = vshrl.u32 %v143, 7
  %v145 = vsub.s32 4, %v144
  %v146 = vrot.slane %v14, %v145
  %v147 = vlaneseq
  %v148 = vshrl.u32 %v147, 7
  %v149 = vsub.s32 5, %v148
  %v150 = vrot.slane %v14, %v149
  %v151 = vlaneseq
  %v152 = vshrl.u32 %v151, 7
  %v153 = vsub.s32 6, %v152
  %v154 = vrot.slane %v14, %v153
  %v155 = vlaneseq
  %v156 = vshrl.u32 %v155, 7
  %v157 = vsub.s32 7, %v156
  %v158 = vrot.slane %v14, %v157
  %v159 = vlaneseq
  %v160 = vshrl.u32 %v159, 7
  %v161 = vsub.s32 0, %v160
  %v162 = vrot.slane %v15, %v161
  %v163 = vlaneseq
  %v164 = vshrl.u32 %v163, 7
  %v165 = vsub.s32 1, %v164
  %v166 = vrot.slane %v15, %v165
  %v167 = vlaneseq
  %v168 = vshrl.u32 %v167, 7
  %v169 = vsub.s32 2, %v168
  %v170 = vrot.slane %v15, %v169
  %v171 = vlaneseq
  %v172 = vshrl.u32 %v171, 7
  %v173 = vsub.s32 3, %v172
  %v174 = vrot.slane %v15, %v173
  %v175 = vlaneseq
  %v176 = vshrl.u32 %v175, 7
  %v177 = vsub.s32 4, %v176
  %v178 = vrot.slane %v15, %v177
  %v179 = vlaneseq
  %v180 = vshrl.u32 %v179, 7
  %v181 = vsub.s32 5, %v180
  %v182 = vrot.slane %v15, %v181
  %v183 = vlaneseq
  %v184 = vshrl.u32 %v183, 7
  %v185 = vsub.s32 6, %v184
  %v186 = vrot.slane %v15, %v185
  %v187 = vlaneseq
  %v188 = vshrl.u32 %v187, 7
  %v189 = vsub.s32 7, %v188
  %v190 = vrot.slane %v15, %v189
  %v191 = vlaneseq
  %v192 = vshrl.u32 %v191, 7
  %v193 = vsub.s32 0, %v192
  %v194 = vrot.slane %v16, %v193
  %v195 = vlaneseq
  %v196 = vshrl.u32 %v195, 7
  %v197 = vsub.s32 1, %v196
  %v198 = vrot.slane %v16, %v197
  %v199 = vlaneseq
  %v200 = vshrl.u32 %v199, 7
  %v201 = vsub.s32 2, %v200
  %v202 = vrot.slane %v16, %v201
  %v203 = vlaneseq
  %v204 = vshrl.u32 %v203, 7
  %v205 = vsub.s32 3, %v204
  %v206 = vrot.slane %v16, %v205
  %v207 = vlaneseq
  %v208 = vshrl.u32 %v207, 7
  %v209 = vsub.s32 4, %v208
  %v210 = vrot.slane %v16, %v209
  %v211 = vlaneseq
  %v212 = vshrl.u32 %v211, 7
  %v213 = vsub.s32 5, %v212
  %v214 = vrot.slane %v16, %v213
  %v215 = vlaneseq
  %v216 = vshrl.u32 %v215, 7
  %v217 = vsub.s32 6, %v216
  %v218 = vrot.slane %v16, %v217
  %v219 = vlaneseq
  %v220 = vshrl.u32 %v219, 7
  %v221 = vsub.s32 7, %v220
  %v222 = vrot.slane %v16, %v221
  %v223 = vlaneseq
  %v224 = vshrl.u32 %v223, 7
  %v225 = vsub.s32 0, %v224
  %v226 = vrot.slane %v17, %v225
  %v227 = vlaneseq
  %v228 = vshrl.u32 %v227, 7
  %v229 = vsub.s32 1, %v228
  %v230 = vrot.slane %v17, %v229
  %v231 = vlaneseq
  %v232 = vshrl.u32 %v231, 7
  %v233 = vsub.s32 2, %v232
  %v234 = vrot.slane %v17, %v233
  %v235 = vlaneseq
  %v236 = vshrl.u32 %v235, 7
  %v237 = vsub.s32 3, %v236
  %v238 = vrot.slane %v17, %v237
  %v239 = vlaneseq
  %v240 = vshrl.u32 %v239, 7
  %v241 = vsub.s32 4, %v240
  %v242 = vrot.slane %v17, %v241
  %v243 = vlaneseq
  %v244 = vshrl.u32 %v243, 7
  %v245 = vsub.s32 5, %v244
  %v246 = vrot.slane %v17, %v245
  %v247 = vlaneseq
  %v248 = vshrl.u32 %v247, 7
  %v249 = vsub.s32 6, %v248
  %v250 = vrot.slane %v17, %v249
  %v251 = vlaneseq
  %v252 = vshrl.u32 %v251, 7
  %v253 = vsub.s32 7, %v252
  %v254 = vrot.slane %v17, %v253
  %v255 = vlaneseq
  %v256 = vshrl.u32 %v255, 7
  %v257 = vsub.s32 0, %v256
  %v258 = vrot.slane %v18, %v257
  %v259 = vlaneseq
  %v260 = vshrl.u32 %v259, 7
  %v261 = vsub.s32 1, %v260
  %v262 = vrot.slane %v18, %v261
  %v263 = vlaneseq
  %v264 = vshrl.u32 %v263, 7
  %v265 = vsub.s32 2, %v264
  %v266 = vrot.slane %v18, %v265
  %v267 = vlaneseq
  %v268 = vshrl.u32 %v267, 7
  %v269 = vsub.s32 3, %v268
  %v270 = vrot.slane %v18, %v269
  %v271 = vlaneseq
  %v272 = vshrl.u32 %v271, 7
  %v273 = vsub.s32 4, %v272
  %v274 = vrot.slane %v18, %v273
  %v275 = vlaneseq
  %v276 = vshrl.u32 %v275, 7
  %v277 = vsub.s32 5, %v276
  %v278 = vrot.slane %v18, %v277
  %v279 = vlaneseq
  %v280 = vshrl.u32 %v279, 7
  %v281 = vsub.s32 6, %v280
  %v282 = vrot.slane %v18, %v281
  %347 = vset.pattern.permute.xlu0 0
  %348 = vperm.xlu0 %347, %v19
  %v349 = vpop.permute.xlu0 %348
  %352 = vset.pattern.permute.xlu0 0
  %353 = vperm.xlu0 %352, %v20
  %v354 = vpop.permute.xlu0 %353
  %357 = vset.pattern.permute.xlu0 0
  %358 = vperm.xlu0 %357, %v21
  %v359 = vpop.permute.xlu0 %358
  %362 = vset.pattern.permute.xlu0 0
  %363 = vperm.xlu0 %362, %v22
  %v364 = vpop.permute.xlu0 %363
  %v366 = vlaneseq
  %v367 = vshrl.u32 %v366, 7
  %v368 = vsub.s32 0, %v367
  %v369 = vlaneseq
  %v370 = vshrl.u32 %v369, 7
  %v371 = vsub.s32 0, %v370
  %v372 = vrot.slane %v34, %v371
  %v373 = vlaneseq
  %v374 = vshrl.u32 %v373, 7
  %v375 = vsub.s32 0, %v374
  %v376 = vrot.slane %v38, %v375
  %v377 = vlaneseq
  %v378 = vshrl.u32 %v377, 7
  %v379 = vsub.s32 0, %v378
  %v380 = vrot.slane %v42, %v379
  %v381 = vlaneseq
  %v382 = vshrl.u32 %v381, 7
  %v383 = vsub.s32 0, %v382
  %v384 = vrot.slane %v46, %v383
  %v385 = vlaneseq
  %v386 = vshrl.u32 %v385, 7
  %v387 = vsub.s32 0, %v386
  %v388 = vrot.slane %v50, %v387
  %v389 = vlaneseq
  %v390 = vshrl.u32 %v389, 7
  %v391 = vsub.s32 0, %v390
  %v392 = vrot.slane %v54, %v391
  %v393 = vlaneseq
  %v394 = vshrl.u32 %v393, 7
  %v395 = vsub.s32 0, %v394
  %v396 = vrot.slane %v58, %v395
  %v397 = vlaneseq
  %v398 = vshrl.u32 %v397, 7
  %v399 = vsub.s32 0, %v398
  %v400 = vrot.slane %v62, %v399
  %v401 = vlaneseq
  %v402 = vshrl.u32 %v401, 7
  %v403 = vsub.s32 0, %v402
  %v404 = vrot.slane %v66, %v403
  %v405 = vlaneseq
  %v406 = vshrl.u32 %v405, 7
  %v407 = vsub.s32 0, %v406
  %v408 = vrot.slane %v70, %v407
  %v409 = vlaneseq
  %v410 = vshrl.u32 %v409, 7
  %v411 = vsub.s32 0, %v410
  %v412 = vrot.slane %v74, %v411
  %v413 = vlaneseq
  %v414 = vshrl.u32 %v413, 7
  %v415 = vsub.s32 0, %v414
  %v416 = vrot.slane %v78, %v415
  %v417 = vlaneseq
  %v418 = vshrl.u32 %v417, 7
  %v419 = vsub.s32 0, %v418
  %v420 = vrot.slane %v82, %v419
  %v421 = vlaneseq
  %v422 = vshrl.u32 %v421, 7
  %v423 = vsub.s32 0, %v422
  %v424 = vrot.slane %v86, %v423
  %v425 = vlaneseq
  %v426 = vshrl.u32 %v425, 7
  %v427 = vsub.s32 0, %v426
  %v428 = vrot.slane %v90, %v427
  %v429 = vlaneseq
  %v430 = vshrl.u32 %v429, 7
  %v431 = vsub.s32 0, %v430
  %v432 = vrot.slane %v94, %v431
  %v433 = vlaneseq
  %v434 = vshrl.u32 %v433, 7
  %v435 = vsub.s32 0, %v434
  %v436 = vrot.slane %v98, %v435
  %v437 = vlaneseq
  %v438 = vshrl.u32 %v437, 7
  %v439 = vsub.s32 0, %v438
  %v440 = vrot.slane %v102, %v439
  %v441 = vlaneseq
  %v442 = vshrl.u32 %v441, 7
  %v443 = vsub.s32 0, %v442
  %v444 = vrot.slane %v106, %v443
  %v445 = vlaneseq
  %v446 = vshrl.u32 %v445, 7
  %v447 = vsub.s32 0, %v446
  %v448 = vrot.slane %v110, %v447
  %v449 = vlaneseq
  %v450 = vshrl.u32 %v449, 7
  %v451 = vsub.s32 0, %v450
  %v452 = vrot.slane %v114, %v451
  %v453 = vlaneseq
  %v454 = vshrl.u32 %v453, 7
  %v455 = vsub.s32 0, %v454
  %v456 = vrot.slane %v118, %v455
  %v457 = vlaneseq
  %v458 = vshrl.u32 %v457, 7
  %v459 = vsub.s32 0, %v458
  %v460 = vrot.slane %v122, %v459
  %v461 = vlaneseq
  %v462 = vshrl.u32 %v461, 7
  %v463 = vsub.s32 0, %v462
  %v464 = vrot.slane %v126, %v463
  %v465 = vlaneseq
  %v466 = vshrl.u32 %v465, 7
  %v467 = vsub.s32 0, %v466
  %v468 = vrot.slane %v130, %v467
  %v469 = vlaneseq
  %v470 = vshrl.u32 %v469, 7
  %v471 = vsub.s32 0, %v470
  %v472 = vrot.slane %v134, %v471
  %v473 = vlaneseq
  %v474 = vshrl.u32 %v473, 7
  %v475 = vsub.s32 0, %v474
  %v476 = vrot.slane %v138, %v475
  %v477 = vlaneseq
  %v478 = vshrl.u32 %v477, 7
  %v479 = vsub.s32 0, %v478
  %v480 = vrot.slane %v142, %v479
  %v481 = vlaneseq
  %v482 = vshrl.u32 %v481, 7
  %v483 = vsub.s32 0, %v482
  %v484 = vrot.slane %v146, %v483
  %v485 = vlaneseq
  %v486 = vshrl.u32 %v485, 7
  %v487 = vsub.s32 0, %v486
  %v488 = vrot.slane %v150, %v487
  %v489 = vlaneseq
  %v490 = vshrl.u32 %v489, 7
  %v491 = vsub.s32 0, %v490
  %v492 = vrot.slane %v154, %v491
  %v493 = vlaneseq
  %v494 = vshrl.u32 %v493, 7
  %v495 = vsub.s32 0, %v494
  %v496 = vrot.slane %v158, %v495
  %v497 = vlaneseq
  %v498 = vshrl.u32 %v497, 7
  %v499 = vsub.s32 0, %v498
  %v500 = vrot.slane %v162, %v499
  %v501 = vlaneseq
  %v502 = vshrl.u32 %v501, 7
  %v503 = vsub.s32 0, %v502
  %v504 = vrot.slane %v166, %v503
  %v505 = vlaneseq
  %v506 = vshrl.u32 %v505, 7
  %v507 = vsub.s32 0, %v506
  %v508 = vrot.slane %v170, %v507
  %v509 = vlaneseq
  %v510 = vshrl.u32 %v509, 7
  %v511 = vsub.s32 0, %v510
  %v512 = vrot.slane %v174, %v511
  %v513 = vlaneseq
  %v514 = vshrl.u32 %v513, 7
  %v515 = vsub.s32 0, %v514
  %v516 = vrot.slane %v178, %v515
  %v517 = vlaneseq
  %v518 = vshrl.u32 %v517, 7
  %v519 = vsub.s32 0, %v518
  %v520 = vrot.slane %v182, %v519
  %v521 = vlaneseq
  %v522 = vshrl.u32 %v521, 7
  %v523 = vsub.s32 0, %v522
  %v524 = vrot.slane %v186, %v523
  %v525 = vlaneseq
  %v526 = vshrl.u32 %v525, 7
  %v527 = vsub.s32 0, %v526
  %v528 = vrot.slane %v190, %v527
  %v529 = vlaneseq
  %v530 = vshrl.u32 %v529, 7
  %v531 = vsub.s32 0, %v530
  %v532 = vrot.slane %v194, %v531
  %v533 = vlaneseq
  %v534 = vshrl.u32 %v533, 7
  %v535 = vsub.s32 0, %v534
  %v536 = vrot.slane %v198, %v535
  %v537 = vlaneseq
  %v538 = vshrl.u32 %v537, 7
  %v539 = vsub.s32 0, %v538
  %v540 = vrot.slane %v202, %v539
  %v541 = vlaneseq
  %v542 = vshrl.u32 %v541, 7
  %v543 = vsub.s32 0, %v542
  %v544 = vrot.slane %v206, %v543
  %v545 = vlaneseq
  %v546 = vshrl.u32 %v545, 7
  %v547 = vsub.s32 0, %v546
  %v548 = vrot.slane %v210, %v547
  %v549 = vlaneseq
  %v550 = vshrl.u32 %v549, 7
  %v551 = vsub.s32 0, %v550
  %v552 = vrot.slane %v214, %v551
  %v553 = vlaneseq
  %v554 = vshrl.u32 %v553, 7
  %v555 = vsub.s32 0, %v554
  %v556 = vrot.slane %v218, %v555
  %v557 = vlaneseq
  %v558 = vshrl.u32 %v557, 7
  %v559 = vsub.s32 0, %v558
  %v560 = vrot.slane %v222, %v559
  %v561 = vlaneseq
  %v562 = vshrl.u32 %v561, 7
  %v563 = vsub.s32 0, %v562
  %v564 = vrot.slane %v226, %v563
  %v565 = vlaneseq
  %v566 = vshrl.u32 %v565, 7
  %v567 = vsub.s32 0, %v566
  %v568 = vrot.slane %v230, %v567
  %v569 = vlaneseq
  %v570 = vshrl.u32 %v569, 7
  %v571 = vsub.s32 0, %v570
  %v572 = vrot.slane %v234, %v571
  %v573 = vlaneseq
  %v574 = vshrl.u32 %v573, 7
  %v575 = vsub.s32 0, %v574
  %v576 = vrot.slane %v238, %v575
  %v577 = vlaneseq
  %v578 = vshrl.u32 %v577, 7
  %v579 = vsub.s32 0, %v578
  %v580 = vrot.slane %v242, %v579
  %v581 = vlaneseq
  %v582 = vshrl.u32 %v581, 7
  %v583 = vsub.s32 0, %v582
  %v584 = vrot.slane %v246, %v583
  %v585 = vlaneseq
  %v586 = vshrl.u32 %v585, 7
  %v587 = vsub.s32 0, %v586
  %v588 = vrot.slane %v250, %v587
  %v589 = vlaneseq
  %v590 = vshrl.u32 %v589, 7
  %v591 = vsub.s32 0, %v590
  %v592 = vrot.slane %v254, %v591
  %v593 = vlaneseq
  %v594 = vshrl.u32 %v593, 7
  %v595 = vsub.s32 0, %v594
  %v596 = vrot.slane %v258, %v595
  %v597 = vlaneseq
  %v598 = vshrl.u32 %v597, 7
  %v599 = vsub.s32 0, %v598
  %v600 = vrot.slane %v262, %v599
  %v601 = vlaneseq
  %v602 = vshrl.u32 %v601, 7
  %v603 = vsub.s32 0, %v602
  %v604 = vrot.slane %v266, %v603
  %v605 = vlaneseq
  %v606 = vshrl.u32 %v605, 7
  %v607 = vsub.s32 0, %v606
  %v608 = vrot.slane %v270, %v607
  %v609 = vlaneseq
  %v610 = vshrl.u32 %v609, 7
  %v611 = vsub.s32 0, %v610
  %v612 = vrot.slane %v274, %v611
  %v613 = vlaneseq
  %v614 = vshrl.u32 %v613, 7
  %v615 = vsub.s32 0, %v614
  %v616 = vrot.slane %v278, %v615
  %v617 = vlaneseq
  %v618 = vshrl.u32 %v617, 7
  %v619 = vsub.s32 0, %v618
  %v620 = vrot.slane %v282, %v619
  %v621 = vmul.f32 %v349, 0.0
  %v622 = vmul.f32 %v349, %v372
  %v623 = vmul.f32 %v349, %v376
  %v624 = vmul.f32 %v349, %v380
  %v625 = vmul.f32 %v349, %v384
  %v626 = vmul.f32 %v349, %v388
  %v627 = vmul.f32 %v349, %v392
  %v628 = vmul.f32 %v349, %v396
  %v629 = vmul.f32 %v349, %v400
  %v630 = vmul.f32 %v349, %v404
  %v631 = vmul.f32 %v349, %v408
  %v632 = vmul.f32 %v349, %v412
  %v633 = vmul.f32 %v349, %v416
  %v634 = vmul.f32 %v349, %v420
  %v635 = vmul.f32 %v349, %v424
  %v636 = vmul.f32 %v349, %v428
  %v637 = vmul.f32 %v349, %v432
  %v638 = vmul.f32 %v349, %v436
  %v639 = vmul.f32 %v349, %v440
  %v640 = vmul.f32 %v349, %v444
  %v641 = vmul.f32 %v349, %v448
  %v642 = vmul.f32 %v349, %v452
  %v643 = vmul.f32 %v349, %v456
  %v644 = vmul.f32 %v349, %v460
  %v645 = vmul.f32 %v349, %v464
  %v646 = vmul.f32 %v349, %v468
  %v647 = vmul.f32 %v349, %v472
  %v648 = vmul.f32 %v349, %v476
  %v649 = vmul.f32 %v349, %v480
  %v650 = vmul.f32 %v349, %v484
  %v651 = vmul.f32 %v349, %v488
  %v652 = vmul.f32 %v349, %v492
  %v653 = vmul.f32 %v349, %v496
  %v654 = vmul.f32 %v349, %v500
  %v655 = vmul.f32 %v349, %v504
  %v656 = vmul.f32 %v349, %v508
  %v657 = vmul.f32 %v349, %v512
  %v658 = vmul.f32 %v349, %v516
  %v659 = vmul.f32 %v349, %v520
  %v660 = vmul.f32 %v349, %v524
  %v661 = vmul.f32 %v349, %v528
  %v662 = vmul.f32 %v349, %v532
  %v663 = vmul.f32 %v349, %v536
  %v664 = vmul.f32 %v349, %v540
  %v665 = vmul.f32 %v349, %v544
  %v666 = vmul.f32 %v349, %v548
  %v667 = vmul.f32 %v349, %v552
  %v668 = vmul.f32 %v349, %v556
  %v669 = vmul.f32 %v349, %v560
  %v670 = vmul.f32 %v349, %v564
  %v671 = vmul.f32 %v349, %v568
  %v672 = vmul.f32 %v349, %v572
  %v673 = vmul.f32 %v349, %v576
  %v674 = vmul.f32 %v349, %v580
  %v675 = vmul.f32 %v349, %v584
  %v676 = vmul.f32 %v349, %v588
  %v677 = vmul.f32 %v349, %v592
  %v678 = vmul.f32 %v349, %v596
  %v679 = vmul.f32 %v349, %v600
  %v680 = vmul.f32 %v349, %v604
  %v681 = vmul.f32 %v349, %v608
  %v682 = vmul.f32 %v349, %v612
  %v683 = vmul.f32 %v349, %v616
  %v684 = vmul.f32 %v349, %v620
  %v685 = vmul.f32 %v354, 0.0
  %v686 = vmul.f32 %v354, %v372
  %v687 = vmul.f32 %v354, %v376
  %v688 = vmul.f32 %v354, %v380
  %v689 = vmul.f32 %v354, %v384
  %v690 = vmul.f32 %v354, %v388
  %v691 = vmul.f32 %v354, %v392
  %v692 = vmul.f32 %v354, %v396
  %v693 = vmul.f32 %v354, %v400
  %v694 = vmul.f32 %v354, %v404
  %v695 = vmul.f32 %v354, %v408
  %v696 = vmul.f32 %v354, %v412
  %v697 = vmul.f32 %v354, %v416
  %v698 = vmul.f32 %v354, %v420
  %v699 = vmul.f32 %v354, %v424
  %v700 = vmul.f32 %v354, %v428
  %v701 = vmul.f32 %v354, %v432
  %v702 = vmul.f32 %v354, %v436
  %v703 = vmul.f32 %v354, %v440
  %v704 = vmul.f32 %v354, %v444
  %v705 = vmul.f32 %v354, %v448
  %v706 = vmul.f32 %v354, %v452
  %v707 = vmul.f32 %v354, %v456
  %v708 = vmul.f32 %v354, %v460
  %v709 = vmul.f32 %v354, %v464
  %v710 = vmul.f32 %v354, %v468
  %v711 = vmul.f32 %v354, %v472
  %v712 = vmul.f32 %v354, %v476
  %v713 = vmul.f32 %v354, %v480
  %v714 = vmul.f32 %v354, %v484
  %v715 = vmul.f32 %v354, %v488
  %v716 = vmul.f32 %v354, %v492
  %v717 = vmul.f32 %v354, %v496
  %v718 = vmul.f32 %v354, %v500
  %v719 = vmul.f32 %v354, %v504
  %v720 = vmul.f32 %v354, %v508
  %v721 = vmul.f32 %v354, %v512
  %v722 = vmul.f32 %v354, %v516
  %v723 = vmul.f32 %v354, %v520
  %v724 = vmul.f32 %v354, %v524
  %v725 = vmul.f32 %v354, %v528
  %v726 = vmul.f32 %v354, %v532
  %v727 = vmul.f32 %v354, %v536
  %v728 = vmul.f32 %v354, %v540
  %v729 = vmul.f32 %v354, %v544
  %v730 = vmul.f32 %v354, %v548
  %v731 = vmul.f32 %v354, %v552
  %v732 = vmul.f32 %v354, %v556
  %v733 = vmul.f32 %v354, %v560
  %v734 = vmul.f32 %v354, %v564
  %v735 = vmul.f32 %v354, %v568
  %v736 = vmul.f32 %v354, %v572
  %v737 = vmul.f32 %v354, %v576
  %v738 = vmul.f32 %v354, %v580
  %v739 = vmul.f32 %v354, %v584
  %v740 = vmul.f32 %v354, %v588
  %v741 = vmul.f32 %v354, %v592
  %v742 = vmul.f32 %v354, %v596
  %v743 = vmul.f32 %v354, %v600
  %v744 = vmul.f32 %v354, %v604
  %v745 = vmul.f32 %v354, %v608
  %v746 = vmul.f32 %v354, %v612
  %v747 = vmul.f32 %v354, %v616
  %v748 = vmul.f32 %v354, %v620
  %v749 = vmul.f32 %v359, 0.0
  %v750 = vmul.f32 %v359, %v372
  %v751 = vmul.f32 %v359, %v376
  %v752 = vmul.f32 %v359, %v380
  %v753 = vmul.f32 %v359, %v384
  %v754 = vmul.f32 %v359, %v388
  %v755 = vmul.f32 %v359, %v392
  %v756 = vmul.f32 %v359, %v396
  %v757 = vmul.f32 %v359, %v400
  %v758 = vmul.f32 %v359, %v404
  %v759 = vmul.f32 %v359, %v408
  %v760 = vmul.f32 %v359, %v412
  %v761 = vmul.f32 %v359, %v416
  %v762 = vmul.f32 %v359, %v420
  %v763 = vmul.f32 %v359, %v424
  %v764 = vmul.f32 %v359, %v428
  %v765 = vmul.f32 %v359, %v432
  %v766 = vmul.f32 %v359, %v436
  %v767 = vmul.f32 %v359, %v440
  %v768 = vmul.f32 %v359, %v444
  %v769 = vmul.f32 %v359, %v448
  %v770 = vmul.f32 %v359, %v452
  %v771 = vmul.f32 %v359, %v456
  %v772 = vmul.f32 %v359, %v460
  %v773 = vmul.f32 %v359, %v464
  %v774 = vmul.f32 %v359, %v468
  %v775 = vmul.f32 %v359, %v472
  %v776 = vmul.f32 %v359, %v476
  %v777 = vmul.f32 %v359, %v480
  %v778 = vmul.f32 %v359, %v484
  %v779 = vmul.f32 %v359, %v488
  %v780 = vmul.f32 %v359, %v492
  %v781 = vmul.f32 %v359, %v496
  %v782 = vmul.f32 %v359, %v500
  %v783 = vmul.f32 %v359, %v504
  %v784 = vmul.f32 %v359, %v508
  %v785 = vmul.f32 %v359, %v512
  %v786 = vmul.f32 %v359, %v516
  %v787 = vmul.f32 %v359, %v520
  %v788 = vmul.f32 %v359, %v524
  %v789 = vmul.f32 %v359, %v528
  %v790 = vmul.f32 %v359, %v532
  %v791 = vmul.f32 %v359, %v536
  %v792 = vmul.f32 %v359, %v540
  %v793 = vmul.f32 %v359, %v544
  %v794 = vmul.f32 %v359, %v548
  %v795 = vmul.f32 %v359, %v552
  %v796 = vmul.f32 %v359, %v556
  %v797 = vmul.f32 %v359, %v560
  %v798 = vmul.f32 %v359, %v564
  %v799 = vmul.f32 %v359, %v568
  %v800 = vmul.f32 %v359, %v572
  %v801 = vmul.f32 %v359, %v576
  %v802 = vmul.f32 %v359, %v580
  %v803 = vmul.f32 %v359, %v584
  %v804 = vmul.f32 %v359, %v588
  %v805 = vmul.f32 %v359, %v592
  %v806 = vmul.f32 %v359, %v596
  %v807 = vmul.f32 %v359, %v600
  %v808 = vmul.f32 %v359, %v604
  %v809 = vmul.f32 %v359, %v608
  %v810 = vmul.f32 %v359, %v612
  %v811 = vmul.f32 %v359, %v616
  %v812 = vmul.f32 %v359, %v620
  %v813 = vmul.f32 %v364, 0.0
  %v814 = vmul.f32 %v364, %v372
  %v815 = vmul.f32 %v364, %v376
  %v816 = vmul.f32 %v364, %v380
  %v817 = vmul.f32 %v364, %v384
  %v818 = vmul.f32 %v364, %v388
  %v819 = vmul.f32 %v364, %v392
  %v820 = vmul.f32 %v364, %v396
  %v821 = vmul.f32 %v364, %v400
  %v822 = vmul.f32 %v364, %v404
  %v823 = vmul.f32 %v364, %v408
  %v824 = vmul.f32 %v364, %v412
  %v825 = vmul.f32 %v364, %v416
  %v826 = vmul.f32 %v364, %v420
  %v827 = vmul.f32 %v364, %v424
  %v828 = vmul.f32 %v364, %v428
  %v829 = vmul.f32 %v364, %v432
  %v830 = vmul.f32 %v364, %v436
  %v831 = vmul.f32 %v364, %v440
  %v832 = vmul.f32 %v364, %v444
  %v833 = vmul.f32 %v364, %v448
  %v834 = vmul.f32 %v364, %v452
  %v835 = vmul.f32 %v364, %v456
  %v836 = vmul.f32 %v364, %v460
  %v837 = vmul.f32 %v364, %v464
  %v838 = vmul.f32 %v364, %v468
  %v839 = vmul.f32 %v364, %v472
  %v840 = vmul.f32 %v364, %v476
  %v841 = vmul.f32 %v364, %v480
  %v842 = vmul.f32 %v364, %v484
  %v843 = vmul.f32 %v364, %v488
  %v844 = vmul.f32 %v364, %v492
  %v845 = vmul.f32 %v364, %v496
  %v846 = vmul.f32 %v364, %v500
  %v847 = vmul.f32 %v364, %v504
  %v848 = vmul.f32 %v364, %v508
  %v849 = vmul.f32 %v364, %v512
  %v850 = vmul.f32 %v364, %v516
  %v851 = vmul.f32 %v364, %v520
  %v852 = vmul.f32 %v364, %v524
  %v853 = vmul.f32 %v364, %v528
  %v854 = vmul.f32 %v364, %v532
  %v855 = vmul.f32 %v364, %v536
  %v856 = vmul.f32 %v364, %v540
  %v857 = vmul.f32 %v364, %v544
  %v858 = vmul.f32 %v364, %v548
  %v859 = vmul.f32 %v364, %v552
  %v860 = vmul.f32 %v364, %v556
  %v861 = vmul.f32 %v364, %v560
  %v862 = vmul.f32 %v364, %v564
  %v863 = vmul.f32 %v364, %v568
  %v864 = vmul.f32 %v364, %v572
  %v865 = vmul.f32 %v364, %v576
  %v866 = vmul.f32 %v364, %v580
  %v867 = vmul.f32 %v364, %v584
  %v868 = vmul.f32 %v364, %v588
  %v869 = vmul.f32 %v364, %v592
  %v870 = vmul.f32 %v364, %v596
  %v871 = vmul.f32 %v364, %v600
  %v872 = vmul.f32 %v364, %v604
  %v873 = vmul.f32 %v364, %v608
  %v874 = vmul.f32 %v364, %v612
  %v875 = vmul.f32 %v364, %v616
  %v876 = vmul.f32 %v364, %v620
  %877 = vset.pattern.permute.xlu0 1
  %878 = vperm.xlu0 %877, %v19
  %v879 = vpop.permute.xlu0 %878
  %881 = vset.pattern.permute.xlu0 1
  %882 = vperm.xlu0 %881, %v20
  %v883 = vpop.permute.xlu0 %882
  %885 = vset.pattern.permute.xlu0 1
  %886 = vperm.xlu0 %885, %v21
  %v887 = vpop.permute.xlu0 %886
  %889 = vset.pattern.permute.xlu0 1
  %890 = vperm.xlu0 %889, %v22
  %v891 = vpop.permute.xlu0 %890
  %v893 = vlaneseq
  %v894 = vshrl.u32 %v893, 7
  %v895 = vsub.s32 7, %v894
  %v896 = vrot.slane %v18, %v895
  %v898 = vmul.f32 %v879, %v34
  %v899 = vmul.f32 %v879, %v38
  %v900 = vmul.f32 %v879, %v42
  %v901 = vmul.f32 %v879, %v46
  %v902 = vmul.f32 %v879, %v50
  %v903 = vmul.f32 %v879, %v54
  %v904 = vmul.f32 %v879, %v58
  %v905 = vmul.f32 %v879, %v62
  %v906 = vmul.f32 %v879, %v66
  %v907 = vmul.f32 %v879, %v70
  %v908 = vmul.f32 %v879, %v74
  %v909 = vmul.f32 %v879, %v78
  %v910 = vmul.f32 %v879, %v82
  %v911 = vmul.f32 %v879, %v86
  %v912 = vmul.f32 %v879, %v90
  %v913 = vmul.f32 %v879, %v94
  %v914 = vmul.f32 %v879, %v98
  %v915 = vmul.f32 %v879, %v102
  %v916 = vmul.f32 %v879, %v106
  %v917 = vmul.f32 %v879, %v110
  %v918 = vmul.f32 %v879, %v114
  %v919 = vmul.f32 %v879, %v118
  %v920 = vmul.f32 %v879, %v122
  %v921 = vmul.f32 %v879, %v126
  %v922 = vmul.f32 %v879, %v130
  %v923 = vmul.f32 %v879, %v134
  %v924 = vmul.f32 %v879, %v138
  %v925 = vmul.f32 %v879, %v142
  %v926 = vmul.f32 %v879, %v146
  %v927 = vmul.f32 %v879, %v150
  %v928 = vmul.f32 %v879, %v154
  %v929 = vmul.f32 %v879, %v158
  %v930 = vmul.f32 %v879, %v162
  %v931 = vmul.f32 %v879, %v166
  %v932 = vmul.f32 %v879, %v170
  %v933 = vmul.f32 %v879, %v174
  %v934 = vmul.f32 %v879, %v178
  %v935 = vmul.f32 %v879, %v182
  %v936 = vmul.f32 %v879, %v186
  %v937 = vmul.f32 %v879, %v190
  %v938 = vmul.f32 %v879, %v194
  %v939 = vmul.f32 %v879, %v198
  %v940 = vmul.f32 %v879, %v202
  %v941 = vmul.f32 %v879, %v206
  %v942 = vmul.f32 %v879, %v210
  %v943 = vmul.f32 %v879, %v214
  %v944 = vmul.f32 %v879, %v218
  %v945 = vmul.f32 %v879, %v222
  %v946 = vmul.f32 %v879, %v226
  %v947 = vmul.f32 %v879, %v230
  %v948 = vmul.f32 %v879, %v234
  %v949 = vmul.f32 %v879, %v238
  %v950 = vmul.f32 %v879, %v242
  %v951 = vmul.f32 %v879, %v246
  %v952 = vmul.f32 %v879, %v250
  %v953 = vmul.f32 %v879, %v254
  %v954 = vmul.f32 %v879, %v258
  %v955 = vmul.f32 %v879, %v262
  %v956 = vmul.f32 %v879, %v266
  %v957 = vmul.f32 %v879, %v270
  %v958 = vmul.f32 %v879, %v274
  %v959 = vmul.f32 %v879, %v278
  %v960 = vmul.f32 %v879, %v282
  %v961 = vmul.f32 %v879, %v896
  %v962 = vmul.f32 %v883, %v34
  %v963 = vmul.f32 %v883, %v38
  %v964 = vmul.f32 %v883, %v42
  %v965 = vmul.f32 %v883, %v46
  %v966 = vmul.f32 %v883, %v50
  %v967 = vmul.f32 %v883, %v54
  %v968 = vmul.f32 %v883, %v58
  %v969 = vmul.f32 %v883, %v62
  %v970 = vmul.f32 %v883, %v66
  %v971 = vmul.f32 %v883, %v70
  %v972 = vmul.f32 %v883, %v74
  %v973 = vmul.f32 %v883, %v78
  %v974 = vmul.f32 %v883, %v82
  %v975 = vmul.f32 %v883, %v86
  %v976 = vmul.f32 %v883, %v90
  %v977 = vmul.f32 %v883, %v94
  %v978 = vmul.f32 %v883, %v98
  %v979 = vmul.f32 %v883, %v102
  %v980 = vmul.f32 %v883, %v106
  %v981 = vmul.f32 %v883, %v110
  %v982 = vmul.f32 %v883, %v114
  %v983 = vmul.f32 %v883, %v118
  %v984 = vmul.f32 %v883, %v122
  %v985 = vmul.f32 %v883, %v126
  %v986 = vmul.f32 %v883, %v130
  %v987 = vmul.f32 %v883, %v134
  %v988 = vmul.f32 %v883, %v138
  %v989 = vmul.f32 %v883, %v142
  %v990 = vmul.f32 %v883, %v146
  %v991 = vmul.f32 %v883, %v150
  %v992 = vmul.f32 %v883, %v154
  %v993 = vmul.f32 %v883, %v158
  %v994 = vmul.f32 %v883, %v162
  %v995 = vmul.f32 %v883, %v166
  %v996 = vmul.f32 %v883, %v170
  %v997 = vmul.f32 %v883, %v174
  %v998 = vmul.f32 %v883, %v178
  %v999 = vmul.f32 %v883, %v182
  %v1000 = vmul.f32 %v883, %v186
  %v1001 = vmul.f32 %v883, %v190
  %v1002 = vmul.f32 %v883, %v194
  %v1003 = vmul.f32 %v883, %v198
  %v1004 = vmul.f32 %v883, %v202
  %v1005 = vmul.f32 %v883, %v206
  %v1006 = vmul.f32 %v883, %v210
  %v1007 = vmul.f32 %v883, %v214
  %v1008 = vmul.f32 %v883, %v218
  %v1009 = vmul.f32 %v883, %v222
  %v1010 = vmul.f32 %v883, %v226
  %v1011 = vmul.f32 %v883, %v230
  %v1012 = vmul.f32 %v883, %v234
  %v1013 = vmul.f32 %v883, %v238
  %v1014 = vmul.f32 %v883, %v242
  %v1015 = vmul.f32 %v883, %v246
  %v1016 = vmul.f32 %v883, %v250
  %v1017 = vmul.f32 %v883, %v254
  %v1018 = vmul.f32 %v883, %v258
  %v1019 = vmul.f32 %v883, %v262
  %v1020 = vmul.f32 %v883, %v266
  %v1021 = vmul.f32 %v883, %v270
  %v1022 = vmul.f32 %v883, %v274
  %v1023 = vmul.f32 %v883, %v278
  %v1024 = vmul.f32 %v883, %v282
  %v1025 = vmul.f32 %v883, %v896
  %v1026 = vmul.f32 %v887, %v34
  %v1027 = vmul.f32 %v887, %v38
  %v1028 = vmul.f32 %v887, %v42
  %v1029 = vmul.f32 %v887, %v46
  %v1030 = vmul.f32 %v887, %v50
  %v1031 = vmul.f32 %v887, %v54
  %v1032 = vmul.f32 %v887, %v58
  %v1033 = vmul.f32 %v887, %v62
  %v1034 = vmul.f32 %v887, %v66
  %v1035 = vmul.f32 %v887, %v70
  %v1036 = vmul.f32 %v887, %v74
  %v1037 = vmul.f32 %v887, %v78
  %v1038 = vmul.f32 %v887, %v82
  %v1039 = vmul.f32 %v887, %v86
  %v1040 = vmul.f32 %v887, %v90
  %v1041 = vmul.f32 %v887, %v94
  %v1042 = vmul.f32 %v887, %v98
  %v1043 = vmul.f32 %v887, %v102
  %v1044 = vmul.f32 %v887, %v106
  %v1045 = vmul.f32 %v887, %v110
  %v1046 = vmul.f32 %v887, %v114
  %v1047 = vmul.f32 %v887, %v118
  %v1048 = vmul.f32 %v887, %v122
  %v1049 = vmul.f32 %v887, %v126
  %v1050 = vmul.f32 %v887, %v130
  %v1051 = vmul.f32 %v887, %v134
  %v1052 = vmul.f32 %v887, %v138
  %v1053 = vmul.f32 %v887, %v142
  %v1054 = vmul.f32 %v887, %v146
  %v1055 = vmul.f32 %v887, %v150
  %v1056 = vmul.f32 %v887, %v154
  %v1057 = vmul.f32 %v887, %v158
  %v1058 = vmul.f32 %v887, %v162
  %v1059 = vmul.f32 %v887, %v166
  %v1060 = vmul.f32 %v887, %v170
  %v1061 = vmul.f32 %v887, %v174
  %v1062 = vmul.f32 %v887, %v178
  %v1063 = vmul.f32 %v887, %v182
  %v1064 = vmul.f32 %v887, %v186
  %v1065 = vmul.f32 %v887, %v190
  %v1066 = vmul.f32 %v887, %v194
  %v1067 = vmul.f32 %v887, %v198
  %v1068 = vmul.f32 %v887, %v202
  %v1069 = vmul.f32 %v887, %v206
  %v1070 = vmul.f32 %v887, %v210
  %v1071 = vmul.f32 %v887, %v214
  %v1072 = vmul.f32 %v887, %v218
  %v1073 = vmul.f32 %v887, %v222
  %v1074 = vmul.f32 %v887, %v226
  %v1075 = vmul.f32 %v887, %v230
  %v1076 = vmul.f32 %v887, %v234
  %v1077 = vmul.f32 %v887, %v238
  %v1078 = vmul.f32 %v887, %v242
  %v1079 = vmul.f32 %v887, %v246
  %v1080 = vmul.f32 %v887, %v250
  %v1081 = vmul.f32 %v887, %v254
  %v1082 = vmul.f32 %v887, %v258
  %v1083 = vmul.f32 %v887, %v262
  %v1084 = vmul.f32 %v887, %v266
  %v1085 = vmul.f32 %v887, %v270
  %v1086 = vmul.f32 %v887, %v274
  %v1087 = vmul.f32 %v887, %v278
  %v1088 = vmul.f32 %v887, %v282
  %v1089 = vmul.f32 %v887, %v896
  %v1090 = vmul.f32 %v891, %v34
  %v1091 = vmul.f32 %v891, %v38
  %v1092 = vmul.f32 %v891, %v42
  %v1093 = vmul.f32 %v891, %v46
  %v1094 = vmul.f32 %v891, %v50
  %v1095 = vmul.f32 %v891, %v54
  %v1096 = vmul.f32 %v891, %v58
  %v1097 = vmul.f32 %v891, %v62
  %v1098 = vmul.f32 %v891, %v66
  %v1099 = vmul.f32 %v891, %v70
  %v1100 = vmul.f32 %v891, %v74
  %v1101 = vmul.f32 %v891, %v78
  %v1102 = vmul.f32 %v891, %v82
  %v1103 = vmul.f32 %v891, %v86
  %v1104 = vmul.f32 %v891, %v90
  %v1105 = vmul.f32 %v891, %v94
  %v1106 = vmul.f32 %v891, %v98
  %v1107 = vmul.f32 %v891, %v102
  %v1108 = vmul.f32 %v891, %v106
  %v1109 = vmul.f32 %v891, %v110
  %v1110 = vmul.f32 %v891, %v114
  %v1111 = vmul.f32 %v891, %v118
  %v1112 = vmul.f32 %v891, %v122
  %v1113 = vmul.f32 %v891, %v126
  %v1114 = vmul.f32 %v891, %v130
  %v1115 = vmul.f32 %v891, %v134
  %v1116 = vmul.f32 %v891, %v138
  %v1117 = vmul.f32 %v891, %v142
  %v1118 = vmul.f32 %v891, %v146
  %v1119 = vmul.f32 %v891, %v150
  %v1120 = vmul.f32 %v891, %v154
  %v1121 = vmul.f32 %v891, %v158
  %v1122 = vmul.f32 %v891, %v162
  %v1123 = vmul.f32 %v891, %v166
  %v1124 = vmul.f32 %v891, %v170
  %v1125 = vmul.f32 %v891, %v174
  %v1126 = vmul.f32 %v891, %v178
  %v1127 = vmul.f32 %v891, %v182
  %v1128 = vmul.f32 %v891, %v186
  %v1129 = vmul.f32 %v891, %v190
  %v1130 = vmul.f32 %v891, %v194
  %v1131 = vmul.f32 %v891, %v198
  %v1132 = vmul.f32 %v891, %v202
  %v1133 = vmul.f32 %v891, %v206
  %v1134 = vmul.f32 %v891, %v210
  %v1135 = vmul.f32 %v891, %v214
  %v1136 = vmul.f32 %v891, %v218
  %v1137 = vmul.f32 %v891, %v222
  %v1138 = vmul.f32 %v891, %v226
  %v1139 = vmul.f32 %v891, %v230
  %v1140 = vmul.f32 %v891, %v234
  %v1141 = vmul.f32 %v891, %v238
  %v1142 = vmul.f32 %v891, %v242
  %v1143 = vmul.f32 %v891, %v246
  %v1144 = vmul.f32 %v891, %v250
  %v1145 = vmul.f32 %v891, %v254
  %v1146 = vmul.f32 %v891, %v258
  %v1147 = vmul.f32 %v891, %v262
  %v1148 = vmul.f32 %v891, %v266
  %v1149 = vmul.f32 %v891, %v270
  %v1150 = vmul.f32 %v891, %v274
  %v1151 = vmul.f32 %v891, %v278
  %v1152 = vmul.f32 %v891, %v282
  %v1153 = vmul.f32 %v891, %v896
  %v1154 = vadd.f32 %v621, %v898
  %v1155 = vadd.f32 %v622, %v899
  %v1156 = vadd.f32 %v623, %v900
  %v1157 = vadd.f32 %v624, %v901
  %v1158 = vadd.f32 %v625, %v902
  %v1159 = vadd.f32 %v626, %v903
  %v1160 = vadd.f32 %v627, %v904
  %v1161 = vadd.f32 %v628, %v905
  %v1162 = vadd.f32 %v629, %v906
  %v1163 = vadd.f32 %v630, %v907
  %v1164 = vadd.f32 %v631, %v908
  %v1165 = vadd.f32 %v632, %v909
  %v1166 = vadd.f32 %v633, %v910
  %v1167 = vadd.f32 %v634, %v911
  %v1168 = vadd.f32 %v635, %v912
  %v1169 = vadd.f32 %v636, %v913
  %v1170 = vadd.f32 %v637, %v914
  %v1171 = vadd.f32 %v638, %v915
  %v1172 = vadd.f32 %v639, %v916
  %v1173 = vadd.f32 %v640, %v917
  %v1174 = vadd.f32 %v641, %v918
  %v1175 = vadd.f32 %v642, %v919
  %v1176 = vadd.f32 %v643, %v920
  %v1177 = vadd.f32 %v644, %v921
  %v1178 = vadd.f32 %v645, %v922
  %v1179 = vadd.f32 %v646, %v923
  %v1180 = vadd.f32 %v647, %v924
  %v1181 = vadd.f32 %v648, %v925
  %v1182 = vadd.f32 %v649, %v926
  %v1183 = vadd.f32 %v650, %v927
  %v1184 = vadd.f32 %v651, %v928
  %v1185 = vadd.f32 %v652, %v929
  %v1186 = vadd.f32 %v653, %v930
  %v1187 = vadd.f32 %v654, %v931
  %v1188 = vadd.f32 %v655, %v932
  %v1189 = vadd.f32 %v656, %v933
  %v1190 = vadd.f32 %v657, %v934
  %v1191 = vadd.f32 %v658, %v935
  %v1192 = vadd.f32 %v659, %v936
  %v1193 = vadd.f32 %v660, %v937
  %v1194 = vadd.f32 %v661, %v938
  %v1195 = vadd.f32 %v662, %v939
  %v1196 = vadd.f32 %v663, %v940
  %v1197 = vadd.f32 %v664, %v941
  %v1198 = vadd.f32 %v665, %v942
  %v1199 = vadd.f32 %v666, %v943
  %v1200 = vadd.f32 %v667, %v944
  %v1201 = vadd.f32 %v668, %v945
  %v1202 = vadd.f32 %v669, %v946
  %v1203 = vadd.f32 %v670, %v947
  %v1204 = vadd.f32 %v671, %v948
  %v1205 = vadd.f32 %v672, %v949
  %v1206 = vadd.f32 %v673, %v950
  %v1207 = vadd.f32 %v674, %v951
  %v1208 = vadd.f32 %v675, %v952
  %v1209 = vadd.f32 %v676, %v953
  %v1210 = vadd.f32 %v677, %v954
  %v1211 = vadd.f32 %v678, %v955
  %v1212 = vadd.f32 %v679, %v956
  %v1213 = vadd.f32 %v680, %v957
  %v1214 = vadd.f32 %v681, %v958
  %v1215 = vadd.f32 %v682, %v959
  %v1216 = vadd.f32 %v683, %v960
  %v1217 = vadd.f32 %v684, %v961
  %v1218 = vadd.f32 %v685, %v962
  %v1219 = vadd.f32 %v686, %v963
  %v1220 = vadd.f32 %v687, %v964
  %v1221 = vadd.f32 %v688, %v965
  %v1222 = vadd.f32 %v689, %v966
  %v1223 = vadd.f32 %v690, %v967
  %v1224 = vadd.f32 %v691, %v968
  %v1225 = vadd.f32 %v692, %v969
  %v1226 = vadd.f32 %v693, %v970
  %v1227 = vadd.f32 %v694, %v971
  %v1228 = vadd.f32 %v695, %v972
  %v1229 = vadd.f32 %v696, %v973
  %v1230 = vadd.f32 %v697, %v974
  %v1231 = vadd.f32 %v698, %v975
  %v1232 = vadd.f32 %v699, %v976
  %v1233 = vadd.f32 %v700, %v977
  %v1234 = vadd.f32 %v701, %v978
  %v1235 = vadd.f32 %v702, %v979
  %v1236 = vadd.f32 %v703, %v980
  %v1237 = vadd.f32 %v704, %v981
  %v1238 = vadd.f32 %v705, %v982
  %v1239 = vadd.f32 %v706, %v983
  %v1240 = vadd.f32 %v707, %v984
  %v1241 = vadd.f32 %v708, %v985
  %v1242 = vadd.f32 %v709, %v986
  %v1243 = vadd.f32 %v710, %v987
  %v1244 = vadd.f32 %v711, %v988
  %v1245 = vadd.f32 %v712, %v989
  %v1246 = vadd.f32 %v713, %v990
  %v1247 = vadd.f32 %v714, %v991
  %v1248 = vadd.f32 %v715, %v992
  %v1249 = vadd.f32 %v716, %v993
  %v1250 = vadd.f32 %v717, %v994
  %v1251 = vadd.f32 %v718, %v995
  %v1252 = vadd.f32 %v719, %v996
  %v1253 = vadd.f32 %v720, %v997
  %v1254 = vadd.f32 %v721, %v998
  %v1255 = vadd.f32 %v722, %v999
  %v1256 = vadd.f32 %v723, %v1000
  %v1257 = vadd.f32 %v724, %v1001
  %v1258 = vadd.f32 %v725, %v1002
  %v1259 = vadd.f32 %v726, %v1003
  %v1260 = vadd.f32 %v727, %v1004
  %v1261 = vadd.f32 %v728, %v1005
  %v1262 = vadd.f32 %v729, %v1006
  %v1263 = vadd.f32 %v730, %v1007
  %v1264 = vadd.f32 %v731, %v1008
  %v1265 = vadd.f32 %v732, %v1009
  %v1266 = vadd.f32 %v733, %v1010
  %v1267 = vadd.f32 %v734, %v1011
  %v1268 = vadd.f32 %v735, %v1012
  %v1269 = vadd.f32 %v736, %v1013
  %v1270 = vadd.f32 %v737, %v1014
  %v1271 = vadd.f32 %v738, %v1015
  %v1272 = vadd.f32 %v739, %v1016
  %v1273 = vadd.f32 %v740, %v1017
  %v1274 = vadd.f32 %v741, %v1018
  %v1275 = vadd.f32 %v742, %v1019
  %v1276 = vadd.f32 %v743, %v1020
  %v1277 = vadd.f32 %v744, %v1021
  %v1278 = vadd.f32 %v745, %v1022
  %v1279 = vadd.f32 %v746, %v1023
  %v1280 = vadd.f32 %v747, %v1024
  %v1281 = vadd.f32 %v748, %v1025
  %v1282 = vadd.f32 %v749, %v1026
  %v1283 = vadd.f32 %v750, %v1027
  %v1284 = vadd.f32 %v751, %v1028
  %v1285 = vadd.f32 %v752, %v1029
  %v1286 = vadd.f32 %v753, %v1030
  %v1287 = vadd.f32 %v754, %v1031
  %v1288 = vadd.f32 %v755, %v1032
  %v1289 = vadd.f32 %v756, %v1033
  %v1290 = vadd.f32 %v757, %v1034
  %v1291 = vadd.f32 %v758, %v1035
  %v1292 = vadd.f32 %v759, %v1036
  %v1293 = vadd.f32 %v760, %v1037
  %v1294 = vadd.f32 %v761, %v1038
  %v1295 = vadd.f32 %v762, %v1039
  %v1296 = vadd.f32 %v763, %v1040
  %v1297 = vadd.f32 %v764, %v1041
  %v1298 = vadd.f32 %v765, %v1042
  %v1299 = vadd.f32 %v766, %v1043
  %v1300 = vadd.f32 %v767, %v1044
  %v1301 = vadd.f32 %v768, %v1045
  %v1302 = vadd.f32 %v769, %v1046
  %v1303 = vadd.f32 %v770, %v1047
  %v1304 = vadd.f32 %v771, %v1048
  %v1305 = vadd.f32 %v772, %v1049
  %v1306 = vadd.f32 %v773, %v1050
  %v1307 = vadd.f32 %v774, %v1051
  %v1308 = vadd.f32 %v775, %v1052
  %v1309 = vadd.f32 %v776, %v1053
  %v1310 = vadd.f32 %v777, %v1054
  %v1311 = vadd.f32 %v778, %v1055
  %v1312 = vadd.f32 %v779, %v1056
  %v1313 = vadd.f32 %v780, %v1057
  %v1314 = vadd.f32 %v781, %v1058
  %v1315 = vadd.f32 %v782, %v1059
  %v1316 = vadd.f32 %v783, %v1060
  %v1317 = vadd.f32 %v784, %v1061
  %v1318 = vadd.f32 %v785, %v1062
  %v1319 = vadd.f32 %v786, %v1063
  %v1320 = vadd.f32 %v787, %v1064
  %v1321 = vadd.f32 %v788, %v1065
  %v1322 = vadd.f32 %v789, %v1066
  %v1323 = vadd.f32 %v790, %v1067
  %v1324 = vadd.f32 %v791, %v1068
  %v1325 = vadd.f32 %v792, %v1069
  %v1326 = vadd.f32 %v793, %v1070
  %v1327 = vadd.f32 %v794, %v1071
  %v1328 = vadd.f32 %v795, %v1072
  %v1329 = vadd.f32 %v796, %v1073
  %v1330 = vadd.f32 %v797, %v1074
  %v1331 = vadd.f32 %v798, %v1075
  %v1332 = vadd.f32 %v799, %v1076
  %v1333 = vadd.f32 %v800, %v1077
  %v1334 = vadd.f32 %v801, %v1078
  %v1335 = vadd.f32 %v802, %v1079
  %v1336 = vadd.f32 %v803, %v1080
  %v1337 = vadd.f32 %v804, %v1081
  %v1338 = vadd.f32 %v805, %v1082
  %v1339 = vadd.f32 %v806, %v1083
  %v1340 = vadd.f32 %v807, %v1084
  %v1341 = vadd.f32 %v808, %v1085
  %v1342 = vadd.f32 %v809, %v1086
  %v1343 = vadd.f32 %v810, %v1087
  %v1344 = vadd.f32 %v811, %v1088
  %v1345 = vadd.f32 %v812, %v1089
  %v1346 = vadd.f32 %v813, %v1090
  %v1347 = vadd.f32 %v814, %v1091
  %v1348 = vadd.f32 %v815, %v1092
  %v1349 = vadd.f32 %v816, %v1093
  %v1350 = vadd.f32 %v817, %v1094
  %v1351 = vadd.f32 %v818, %v1095
  %v1352 = vadd.f32 %v819, %v1096
  %v1353 = vadd.f32 %v820, %v1097
  %v1354 = vadd.f32 %v821, %v1098
  %v1355 = vadd.f32 %v822, %v1099
  %v1356 = vadd.f32 %v823, %v1100
  %v1357 = vadd.f32 %v824, %v1101
  %v1358 = vadd.f32 %v825, %v1102
  %v1359 = vadd.f32 %v826, %v1103
  %v1360 = vadd.f32 %v827, %v1104
  %v1361 = vadd.f32 %v828, %v1105
  %v1362 = vadd.f32 %v829, %v1106
  %v1363 = vadd.f32 %v830, %v1107
  %v1364 = vadd.f32 %v831, %v1108
  %v1365 = vadd.f32 %v832, %v1109
  %v1366 = vadd.f32 %v833, %v1110
  %v1367 = vadd.f32 %v834, %v1111
  %v1368 = vadd.f32 %v835, %v1112
  %v1369 = vadd.f32 %v836, %v1113
  %v1370 = vadd.f32 %v837, %v1114
  %v1371 = vadd.f32 %v838, %v1115
  %v1372 = vadd.f32 %v839, %v1116
  %v1373 = vadd.f32 %v840, %v1117
  %v1374 = vadd.f32 %v841, %v1118
  %v1375 = vadd.f32 %v842, %v1119
  %v1376 = vadd.f32 %v843, %v1120
  %v1377 = vadd.f32 %v844, %v1121
  %v1378 = vadd.f32 %v845, %v1122
  %v1379 = vadd.f32 %v846, %v1123
  %v1380 = vadd.f32 %v847, %v1124
  %v1381 = vadd.f32 %v848, %v1125
  %v1382 = vadd.f32 %v849, %v1126
  %v1383 = vadd.f32 %v850, %v1127
  %v1384 = vadd.f32 %v851, %v1128
  %v1385 = vadd.f32 %v852, %v1129
  %v1386 = vadd.f32 %v853, %v1130
  %v1387 = vadd.f32 %v854, %v1131
  %v1388 = vadd.f32 %v855, %v1132
  %v1389 = vadd.f32 %v856, %v1133
  %v1390 = vadd.f32 %v857, %v1134
  %v1391 = vadd.f32 %v858, %v1135
  %v1392 = vadd.f32 %v859, %v1136
  %v1393 = vadd.f32 %v860, %v1137
  %v1394 = vadd.f32 %v861, %v1138
  %v1395 = vadd.f32 %v862, %v1139
  %v1396 = vadd.f32 %v863, %v1140
  %v1397 = vadd.f32 %v864, %v1141
  %v1398 = vadd.f32 %v865, %v1142
  %v1399 = vadd.f32 %v866, %v1143
  %v1400 = vadd.f32 %v867, %v1144
  %v1401 = vadd.f32 %v868, %v1145
  %v1402 = vadd.f32 %v869, %v1146
  %v1403 = vadd.f32 %v870, %v1147
  %v1404 = vadd.f32 %v871, %v1148
  %v1405 = vadd.f32 %v872, %v1149
  %v1406 = vadd.f32 %v873, %v1150
  %v1407 = vadd.f32 %v874, %v1151
  %v1408 = vadd.f32 %v875, %v1152
  %v1409 = vadd.f32 %v876, %v1153
  %1410 = vset.pattern.permute.xlu0 2
  %1411 = vperm.xlu0 %1410, %v19
  %v1412 = vpop.permute.xlu0 %1411
  %1414 = vset.pattern.permute.xlu0 2
  %1415 = vperm.xlu0 %1414, %v20
  %v1416 = vpop.permute.xlu0 %1415
  %1418 = vset.pattern.permute.xlu0 2
  %1419 = vperm.xlu0 %1418, %v21
  %v1420 = vpop.permute.xlu0 %1419
  %1422 = vset.pattern.permute.xlu0 2
  %1423 = vperm.xlu0 %1422, %v22
  %v1424 = vpop.permute.xlu0 %1423
  %v1426 = vlaneseq
  %v1427 = vshrl.u32 %v1426, 7
  %v1428 = vsub.s32 0, %v1427
  %v1429 = vrot.slane %v896, %v1428
  %v1430 = vmul.f32 %v1412, %v376
  %v1431 = vmul.f32 %v1412, %v380
  %v1432 = vmul.f32 %v1412, %v384
  %v1433 = vmul.f32 %v1412, %v388
  %v1434 = vmul.f32 %v1412, %v392
  %v1435 = vmul.f32 %v1412, %v396
  %v1436 = vmul.f32 %v1412, %v400
  %v1437 = vmul.f32 %v1412, %v404
  %v1438 = vmul.f32 %v1412, %v408
  %v1439 = vmul.f32 %v1412, %v412
  %v1440 = vmul.f32 %v1412, %v416
  %v1441 = vmul.f32 %v1412, %v420
  %v1442 = vmul.f32 %v1412, %v424
  %v1443 = vmul.f32 %v1412, %v428
  %v1444 = vmul.f32 %v1412, %v432
  %v1445 = vmul.f32 %v1412, %v436
  %v1446 = vmul.f32 %v1412, %v440
  %v1447 = vmul.f32 %v1412, %v444
  %v1448 = vmul.f32 %v1412, %v448
  %v1449 = vmul.f32 %v1412, %v452
  %v1450 = vmul.f32 %v1412, %v456
  %v1451 = vmul.f32 %v1412, %v460
  %v1452 = vmul.f32 %v1412, %v464
  %v1453 = vmul.f32 %v1412, %v468
  %v1454 = vmul.f32 %v1412, %v472
  %v1455 = vmul.f32 %v1412, %v476
  %v1456 = vmul.f32 %v1412, %v480
  %v1457 = vmul.f32 %v1412, %v484
  %v1458 = vmul.f32 %v1412, %v488
  %v1459 = vmul.f32 %v1412, %v492
  %v1460 = vmul.f32 %v1412, %v496
  %v1461 = vmul.f32 %v1412, %v500
  %v1462 = vmul.f32 %v1412, %v504
  %v1463 = vmul.f32 %v1412, %v508
  %v1464 = vmul.f32 %v1412, %v512
  %v1465 = vmul.f32 %v1412, %v516
  %v1466 = vmul.f32 %v1412, %v520
  %v1467 = vmul.f32 %v1412, %v524
  %v1468 = vmul.f32 %v1412, %v528
  %v1469 = vmul.f32 %v1412, %v532
  %v1470 = vmul.f32 %v1412, %v536
  %v1471 = vmul.f32 %v1412, %v540
  %v1472 = vmul.f32 %v1412, %v544
  %v1473 = vmul.f32 %v1412, %v548
  %v1474 = vmul.f32 %v1412, %v552
  %v1475 = vmul.f32 %v1412, %v556
  %v1476 = vmul.f32 %v1412, %v560
  %v1477 = vmul.f32 %v1412, %v564
  %v1478 = vmul.f32 %v1412, %v568
  %v1479 = vmul.f32 %v1412, %v572
  %v1480 = vmul.f32 %v1412, %v576
  %v1481 = vmul.f32 %v1412, %v580
  %v1482 = vmul.f32 %v1412, %v584
  %v1483 = vmul.f32 %v1412, %v588
  %v1484 = vmul.f32 %v1412, %v592
  %v1485 = vmul.f32 %v1412, %v596
  %v1486 = vmul.f32 %v1412, %v600
  %v1487 = vmul.f32 %v1412, %v604
  %v1488 = vmul.f32 %v1412, %v608
  %v1489 = vmul.f32 %v1412, %v612
  %v1490 = vmul.f32 %v1412, %v616
  %v1491 = vmul.f32 %v1412, %v620
  %v1492 = vmul.f32 %v1412, %v1429
  %v1493 = vmul.f32 %v1412, 0.0
  %v1494 = vmul.f32 %v1416, %v376
  %v1495 = vmul.f32 %v1416, %v380
  %v1496 = vmul.f32 %v1416, %v384
  %v1497 = vmul.f32 %v1416, %v388
  %v1498 = vmul.f32 %v1416, %v392
  %v1499 = vmul.f32 %v1416, %v396
  %v1500 = vmul.f32 %v1416, %v400
  %v1501 = vmul.f32 %v1416, %v404
  %v1502 = vmul.f32 %v1416, %v408
  %v1503 = vmul.f32 %v1416, %v412
  %v1504 = vmul.f32 %v1416, %v416
  %v1505 = vmul.f32 %v1416, %v420
  %v1506 = vmul.f32 %v1416, %v424
  %v1507 = vmul.f32 %v1416, %v428
  %v1508 = vmul.f32 %v1416, %v432
  %v1509 = vmul.f32 %v1416, %v436
  %v1510 = vmul.f32 %v1416, %v440
  %v1511 = vmul.f32 %v1416, %v444
  %v1512 = vmul.f32 %v1416, %v448
  %v1513 = vmul.f32 %v1416, %v452
  %v1514 = vmul.f32 %v1416, %v456
  %v1515 = vmul.f32 %v1416, %v460
  %v1516 = vmul.f32 %v1416, %v464
  %v1517 = vmul.f32 %v1416, %v468
  %v1518 = vmul.f32 %v1416, %v472
  %v1519 = vmul.f32 %v1416, %v476
  %v1520 = vmul.f32 %v1416, %v480
  %v1521 = vmul.f32 %v1416, %v484
  %v1522 = vmul.f32 %v1416, %v488
  %v1523 = vmul.f32 %v1416, %v492
  %v1524 = vmul.f32 %v1416, %v496
  %v1525 = vmul.f32 %v1416, %v500
  %v1526 = vmul.f32 %v1416, %v504
  %v1527 = vmul.f32 %v1416, %v508
  %v1528 = vmul.f32 %v1416, %v512
  %v1529 = vmul.f32 %v1416, %v516
  %v1530 = vmul.f32 %v1416, %v520
  %v1531 = vmul.f32 %v1416, %v524
  %v1532 = vmul.f32 %v1416, %v528
  %v1533 = vmul.f32 %v1416, %v532
  %v1534 = vmul.f32 %v1416, %v536
  %v1535 = vmul.f32 %v1416, %v540
  %v1536 = vmul.f32 %v1416, %v544
  %v1537 = vmul.f32 %v1416, %v548
  %v1538 = vmul.f32 %v1416, %v552
  %v1539 = vmul.f32 %v1416, %v556
  %v1540 = vmul.f32 %v1416, %v560
  %v1541 = vmul.f32 %v1416, %v564
  %v1542 = vmul.f32 %v1416, %v568
  %v1543 = vmul.f32 %v1416, %v572
  %v1544 = vmul.f32 %v1416, %v576
  %v1545 = vmul.f32 %v1416, %v580
  %v1546 = vmul.f32 %v1416, %v584
  %v1547 = vmul.f32 %v1416, %v588
  %v1548 = vmul.f32 %v1416, %v592
  %v1549 = vmul.f32 %v1416, %v596
  %v1550 = vmul.f32 %v1416, %v600
  %v1551 = vmul.f32 %v1416, %v604
  %v1552 = vmul.f32 %v1416, %v608
  %v1553 = vmul.f32 %v1416, %v612
  %v1554 = vmul.f32 %v1416, %v616
  %v1555 = vmul.f32 %v1416, %v620
  %v1556 = vmul.f32 %v1416, %v1429
  %v1557 = vmul.f32 %v1416, 0.0
  %v1558 = vmul.f32 %v1420, %v376
  %v1559 = vmul.f32 %v1420, %v380
  %v1560 = vmul.f32 %v1420, %v384
  %v1561 = vmul.f32 %v1420, %v388
  %v1562 = vmul.f32 %v1420, %v392
  %v1563 = vmul.f32 %v1420, %v396
  %v1564 = vmul.f32 %v1420, %v400
  %v1565 = vmul.f32 %v1420, %v404
  %v1566 = vmul.f32 %v1420, %v408
  %v1567 = vmul.f32 %v1420, %v412
  %v1568 = vmul.f32 %v1420, %v416
  %v1569 = vmul.f32 %v1420, %v420
  %v1570 = vmul.f32 %v1420, %v424
  %v1571 = vmul.f32 %v1420, %v428
  %v1572 = vmul.f32 %v1420, %v432
  %v1573 = vmul.f32 %v1420, %v436
  %v1574 = vmul.f32 %v1420, %v440
  %v1575 = vmul.f32 %v1420, %v444
  %v1576 = vmul.f32 %v1420, %v448
  %v1577 = vmul.f32 %v1420, %v452
  %v1578 = vmul.f32 %v1420, %v456
  %v1579 = vmul.f32 %v1420, %v460
  %v1580 = vmul.f32 %v1420, %v464
  %v1581 = vmul.f32 %v1420, %v468
  %v1582 = vmul.f32 %v1420, %v472
  %v1583 = vmul.f32 %v1420, %v476
  %v1584 = vmul.f32 %v1420, %v480
  %v1585 = vmul.f32 %v1420, %v484
  %v1586 = vmul.f32 %v1420, %v488
  %v1587 = vmul.f32 %v1420, %v492
  %v1588 = vmul.f32 %v1420, %v496
  %v1589 = vmul.f32 %v1420, %v500
  %v1590 = vmul.f32 %v1420, %v504
  %v1591 = vmul.f32 %v1420, %v508
  %v1592 = vmul.f32 %v1420, %v512
  %v1593 = vmul.f32 %v1420, %v516
  %v1594 = vmul.f32 %v1420, %v520
  %v1595 = vmul.f32 %v1420, %v524
  %v1596 = vmul.f32 %v1420, %v528
  %v1597 = vmul.f32 %v1420, %v532
  %v1598 = vmul.f32 %v1420, %v536
  %v1599 = vmul.f32 %v1420, %v540
  %v1600 = vmul.f32 %v1420, %v544
  %v1601 = vmul.f32 %v1420, %v548
  %v1602 = vmul.f32 %v1420, %v552
  %v1603 = vmul.f32 %v1420, %v556
  %v1604 = vmul.f32 %v1420, %v560
  %v1605 = vmul.f32 %v1420, %v564
  %v1606 = vmul.f32 %v1420, %v568
  %v1607 = vmul.f32 %v1420, %v572
  %v1608 = vmul.f32 %v1420, %v576
  %v1609 = vmul.f32 %v1420, %v580
  %v1610 = vmul.f32 %v1420, %v584
  %v1611 = vmul.f32 %v1420, %v588
  %v1612 = vmul.f32 %v1420, %v592
  %v1613 = vmul.f32 %v1420, %v596
  %v1614 = vmul.f32 %v1420, %v600
  %v1615 = vmul.f32 %v1420, %v604
  %v1616 = vmul.f32 %v1420, %v608
  %v1617 = vmul.f32 %v1420, %v612
  %v1618 = vmul.f32 %v1420, %v616
  %v1619 = vmul.f32 %v1420, %v620
  %v1620 = vmul.f32 %v1420, %v1429
  %v1621 = vmul.f32 %v1420, 0.0
  %v1622 = vmul.f32 %v1424, %v376
  %v1623 = vmul.f32 %v1424, %v380
  %v1624 = vmul.f32 %v1424, %v384
  %v1625 = vmul.f32 %v1424, %v388
  %v1626 = vmul.f32 %v1424, %v392
  %v1627 = vmul.f32 %v1424, %v396
  %v1628 = vmul.f32 %v1424, %v400
  %v1629 = vmul.f32 %v1424, %v404
  %v1630 = vmul.f32 %v1424, %v408
  %v1631 = vmul.f32 %v1424, %v412
  %v1632 = vmul.f32 %v1424, %v416
  %v1633 = vmul.f32 %v1424, %v420
  %v1634 = vmul.f32 %v1424, %v424
  %v1635 = vmul.f32 %v1424, %v428
  %v1636 = vmul.f32 %v1424, %v432
  %v1637 = vmul.f32 %v1424, %v436
  %v1638 = vmul.f32 %v1424, %v440
  %v1639 = vmul.f32 %v1424, %v444
  %v1640 = vmul.f32 %v1424, %v448
  %v1641 = vmul.f32 %v1424, %v452
  %v1642 = vmul.f32 %v1424, %v456
  %v1643 = vmul.f32 %v1424, %v460
  %v1644 = vmul.f32 %v1424, %v464
  %v1645 = vmul.f32 %v1424, %v468
  %v1646 = vmul.f32 %v1424, %v472
  %v1647 = vmul.f32 %v1424, %v476
  %v1648 = vmul.f32 %v1424, %v480
  %v1649 = vmul.f32 %v1424, %v484
  %v1650 = vmul.f32 %v1424, %v488
  %v1651 = vmul.f32 %v1424, %v492
  %v1652 = vmul.f32 %v1424, %v496
  %v1653 = vmul.f32 %v1424, %v500
  %v1654 = vmul.f32 %v1424, %v504
  %v1655 = vmul.f32 %v1424, %v508
  %v1656 = vmul.f32 %v1424, %v512
  %v1657 = vmul.f32 %v1424, %v516
  %v1658 = vmul.f32 %v1424, %v520
  %v1659 = vmul.f32 %v1424, %v524
  %v1660 = vmul.f32 %v1424, %v528
  %v1661 = vmul.f32 %v1424, %v532
  %v1662 = vmul.f32 %v1424, %v536
  %v1663 = vmul.f32 %v1424, %v540
  %v1664 = vmul.f32 %v1424, %v544
  %v1665 = vmul.f32 %v1424, %v548
  %v1666 = vmul.f32 %v1424, %v552
  %v1667 = vmul.f32 %v1424, %v556
  %v1668 = vmul.f32 %v1424, %v560
  %v1669 = vmul.f32 %v1424, %v564
  %v1670 = vmul.f32 %v1424, %v568
  %v1671 = vmul.f32 %v1424, %v572
  %v1672 = vmul.f32 %v1424, %v576
  %v1673 = vmul.f32 %v1424, %v580
  %v1674 = vmul.f32 %v1424, %v584
  %v1675 = vmul.f32 %v1424, %v588
  %v1676 = vmul.f32 %v1424, %v592
  %v1677 = vmul.f32 %v1424, %v596
  %v1678 = vmul.f32 %v1424, %v600
  %v1679 = vmul.f32 %v1424, %v604
  %v1680 = vmul.f32 %v1424, %v608
  %v1681 = vmul.f32 %v1424, %v612
  %v1682 = vmul.f32 %v1424, %v616
  %v1683 = vmul.f32 %v1424, %v620
  %v1684 = vmul.f32 %v1424, %v1429
  %v1685 = vmul.f32 %v1424, 0.0
  %v1686 = vadd.f32 %v1154, %v1430
  %v1687 = vadd.f32 %v1155, %v1431
  %v1688 = vadd.f32 %v1156, %v1432
  %v1689 = vadd.f32 %v1157, %v1433
  %v1690 = vadd.f32 %v1158, %v1434
  %v1691 = vadd.f32 %v1159, %v1435
  %v1692 = vadd.f32 %v1160, %v1436
  %v1693 = vadd.f32 %v1161, %v1437
  %v1694 = vadd.f32 %v1162, %v1438
  %v1695 = vadd.f32 %v1163, %v1439
  %v1696 = vadd.f32 %v1164, %v1440
  %v1697 = vadd.f32 %v1165, %v1441
  %v1698 = vadd.f32 %v1166, %v1442
  %v1699 = vadd.f32 %v1167, %v1443
  %v1700 = vadd.f32 %v1168, %v1444
  %v1701 = vadd.f32 %v1169, %v1445
  %v1702 = vadd.f32 %v1170, %v1446
  %v1703 = vadd.f32 %v1171, %v1447
  %v1704 = vadd.f32 %v1172, %v1448
  %v1705 = vadd.f32 %v1173, %v1449
  %v1706 = vadd.f32 %v1174, %v1450
  %v1707 = vadd.f32 %v1175, %v1451
  %v1708 = vadd.f32 %v1176, %v1452
  %v1709 = vadd.f32 %v1177, %v1453
  %v1710 = vadd.f32 %v1178, %v1454
  %v1711 = vadd.f32 %v1179, %v1455
  %v1712 = vadd.f32 %v1180, %v1456
  %v1713 = vadd.f32 %v1181, %v1457
  %v1714 = vadd.f32 %v1182, %v1458
  %v1715 = vadd.f32 %v1183, %v1459
  %v1716 = vadd.f32 %v1184, %v1460
  %v1717 = vadd.f32 %v1185, %v1461
  %v1718 = vadd.f32 %v1186, %v1462
  %v1719 = vadd.f32 %v1187, %v1463
  %v1720 = vadd.f32 %v1188, %v1464
  %v1721 = vadd.f32 %v1189, %v1465
  %v1722 = vadd.f32 %v1190, %v1466
  %v1723 = vadd.f32 %v1191, %v1467
  %v1724 = vadd.f32 %v1192, %v1468
  %v1725 = vadd.f32 %v1193, %v1469
  %v1726 = vadd.f32 %v1194, %v1470
  %v1727 = vadd.f32 %v1195, %v1471
  %v1728 = vadd.f32 %v1196, %v1472
  %v1729 = vadd.f32 %v1197, %v1473
  %v1730 = vadd.f32 %v1198, %v1474
  %v1731 = vadd.f32 %v1199, %v1475
  %v1732 = vadd.f32 %v1200, %v1476
  %v1733 = vadd.f32 %v1201, %v1477
  %v1734 = vadd.f32 %v1202, %v1478
  %v1735 = vadd.f32 %v1203, %v1479
  %v1736 = vadd.f32 %v1204, %v1480
  %v1737 = vadd.f32 %v1205, %v1481
  %v1738 = vadd.f32 %v1206, %v1482
  %v1739 = vadd.f32 %v1207, %v1483
  %v1740 = vadd.f32 %v1208, %v1484
  %v1741 = vadd.f32 %v1209, %v1485
  %v1742 = vadd.f32 %v1210, %v1486
  %v1743 = vadd.f32 %v1211, %v1487
  %v1744 = vadd.f32 %v1212, %v1488
  %v1745 = vadd.f32 %v1213, %v1489
  %v1746 = vadd.f32 %v1214, %v1490
  %v1747 = vadd.f32 %v1215, %v1491
  %v1748 = vadd.f32 %v1216, %v1492
  %v1749 = vadd.f32 %v1217, %v1493
  %v1750 = vadd.f32 %v1218, %v1494
  %v1751 = vadd.f32 %v1219, %v1495
  %v1752 = vadd.f32 %v1220, %v1496
  %v1753 = vadd.f32 %v1221, %v1497
  %v1754 = vadd.f32 %v1222, %v1498
  %v1755 = vadd.f32 %v1223, %v1499
  %v1756 = vadd.f32 %v1224, %v1500
  %v1757 = vadd.f32 %v1225, %v1501
  %v1758 = vadd.f32 %v1226, %v1502
  %v1759 = vadd.f32 %v1227, %v1503
  %v1760 = vadd.f32 %v1228, %v1504
  %v1761 = vadd.f32 %v1229, %v1505
  %v1762 = vadd.f32 %v1230, %v1506
  %v1763 = vadd.f32 %v1231, %v1507
  %v1764 = vadd.f32 %v1232, %v1508
  %v1765 = vadd.f32 %v1233, %v1509
  %v1766 = vadd.f32 %v1234, %v1510
  %v1767 = vadd.f32 %v1235, %v1511
  %v1768 = vadd.f32 %v1236, %v1512
  %v1769 = vadd.f32 %v1237, %v1513
  %v1770 = vadd.f32 %v1238, %v1514
  %v1771 = vadd.f32 %v1239, %v1515
  %v1772 = vadd.f32 %v1240, %v1516
  %v1773 = vadd.f32 %v1241, %v1517
  %v1774 = vadd.f32 %v1242, %v1518
  %v1775 = vadd.f32 %v1243, %v1519
  %v1776 = vadd.f32 %v1244, %v1520
  %v1777 = vadd.f32 %v1245, %v1521
  %v1778 = vadd.f32 %v1246, %v1522
  %v1779 = vadd.f32 %v1247, %v1523
  %v1780 = vadd.f32 %v1248, %v1524
  %v1781 = vadd.f32 %v1249, %v1525
  %v1782 = vadd.f32 %v1250, %v1526
  %v1783 = vadd.f32 %v1251, %v1527
  %v1784 = vadd.f32 %v1252, %v1528
  %v1785 = vadd.f32 %v1253, %v1529
  %v1786 = vadd.f32 %v1254, %v1530
  %v1787 = vadd.f32 %v1255, %v1531
  %v1788 = vadd.f32 %v1256, %v1532
  %v1789 = vadd.f32 %v1257, %v1533
  %v1790 = vadd.f32 %v1258, %v1534
  %v1791 = vadd.f32 %v1259, %v1535
  %v1792 = vadd.f32 %v1260, %v1536
  %v1793 = vadd.f32 %v1261, %v1537
  %v1794 = vadd.f32 %v1262, %v1538
  %v1795 = vadd.f32 %v1263, %v1539
  %v1796 = vadd.f32 %v1264, %v1540
  %v1797 = vadd.f32 %v1265, %v1541
  %v1798 = vadd.f32 %v1266, %v1542
  %v1799 = vadd.f32 %v1267, %v1543
  %v1800 = vadd.f32 %v1268, %v1544
  %v1801 = vadd.f32 %v1269, %v1545
  %v1802 = vadd.f32 %v1270, %v1546
  %v1803 = vadd.f32 %v1271, %v1547
  %v1804 = vadd.f32 %v1272, %v1548
  %v1805 = vadd.f32 %v1273, %v1549
  %v1806 = vadd.f32 %v1274, %v1550
  %v1807 = vadd.f32 %v1275, %v1551
  %v1808 = vadd.f32 %v1276, %v1552
  %v1809 = vadd.f32 %v1277, %v1553
  %v1810 = vadd.f32 %v1278, %v1554
  %v1811 = vadd.f32 %v1279, %v1555
  %v1812 = vadd.f32 %v1280, %v1556
  %v1813 = vadd.f32 %v1281, %v1557
  %v1814 = vadd.f32 %v1282, %v1558
  %v1815 = vadd.f32 %v1283, %v1559
  %v1816 = vadd.f32 %v1284, %v1560
  %v1817 = vadd.f32 %v1285, %v1561
  %v1818 = vadd.f32 %v1286, %v1562
  %v1819 = vadd.f32 %v1287, %v1563
  %v1820 = vadd.f32 %v1288, %v1564
  %v1821 = vadd.f32 %v1289, %v1565
  %v1822 = vadd.f32 %v1290, %v1566
  %v1823 = vadd.f32 %v1291, %v1567
  %v1824 = vadd.f32 %v1292, %v1568
  %v1825 = vadd.f32 %v1293, %v1569
  %v1826 = vadd.f32 %v1294, %v1570
  %v1827 = vadd.f32 %v1295, %v1571
  %v1828 = vadd.f32 %v1296, %v1572
  %v1829 = vadd.f32 %v1297, %v1573
  %v1830 = vadd.f32 %v1298, %v1574
  %v1831 = vadd.f32 %v1299, %v1575
  %v1832 = vadd.f32 %v1300, %v1576
  %v1833 = vadd.f32 %v1301, %v1577
  %v1834 = vadd.f32 %v1302, %v1578
  %v1835 = vadd.f32 %v1303, %v1579
  %v1836 = vadd.f32 %v1304, %v1580
  %v1837 = vadd.f32 %v1305, %v1581
  %v1838 = vadd.f32 %v1306, %v1582
  %v1839 = vadd.f32 %v1307, %v1583
  %v1840 = vadd.f32 %v1308, %v1584
  %v1841 = vadd.f32 %v1309, %v1585
  %v1842 = vadd.f32 %v1310, %v1586
  %v1843 = vadd.f32 %v1311, %v1587
  %v1844 = vadd.f32 %v1312, %v1588
  %v1845 = vadd.f32 %v1313, %v1589
  %v1846 = vadd.f32 %v1314, %v1590
  %v1847 = vadd.f32 %v1315, %v1591
  %v1848 = vadd.f32 %v1316, %v1592
  %v1849 = vadd.f32 %v1317, %v1593
  %v1850 = vadd.f32 %v1318, %v1594
  %v1851 = vadd.f32 %v1319, %v1595
  %v1852 = vadd.f32 %v1320, %v1596
  %v1853 = vadd.f32 %v1321, %v1597
  %v1854 = vadd.f32 %v1322, %v1598
  %v1855 = vadd.f32 %v1323, %v1599
  %v1856 = vadd.f32 %v1324, %v1600
  %v1857 = vadd.f32 %v1325, %v1601
  %v1858 = vadd.f32 %v1326, %v1602
  %v1859 = vadd.f32 %v1327, %v1603
  %v1860 = vadd.f32 %v1328, %v1604
  %v1861 = vadd.f32 %v1329, %v1605
  %v1862 = vadd.f32 %v1330, %v1606
  %v1863 = vadd.f32 %v1331, %v1607
  %v1864 = vadd.f32 %v1332, %v1608
  %v1865 = vadd.f32 %v1333, %v1609
  %v1866 = vadd.f32 %v1334, %v1610
  %v1867 = vadd.f32 %v1335, %v1611
  %v1868 = vadd.f32 %v1336, %v1612
  %v1869 = vadd.f32 %v1337, %v1613
  %v1870 = vadd.f32 %v1338, %v1614
  %v1871 = vadd.f32 %v1339, %v1615
  %v1872 = vadd.f32 %v1340, %v1616
  %v1873 = vadd.f32 %v1341, %v1617
  %v1874 = vadd.f32 %v1342, %v1618
  %v1875 = vadd.f32 %v1343, %v1619
  %v1876 = vadd.f32 %v1344, %v1620
  %v1877 = vadd.f32 %v1345, %v1621
  %v1878 = vadd.f32 %v1346, %v1622
  %v1879 = vadd.f32 %v1347, %v1623
  %v1880 = vadd.f32 %v1348, %v1624
  %v1881 = vadd.f32 %v1349, %v1625
  %v1882 = vadd.f32 %v1350, %v1626
  %v1883 = vadd.f32 %v1351, %v1627
  %v1884 = vadd.f32 %v1352, %v1628
  %v1885 = vadd.f32 %v1353, %v1629
  %v1886 = vadd.f32 %v1354, %v1630
  %v1887 = vadd.f32 %v1355, %v1631
  %v1888 = vadd.f32 %v1356, %v1632
  %v1889 = vadd.f32 %v1357, %v1633
  %v1890 = vadd.f32 %v1358, %v1634
  %v1891 = vadd.f32 %v1359, %v1635
  %v1892 = vadd.f32 %v1360, %v1636
  %v1893 = vadd.f32 %v1361, %v1637
  %v1894 = vadd.f32 %v1362, %v1638
  %v1895 = vadd.f32 %v1363, %v1639
  %v1896 = vadd.f32 %v1364, %v1640
  %v1897 = vadd.f32 %v1365, %v1641
  %v1898 = vadd.f32 %v1366, %v1642
  %v1899 = vadd.f32 %v1367, %v1643
  %v1900 = vadd.f32 %v1368, %v1644
  %v1901 = vadd.f32 %v1369, %v1645
  %v1902 = vadd.f32 %v1370, %v1646
  %v1903 = vadd.f32 %v1371, %v1647
  %v1904 = vadd.f32 %v1372, %v1648
  %v1905 = vadd.f32 %v1373, %v1649
  %v1906 = vadd.f32 %v1374, %v1650
  %v1907 = vadd.f32 %v1375, %v1651
  %v1908 = vadd.f32 %v1376, %v1652
  %v1909 = vadd.f32 %v1377, %v1653
  %v1910 = vadd.f32 %v1378, %v1654
  %v1911 = vadd.f32 %v1379, %v1655
  %v1912 = vadd.f32 %v1380, %v1656
  %v1913 = vadd.f32 %v1381, %v1657
  %v1914 = vadd.f32 %v1382, %v1658
  %v1915 = vadd.f32 %v1383, %v1659
  %v1916 = vadd.f32 %v1384, %v1660
  %v1917 = vadd.f32 %v1385, %v1661
  %v1918 = vadd.f32 %v1386, %v1662
  %v1919 = vadd.f32 %v1387, %v1663
  %v1920 = vadd.f32 %v1388, %v1664
  %v1921 = vadd.f32 %v1389, %v1665
  %v1922 = vadd.f32 %v1390, %v1666
  %v1923 = vadd.f32 %v1391, %v1667
  %v1924 = vadd.f32 %v1392, %v1668
  %v1925 = vadd.f32 %v1393, %v1669
  %v1926 = vadd.f32 %v1394, %v1670
  %v1927 = vadd.f32 %v1395, %v1671
  %v1928 = vadd.f32 %v1396, %v1672
  %v1929 = vadd.f32 %v1397, %v1673
  %v1930 = vadd.f32 %v1398, %v1674
  %v1931 = vadd.f32 %v1399, %v1675
  %v1932 = vadd.f32 %v1400, %v1676
  %v1933 = vadd.f32 %v1401, %v1677
  %v1934 = vadd.f32 %v1402, %v1678
  %v1935 = vadd.f32 %v1403, %v1679
  %v1936 = vadd.f32 %v1404, %v1680
  %v1937 = vadd.f32 %v1405, %v1681
  %v1938 = vadd.f32 %v1406, %v1682
  %v1939 = vadd.f32 %v1407, %v1683
  %v1940 = vadd.f32 %v1408, %v1684
  %v1941 = vadd.f32 %v1409, %v1685
  %1942 = vset.pattern.permute.xlu0 3
  %1943 = vperm.xlu0 %1942, %v19
  %v1944 = vpop.permute.xlu0 %1943
  %1946 = vset.pattern.permute.xlu0 3
  %1947 = vperm.xlu0 %1946, %v20
  %v1948 = vpop.permute.xlu0 %1947
  %1950 = vset.pattern.permute.xlu0 3
  %1951 = vperm.xlu0 %1950, %v21
  %v1952 = vpop.permute.xlu0 %1951
  %1954 = vset.pattern.permute.xlu0 3
  %1955 = vperm.xlu0 %1954, %v22
  %v1956 = vpop.permute.xlu0 %1955
  %v1958 = vadd.f32 %v1686, %v1944
  %v1959 = vadd.f32 %v1687, %v1944
  %v1960 = vadd.f32 %v1688, %v1944
  %v1961 = vadd.f32 %v1689, %v1944
  %v1962 = vadd.f32 %v1690, %v1944
  %v1963 = vadd.f32 %v1691, %v1944
  %v1964 = vadd.f32 %v1692, %v1944
  %v1965 = vadd.f32 %v1693, %v1944
  %v1966 = vadd.f32 %v1694, %v1944
  %v1967 = vadd.f32 %v1695, %v1944
  %v1968 = vadd.f32 %v1696, %v1944
  %v1969 = vadd.f32 %v1697, %v1944
  %v1970 = vadd.f32 %v1698, %v1944
  %v1971 = vadd.f32 %v1699, %v1944
  %v1972 = vadd.f32 %v1700, %v1944
  %v1973 = vadd.f32 %v1701, %v1944
  %v1974 = vadd.f32 %v1702, %v1944
  %v1975 = vadd.f32 %v1703, %v1944
  %v1976 = vadd.f32 %v1704, %v1944
  %v1977 = vadd.f32 %v1705, %v1944
  %v1978 = vadd.f32 %v1706, %v1944
  %v1979 = vadd.f32 %v1707, %v1944
  %v1980 = vadd.f32 %v1708, %v1944
  %v1981 = vadd.f32 %v1709, %v1944
  %v1982 = vadd.f32 %v1710, %v1944
  %v1983 = vadd.f32 %v1711, %v1944
  %v1984 = vadd.f32 %v1712, %v1944
  %v1985 = vadd.f32 %v1713, %v1944
  %v1986 = vadd.f32 %v1714, %v1944
  %v1987 = vadd.f32 %v1715, %v1944
  %v1988 = vadd.f32 %v1716, %v1944
  %v1989 = vadd.f32 %v1717, %v1944
  %v1990 = vadd.f32 %v1718, %v1944
  %v1991 = vadd.f32 %v1719, %v1944
  %v1992 = vadd.f32 %v1720, %v1944
  %v1993 = vadd.f32 %v1721, %v1944
  %v1994 = vadd.f32 %v1722, %v1944
  %v1995 = vadd.f32 %v1723, %v1944
  %v1996 = vadd.f32 %v1724, %v1944
  %v1997 = vadd.f32 %v1725, %v1944
  %v1998 = vadd.f32 %v1726, %v1944
  %v1999 = vadd.f32 %v1727, %v1944
  %v2000 = vadd.f32 %v1728, %v1944
  %v2001 = vadd.f32 %v1729, %v1944
  %v2002 = vadd.f32 %v1730, %v1944
  %v2003 = vadd.f32 %v1731, %v1944
  %v2004 = vadd.f32 %v1732, %v1944
  %v2005 = vadd.f32 %v1733, %v1944
  %v2006 = vadd.f32 %v1734, %v1944
  %v2007 = vadd.f32 %v1735, %v1944
  %v2008 = vadd.f32 %v1736, %v1944
  %v2009 = vadd.f32 %v1737, %v1944
  %v2010 = vadd.f32 %v1738, %v1944
  %v2011 = vadd.f32 %v1739, %v1944
  %v2012 = vadd.f32 %v1740, %v1944
  %v2013 = vadd.f32 %v1741, %v1944
  %v2014 = vadd.f32 %v1742, %v1944
  %v2015 = vadd.f32 %v1743, %v1944
  %v2016 = vadd.f32 %v1744, %v1944
  %v2017 = vadd.f32 %v1745, %v1944
  %v2018 = vadd.f32 %v1746, %v1944
  %v2019 = vadd.f32 %v1747, %v1944
  %v2020 = vadd.f32 %v1748, %v1944
  %v2021 = vadd.f32 %v1749, %v1944
  %v2022 = vadd.f32 %v1750, %v1948
  %v2023 = vadd.f32 %v1751, %v1948
  %v2024 = vadd.f32 %v1752, %v1948
  %v2025 = vadd.f32 %v1753, %v1948
  %v2026 = vadd.f32 %v1754, %v1948
  %v2027 = vadd.f32 %v1755, %v1948
  %v2028 = vadd.f32 %v1756, %v1948
  %v2029 = vadd.f32 %v1757, %v1948
  %v2030 = vadd.f32 %v1758, %v1948
  %v2031 = vadd.f32 %v1759, %v1948
  %v2032 = vadd.f32 %v1760, %v1948
  %v2033 = vadd.f32 %v1761, %v1948
  %v2034 = vadd.f32 %v1762, %v1948
  %v2035 = vadd.f32 %v1763, %v1948
  %v2036 = vadd.f32 %v1764, %v1948
  %v2037 = vadd.f32 %v1765, %v1948
  %v2038 = vadd.f32 %v1766, %v1948
  %v2039 = vadd.f32 %v1767, %v1948
  %v2040 = vadd.f32 %v1768, %v1948
  %v2041 = vadd.f32 %v1769, %v1948
  %v2042 = vadd.f32 %v1770, %v1948
  %v2043 = vadd.f32 %v1771, %v1948
  %v2044 = vadd.f32 %v1772, %v1948
  %v2045 = vadd.f32 %v1773, %v1948
  %v2046 = vadd.f32 %v1774, %v1948
  %v2047 = vadd.f32 %v1775, %v1948
  %v2048 = vadd.f32 %v1776, %v1948
  %v2049 = vadd.f32 %v1777, %v1948
  %v2050 = vadd.f32 %v1778, %v1948
  %v2051 = vadd.f32 %v1779, %v1948
  %v2052 = vadd.f32 %v1780, %v1948
  %v2053 = vadd.f32 %v1781, %v1948
  %v2054 = vadd.f32 %v1782, %v1948
  %v2055 = vadd.f32 %v1783, %v1948
  %v2056 = vadd.f32 %v1784, %v1948
  %v2057 = vadd.f32 %v1785, %v1948
  %v2058 = vadd.f32 %v1786, %v1948
  %v2059 = vadd.f32 %v1787, %v1948
  %v2060 = vadd.f32 %v1788, %v1948
  %v2061 = vadd.f32 %v1789, %v1948
  %v2062 = vadd.f32 %v1790, %v1948
  %v2063 = vadd.f32 %v1791, %v1948
  %v2064 = vadd.f32 %v1792, %v1948
  %v2065 = vadd.f32 %v1793, %v1948
  %v2066 = vadd.f32 %v1794, %v1948
  %v2067 = vadd.f32 %v1795, %v1948
  %v2068 = vadd.f32 %v1796, %v1948
  %v2069 = vadd.f32 %v1797, %v1948
  %v2070 = vadd.f32 %v1798, %v1948
  %v2071 = vadd.f32 %v1799, %v1948
  %v2072 = vadd.f32 %v1800, %v1948
  %v2073 = vadd.f32 %v1801, %v1948
  %v2074 = vadd.f32 %v1802, %v1948
  %v2075 = vadd.f32 %v1803, %v1948
  %v2076 = vadd.f32 %v1804, %v1948
  %v2077 = vadd.f32 %v1805, %v1948
  %v2078 = vadd.f32 %v1806, %v1948
  %v2079 = vadd.f32 %v1807, %v1948
  %v2080 = vadd.f32 %v1808, %v1948
  %v2081 = vadd.f32 %v1809, %v1948
  %v2082 = vadd.f32 %v1810, %v1948
  %v2083 = vadd.f32 %v1811, %v1948
  %v2084 = vadd.f32 %v1812, %v1948
  %v2085 = vadd.f32 %v1813, %v1948
  %v2086 = vadd.f32 %v1814, %v1952
  %v2087 = vadd.f32 %v1815, %v1952
  %v2088 = vadd.f32 %v1816, %v1952
  %v2089 = vadd.f32 %v1817, %v1952
  %v2090 = vadd.f32 %v1818, %v1952
  %v2091 = vadd.f32 %v1819, %v1952
  %v2092 = vadd.f32 %v1820, %v1952
  %v2093 = vadd.f32 %v1821, %v1952
  %v2094 = vadd.f32 %v1822, %v1952
  %v2095 = vadd.f32 %v1823, %v1952
  %v2096 = vadd.f32 %v1824, %v1952
  %v2097 = vadd.f32 %v1825, %v1952
  %v2098 = vadd.f32 %v1826, %v1952
  %v2099 = vadd.f32 %v1827, %v1952
  %v2100 = vadd.f32 %v1828, %v1952
  %v2101 = vadd.f32 %v1829, %v1952
  %v2102 = vadd.f32 %v1830, %v1952
  %v2103 = vadd.f32 %v1831, %v1952
  %v2104 = vadd.f32 %v1832, %v1952
  %v2105 = vadd.f32 %v1833, %v1952
  %v2106 = vadd.f32 %v1834, %v1952
  %v2107 = vadd.f32 %v1835, %v1952
  %v2108 = vadd.f32 %v1836, %v1952
  %v2109 = vadd.f32 %v1837, %v1952
  %v2110 = vadd.f32 %v1838, %v1952
  %v2111 = vadd.f32 %v1839, %v1952
  %v2112 = vadd.f32 %v1840, %v1952
  %v2113 = vadd.f32 %v1841, %v1952
  %v2114 = vadd.f32 %v1842, %v1952
  %v2115 = vadd.f32 %v1843, %v1952
  %v2116 = vadd.f32 %v1844, %v1952
  %v2117 = vadd.f32 %v1845, %v1952
  %v2118 = vadd.f32 %v1846, %v1952
  %v2119 = vadd.f32 %v1847, %v1952
  %v2120 = vadd.f32 %v1848, %v1952
  %v2121 = vadd.f32 %v1849, %v1952
  %v2122 = vadd.f32 %v1850, %v1952
  %v2123 = vadd.f32 %v1851, %v1952
  %v2124 = vadd.f32 %v1852, %v1952
  %v2125 = vadd.f32 %v1853, %v1952
  %v2126 = vadd.f32 %v1854, %v1952
  %v2127 = vadd.f32 %v1855, %v1952
  %v2128 = vadd.f32 %v1856, %v1952
  %v2129 = vadd.f32 %v1857, %v1952
  %v2130 = vadd.f32 %v1858, %v1952
  %v2131 = vadd.f32 %v1859, %v1952
  %v2132 = vadd.f32 %v1860, %v1952
  %v2133 = vadd.f32 %v1861, %v1952
  %v2134 = vadd.f32 %v1862, %v1952
  %v2135 = vadd.f32 %v1863, %v1952
  %v2136 = vadd.f32 %v1864, %v1952
  %v2137 = vadd.f32 %v1865, %v1952
  %v2138 = vadd.f32 %v1866, %v1952
  %v2139 = vadd.f32 %v1867, %v1952
  %v2140 = vadd.f32 %v1868, %v1952
  %v2141 = vadd.f32 %v1869, %v1952
  %v2142 = vadd.f32 %v1870, %v1952
  %v2143 = vadd.f32 %v1871, %v1952
  %v2144 = vadd.f32 %v1872, %v1952
  %v2145 = vadd.f32 %v1873, %v1952
  %v2146 = vadd.f32 %v1874, %v1952
  %v2147 = vadd.f32 %v1875, %v1952
  %v2148 = vadd.f32 %v1876, %v1952
  %v2149 = vadd.f32 %v1877, %v1952
  %v2150 = vadd.f32 %v1878, %v1956
  %v2151 = vadd.f32 %v1879, %v1956
  %v2152 = vadd.f32 %v1880, %v1956
  %v2153 = vadd.f32 %v1881, %v1956
  %v2154 = vadd.f32 %v1882, %v1956
  %v2155 = vadd.f32 %v1883, %v1956
  %v2156 = vadd.f32 %v1884, %v1956
  %v2157 = vadd.f32 %v1885, %v1956
  %v2158 = vadd.f32 %v1886, %v1956
  %v2159 = vadd.f32 %v1887, %v1956
  %v2160 = vadd.f32 %v1888, %v1956
  %v2161 = vadd.f32 %v1889, %v1956
  %v2162 = vadd.f32 %v1890, %v1956
  %v2163 = vadd.f32 %v1891, %v1956
  %v2164 = vadd.f32 %v1892, %v1956
  %v2165 = vadd.f32 %v1893, %v1956
  %v2166 = vadd.f32 %v1894, %v1956
  %v2167 = vadd.f32 %v1895, %v1956
  %v2168 = vadd.f32 %v1896, %v1956
  %v2169 = vadd.f32 %v1897, %v1956
  %v2170 = vadd.f32 %v1898, %v1956
  %v2171 = vadd.f32 %v1899, %v1956
  %v2172 = vadd.f32 %v1900, %v1956
  %v2173 = vadd.f32 %v1901, %v1956
  %v2174 = vadd.f32 %v1902, %v1956
  %v2175 = vadd.f32 %v1903, %v1956
  %v2176 = vadd.f32 %v1904, %v1956
  %v2177 = vadd.f32 %v1905, %v1956
  %v2178 = vadd.f32 %v1906, %v1956
  %v2179 = vadd.f32 %v1907, %v1956
  %v2180 = vadd.f32 %v1908, %v1956
  %v2181 = vadd.f32 %v1909, %v1956
  %v2182 = vadd.f32 %v1910, %v1956
  %v2183 = vadd.f32 %v1911, %v1956
  %v2184 = vadd.f32 %v1912, %v1956
  %v2185 = vadd.f32 %v1913, %v1956
  %v2186 = vadd.f32 %v1914, %v1956
  %v2187 = vadd.f32 %v1915, %v1956
  %v2188 = vadd.f32 %v1916, %v1956
  %v2189 = vadd.f32 %v1917, %v1956
  %v2190 = vadd.f32 %v1918, %v1956
  %v2191 = vadd.f32 %v1919, %v1956
  %v2192 = vadd.f32 %v1920, %v1956
  %v2193 = vadd.f32 %v1921, %v1956
  %v2194 = vadd.f32 %v1922, %v1956
  %v2195 = vadd.f32 %v1923, %v1956
  %v2196 = vadd.f32 %v1924, %v1956
  %v2197 = vadd.f32 %v1925, %v1956
  %v2198 = vadd.f32 %v1926, %v1956
  %v2199 = vadd.f32 %v1927, %v1956
  %v2200 = vadd.f32 %v1928, %v1956
  %v2201 = vadd.f32 %v1929, %v1956
  %v2202 = vadd.f32 %v1930, %v1956
  %v2203 = vadd.f32 %v1931, %v1956
  %v2204 = vadd.f32 %v1932, %v1956
  %v2205 = vadd.f32 %v1933, %v1956
  %v2206 = vadd.f32 %v1934, %v1956
  %v2207 = vadd.f32 %v1935, %v1956
  %v2208 = vadd.f32 %v1936, %v1956
  %v2209 = vadd.f32 %v1937, %v1956
  %v2210 = vadd.f32 %v1938, %v1956
  %v2211 = vadd.f32 %v1939, %v1956
  %v2212 = vadd.f32 %v1940, %v1956
  %v2213 = vadd.f32 %v1941, %v1956
  %v2214 = vmul.f32 %v1958, 0.2
  %v2215 = vmul.f32 %v1959, 0.2
  %v2216 = vmul.f32 %v1960, 0.2
  %v2217 = vmul.f32 %v1961, 0.2
  %v2218 = vmul.f32 %v1962, 0.2
  %v2219 = vmul.f32 %v1963, 0.2
  %v2220 = vmul.f32 %v1964, 0.2
  %v2221 = vmul.f32 %v1965, 0.2
  %v2222 = vmul.f32 %v1966, 0.2
  %v2223 = vmul.f32 %v1967, 0.2
  %v2224 = vmul.f32 %v1968, 0.2
  %v2225 = vmul.f32 %v1969, 0.2
  %v2226 = vmul.f32 %v1970, 0.2
  %v2227 = vmul.f32 %v1971, 0.2
  %v2228 = vmul.f32 %v1972, 0.2
  %v2229 = vmul.f32 %v1973, 0.2
  %v2230 = vmul.f32 %v1974, 0.2
  %v2231 = vmul.f32 %v1975, 0.2
  %v2232 = vmul.f32 %v1976, 0.2
  %v2233 = vmul.f32 %v1977, 0.2
  %v2234 = vmul.f32 %v1978, 0.2
  %v2235 = vmul.f32 %v1979, 0.2
  %v2236 = vmul.f32 %v1980, 0.2
  %v2237 = vmul.f32 %v1981, 0.2
  %v2238 = vmul.f32 %v1982, 0.2
  %v2239 = vmul.f32 %v1983, 0.2
  %v2240 = vmul.f32 %v1984, 0.2
  %v2241 = vmul.f32 %v1985, 0.2
  %v2242 = vmul.f32 %v1986, 0.2
  %v2243 = vmul.f32 %v1987, 0.2
  %v2244 = vmul.f32 %v1988, 0.2
  %v2245 = vmul.f32 %v1989, 0.2
  %v2246 = vmul.f32 %v1990, 0.2
  %v2247 = vmul.f32 %v1991, 0.2
  %v2248 = vmul.f32 %v1992, 0.2
  %v2249 = vmul.f32 %v1993, 0.2
  %v2250 = vmul.f32 %v1994, 0.2
  %v2251 = vmul.f32 %v1995, 0.2
  %v2252 = vmul.f32 %v1996, 0.2
  %v2253 = vmul.f32 %v1997, 0.2
  %v2254 = vmul.f32 %v1998, 0.2
  %v2255 = vmul.f32 %v1999, 0.2
  %v2256 = vmul.f32 %v2000, 0.2
  %v2257 = vmul.f32 %v2001, 0.2
  %v2258 = vmul.f32 %v2002, 0.2
  %v2259 = vmul.f32 %v2003, 0.2
  %v2260 = vmul.f32 %v2004, 0.2
  %v2261 = vmul.f32 %v2005, 0.2
  %v2262 = vmul.f32 %v2006, 0.2
  %v2263 = vmul.f32 %v2007, 0.2
  %v2264 = vmul.f32 %v2008, 0.2
  %v2265 = vmul.f32 %v2009, 0.2
  %v2266 = vmul.f32 %v2010, 0.2
  %v2267 = vmul.f32 %v2011, 0.2
  %v2268 = vmul.f32 %v2012, 0.2
  %v2269 = vmul.f32 %v2013, 0.2
  %v2270 = vmul.f32 %v2014, 0.2
  %v2271 = vmul.f32 %v2015, 0.2
  %v2272 = vmul.f32 %v2016, 0.2
  %v2273 = vmul.f32 %v2017, 0.2
  %v2274 = vmul.f32 %v2018, 0.2
  %v2275 = vmul.f32 %v2019, 0.2
  %v2276 = vmul.f32 %v2020, 0.2
  %v2277 = vmul.f32 %v2021, 0.2
  %v2278 = vmul.f32 %v2022, 0.2
  %v2279 = vmul.f32 %v2023, 0.2
  %v2280 = vmul.f32 %v2024, 0.2
  %v2281 = vmul.f32 %v2025, 0.2
  %v2282 = vmul.f32 %v2026, 0.2
  %v2283 = vmul.f32 %v2027, 0.2
  %v2284 = vmul.f32 %v2028, 0.2
  %v2285 = vmul.f32 %v2029, 0.2
  %v2286 = vmul.f32 %v2030, 0.2
  %v2287 = vmul.f32 %v2031, 0.2
  %v2288 = vmul.f32 %v2032, 0.2
  %v2289 = vmul.f32 %v2033, 0.2
  %v2290 = vmul.f32 %v2034, 0.2
  %v2291 = vmul.f32 %v2035, 0.2
  %v2292 = vmul.f32 %v2036, 0.2
  %v2293 = vmul.f32 %v2037, 0.2
  %v2294 = vmul.f32 %v2038, 0.2
  %v2295 = vmul.f32 %v2039, 0.2
  %v2296 = vmul.f32 %v2040, 0.2
  %v2297 = vmul.f32 %v2041, 0.2
  %v2298 = vmul.f32 %v2042, 0.2
  %v2299 = vmul.f32 %v2043, 0.2
  %v2300 = vmul.f32 %v2044, 0.2
  %v2301 = vmul.f32 %v2045, 0.2
  %v2302 = vmul.f32 %v2046, 0.2
  %v2303 = vmul.f32 %v2047, 0.2
  %v2304 = vmul.f32 %v2048, 0.2
  %v2305 = vmul.f32 %v2049, 0.2
  %v2306 = vmul.f32 %v2050, 0.2
  %v2307 = vmul.f32 %v2051, 0.2
  %v2308 = vmul.f32 %v2052, 0.2
  %v2309 = vmul.f32 %v2053, 0.2
  %v2310 = vmul.f32 %v2054, 0.2
  %v2311 = vmul.f32 %v2055, 0.2
  %v2312 = vmul.f32 %v2056, 0.2
  %v2313 = vmul.f32 %v2057, 0.2
  %v2314 = vmul.f32 %v2058, 0.2
  %v2315 = vmul.f32 %v2059, 0.2
  %v2316 = vmul.f32 %v2060, 0.2
  %v2317 = vmul.f32 %v2061, 0.2
  %v2318 = vmul.f32 %v2062, 0.2
  %v2319 = vmul.f32 %v2063, 0.2
  %v2320 = vmul.f32 %v2064, 0.2
  %v2321 = vmul.f32 %v2065, 0.2
  %v2322 = vmul.f32 %v2066, 0.2
  %v2323 = vmul.f32 %v2067, 0.2
  %v2324 = vmul.f32 %v2068, 0.2
  %v2325 = vmul.f32 %v2069, 0.2
  %v2326 = vmul.f32 %v2070, 0.2
  %v2327 = vmul.f32 %v2071, 0.2
  %v2328 = vmul.f32 %v2072, 0.2
  %v2329 = vmul.f32 %v2073, 0.2
  %v2330 = vmul.f32 %v2074, 0.2
  %v2331 = vmul.f32 %v2075, 0.2
  %v2332 = vmul.f32 %v2076, 0.2
  %v2333 = vmul.f32 %v2077, 0.2
  %v2334 = vmul.f32 %v2078, 0.2
  %v2335 = vmul.f32 %v2079, 0.2
  %v2336 = vmul.f32 %v2080, 0.2
  %v2337 = vmul.f32 %v2081, 0.2
  %v2338 = vmul.f32 %v2082, 0.2
  %v2339 = vmul.f32 %v2083, 0.2
  %v2340 = vmul.f32 %v2084, 0.2
  %v2341 = vmul.f32 %v2085, 0.2
  %v2342 = vmul.f32 %v2086, 0.2
  %v2343 = vmul.f32 %v2087, 0.2
  %v2344 = vmul.f32 %v2088, 0.2
  %v2345 = vmul.f32 %v2089, 0.2
  %v2346 = vmul.f32 %v2090, 0.2
  %v2347 = vmul.f32 %v2091, 0.2
  %v2348 = vmul.f32 %v2092, 0.2
  %v2349 = vmul.f32 %v2093, 0.2
  %v2350 = vmul.f32 %v2094, 0.2
  %v2351 = vmul.f32 %v2095, 0.2
  %v2352 = vmul.f32 %v2096, 0.2
  %v2353 = vmul.f32 %v2097, 0.2
  %v2354 = vmul.f32 %v2098, 0.2
  %v2355 = vmul.f32 %v2099, 0.2
  %v2356 = vmul.f32 %v2100, 0.2
  %v2357 = vmul.f32 %v2101, 0.2
  %v2358 = vmul.f32 %v2102, 0.2
  %v2359 = vmul.f32 %v2103, 0.2
  %v2360 = vmul.f32 %v2104, 0.2
  %v2361 = vmul.f32 %v2105, 0.2
  %v2362 = vmul.f32 %v2106, 0.2
  %v2363 = vmul.f32 %v2107, 0.2
  %v2364 = vmul.f32 %v2108, 0.2
  %v2365 = vmul.f32 %v2109, 0.2
  %v2366 = vmul.f32 %v2110, 0.2
  %v2367 = vmul.f32 %v2111, 0.2
  %v2368 = vmul.f32 %v2112, 0.2
  %v2369 = vmul.f32 %v2113, 0.2
  %v2370 = vmul.f32 %v2114, 0.2
  %v2371 = vmul.f32 %v2115, 0.2
  %v2372 = vmul.f32 %v2116, 0.2
  %v2373 = vmul.f32 %v2117, 0.2
  %v2374 = vmul.f32 %v2118, 0.2
  %v2375 = vmul.f32 %v2119, 0.2
  %v2376 = vmul.f32 %v2120, 0.2
  %v2377 = vmul.f32 %v2121, 0.2
  %v2378 = vmul.f32 %v2122, 0.2
  %v2379 = vmul.f32 %v2123, 0.2
  %v2380 = vmul.f32 %v2124, 0.2
  %v2381 = vmul.f32 %v2125, 0.2
  %v2382 = vmul.f32 %v2126, 0.2
  %v2383 = vmul.f32 %v2127, 0.2
  %v2384 = vmul.f32 %v2128, 0.2
  %v2385 = vmul.f32 %v2129, 0.2
  %v2386 = vmul.f32 %v2130, 0.2
  %v2387 = vmul.f32 %v2131, 0.2
  %v2388 = vmul.f32 %v2132, 0.2
  %v2389 = vmul.f32 %v2133, 0.2
  %v2390 = vmul.f32 %v2134, 0.2
  %v2391 = vmul.f32 %v2135, 0.2
  %v2392 = vmul.f32 %v2136, 0.2
  %v2393 = vmul.f32 %v2137, 0.2
  %v2394 = vmul.f32 %v2138, 0.2
  %v2395 = vmul.f32 %v2139, 0.2
  %v2396 = vmul.f32 %v2140, 0.2
  %v2397 = vmul.f32 %v2141, 0.2
  %v2398 = vmul.f32 %v2142, 0.2
  %v2399 = vmul.f32 %v2143, 0.2
  %v2400 = vmul.f32 %v2144, 0.2
  %v2401 = vmul.f32 %v2145, 0.2
  %v2402 = vmul.f32 %v2146, 0.2
  %v2403 = vmul.f32 %v2147, 0.2
  %v2404 = vmul.f32 %v2148, 0.2
  %v2405 = vmul.f32 %v2149, 0.2
  %v2406 = vmul.f32 %v2150, 0.2
  %v2407 = vmul.f32 %v2151, 0.2
  %v2408 = vmul.f32 %v2152, 0.2
  %v2409 = vmul.f32 %v2153, 0.2
  %v2410 = vmul.f32 %v2154, 0.2
  %v2411 = vmul.f32 %v2155, 0.2
  %v2412 = vmul.f32 %v2156, 0.2
  %v2413 = vmul.f32 %v2157, 0.2
  %v2414 = vmul.f32 %v2158, 0.2
  %v2415 = vmul.f32 %v2159, 0.2
  %v2416 = vmul.f32 %v2160, 0.2
  %v2417 = vmul.f32 %v2161, 0.2
  %v2418 = vmul.f32 %v2162, 0.2
  %v2419 = vmul.f32 %v2163, 0.2
  %v2420 = vmul.f32 %v2164, 0.2
  %v2421 = vmul.f32 %v2165, 0.2
  %v2422 = vmul.f32 %v2166, 0.2
  %v2423 = vmul.f32 %v2167, 0.2
  %v2424 = vmul.f32 %v2168, 0.2
  %v2425 = vmul.f32 %v2169, 0.2
  %v2426 = vmul.f32 %v2170, 0.2
  %v2427 = vmul.f32 %v2171, 0.2
  %v2428 = vmul.f32 %v2172, 0.2
  %v2429 = vmul.f32 %v2173, 0.2
  %v2430 = vmul.f32 %v2174, 0.2
  %v2431 = vmul.f32 %v2175, 0.2
  %v2432 = vmul.f32 %v2176, 0.2
  %v2433 = vmul.f32 %v2177, 0.2
  %v2434 = vmul.f32 %v2178, 0.2
  %v2435 = vmul.f32 %v2179, 0.2
  %v2436 = vmul.f32 %v2180, 0.2
  %v2437 = vmul.f32 %v2181, 0.2
  %v2438 = vmul.f32 %v2182, 0.2
  %v2439 = vmul.f32 %v2183, 0.2
  %v2440 = vmul.f32 %v2184, 0.2
  %v2441 = vmul.f32 %v2185, 0.2
  %v2442 = vmul.f32 %v2186, 0.2
  %v2443 = vmul.f32 %v2187, 0.2
  %v2444 = vmul.f32 %v2188, 0.2
  %v2445 = vmul.f32 %v2189, 0.2
  %v2446 = vmul.f32 %v2190, 0.2
  %v2447 = vmul.f32 %v2191, 0.2
  %v2448 = vmul.f32 %v2192, 0.2
  %v2449 = vmul.f32 %v2193, 0.2
  %v2450 = vmul.f32 %v2194, 0.2
  %v2451 = vmul.f32 %v2195, 0.2
  %v2452 = vmul.f32 %v2196, 0.2
  %v2453 = vmul.f32 %v2197, 0.2
  %v2454 = vmul.f32 %v2198, 0.2
  %v2455 = vmul.f32 %v2199, 0.2
  %v2456 = vmul.f32 %v2200, 0.2
  %v2457 = vmul.f32 %v2201, 0.2
  %v2458 = vmul.f32 %v2202, 0.2
  %v2459 = vmul.f32 %v2203, 0.2
  %v2460 = vmul.f32 %v2204, 0.2
  %v2461 = vmul.f32 %v2205, 0.2
  %v2462 = vmul.f32 %v2206, 0.2
  %v2463 = vmul.f32 %v2207, 0.2
  %v2464 = vmul.f32 %v2208, 0.2
  %v2465 = vmul.f32 %v2209, 0.2
  %v2466 = vmul.f32 %v2210, 0.2
  %v2467 = vmul.f32 %v2211, 0.2
  %v2468 = vmul.f32 %v2212, 0.2
  %v2469 = vmul.f32 %v2213, 0.2
  %v2470 = vmax.f32 %v1958, %v2214
  %v2471 = vmax.f32 %v1959, %v2215
  %v2472 = vmax.f32 %v1960, %v2216
  %v2473 = vmax.f32 %v1961, %v2217
  %v2474 = vmax.f32 %v1962, %v2218
  %v2475 = vmax.f32 %v1963, %v2219
  %v2476 = vmax.f32 %v1964, %v2220
  %v2477 = vmax.f32 %v1965, %v2221
  %v2478 = vmax.f32 %v1966, %v2222
  %v2479 = vmax.f32 %v1967, %v2223
  %v2480 = vmax.f32 %v1968, %v2224
  %v2481 = vmax.f32 %v1969, %v2225
  %v2482 = vmax.f32 %v1970, %v2226
  %v2483 = vmax.f32 %v1971, %v2227
  %v2484 = vmax.f32 %v1972, %v2228
  %v2485 = vmax.f32 %v1973, %v2229
  %v2486 = vmax.f32 %v1974, %v2230
  %v2487 = vmax.f32 %v1975, %v2231
  %v2488 = vmax.f32 %v1976, %v2232
  %v2489 = vmax.f32 %v1977, %v2233
  %v2490 = vmax.f32 %v1978, %v2234
  %v2491 = vmax.f32 %v1979, %v2235
  %v2492 = vmax.f32 %v1980, %v2236
  %v2493 = vmax.f32 %v1981, %v2237
  %v2494 = vmax.f32 %v1982, %v2238
  %v2495 = vmax.f32 %v1983, %v2239
  %v2496 = vmax.f32 %v1984, %v2240
  %v2497 = vmax.f32 %v1985, %v2241
  %v2498 = vmax.f32 %v1986, %v2242
  %v2499 = vmax.f32 %v1987, %v2243
  %v2500 = vmax.f32 %v1988, %v2244
  %v2501 = vmax.f32 %v1989, %v2245
  %v2502 = vmax.f32 %v1990, %v2246
  %v2503 = vmax.f32 %v1991, %v2247
  %v2504 = vmax.f32 %v1992, %v2248
  %v2505 = vmax.f32 %v1993, %v2249
  %v2506 = vmax.f32 %v1994, %v2250
  %v2507 = vmax.f32 %v1995, %v2251
  %v2508 = vmax.f32 %v1996, %v2252
  %v2509 = vmax.f32 %v1997, %v2253
  %v2510 = vmax.f32 %v1998, %v2254
  %v2511 = vmax.f32 %v1999, %v2255
  %v2512 = vmax.f32 %v2000, %v2256
  %v2513 = vmax.f32 %v2001, %v2257
  %v2514 = vmax.f32 %v2002, %v2258
  %v2515 = vmax.f32 %v2003, %v2259
  %v2516 = vmax.f32 %v2004, %v2260
  %v2517 = vmax.f32 %v2005, %v2261
  %v2518 = vmax.f32 %v2006, %v2262
  %v2519 = vmax.f32 %v2007, %v2263
  %v2520 = vmax.f32 %v2008, %v2264
  %v2521 = vmax.f32 %v2009, %v2265
  %v2522 = vmax.f32 %v2010, %v2266
  %v2523 = vmax.f32 %v2011, %v2267
  %v2524 = vmax.f32 %v2012, %v2268
  %v2525 = vmax.f32 %v2013, %v2269
  %v2526 = vmax.f32 %v2014, %v2270
  %v2527 = vmax.f32 %v2015, %v2271
  %v2528 = vmax.f32 %v2016, %v2272
  %v2529 = vmax.f32 %v2017, %v2273
  %v2530 = vmax.f32 %v2018, %v2274
  %v2531 = vmax.f32 %v2019, %v2275
  %v2532 = vmax.f32 %v2020, %v2276
  %v2533 = vmax.f32 %v2021, %v2277
  %v2534 = vmax.f32 %v2022, %v2278
  %v2535 = vmax.f32 %v2023, %v2279
  %v2536 = vmax.f32 %v2024, %v2280
  %v2537 = vmax.f32 %v2025, %v2281
  %v2538 = vmax.f32 %v2026, %v2282
  %v2539 = vmax.f32 %v2027, %v2283
  %v2540 = vmax.f32 %v2028, %v2284
  %v2541 = vmax.f32 %v2029, %v2285
  %v2542 = vmax.f32 %v2030, %v2286
  %v2543 = vmax.f32 %v2031, %v2287
  %v2544 = vmax.f32 %v2032, %v2288
  %v2545 = vmax.f32 %v2033, %v2289
  %v2546 = vmax.f32 %v2034, %v2290
  %v2547 = vmax.f32 %v2035, %v2291
  %v2548 = vmax.f32 %v2036, %v2292
  %v2549 = vmax.f32 %v2037, %v2293
  %v2550 = vmax.f32 %v2038, %v2294
  %v2551 = vmax.f32 %v2039, %v2295
  %v2552 = vmax.f32 %v2040, %v2296
  %v2553 = vmax.f32 %v2041, %v2297
  %v2554 = vmax.f32 %v2042, %v2298
  %v2555 = vmax.f32 %v2043, %v2299
  %v2556 = vmax.f32 %v2044, %v2300
  %v2557 = vmax.f32 %v2045, %v2301
  %v2558 = vmax.f32 %v2046, %v2302
  %v2559 = vmax.f32 %v2047, %v2303
  %v2560 = vmax.f32 %v2048, %v2304
  %v2561 = vmax.f32 %v2049, %v2305
  %v2562 = vmax.f32 %v2050, %v2306
  %v2563 = vmax.f32 %v2051, %v2307
  %v2564 = vmax.f32 %v2052, %v2308
  %v2565 = vmax.f32 %v2053, %v2309
  %v2566 = vmax.f32 %v2054, %v2310
  %v2567 = vmax.f32 %v2055, %v2311
  %v2568 = vmax.f32 %v2056, %v2312
  %v2569 = vmax.f32 %v2057, %v2313
  %v2570 = vmax.f32 %v2058, %v2314
  %v2571 = vmax.f32 %v2059, %v2315
  %v2572 = vmax.f32 %v2060, %v2316
  %v2573 = vmax.f32 %v2061, %v2317
  %v2574 = vmax.f32 %v2062, %v2318
  %v2575 = vmax.f32 %v2063, %v2319
  %v2576 = vmax.f32 %v2064, %v2320
  %v2577 = vmax.f32 %v2065, %v2321
  %v2578 = vmax.f32 %v2066, %v2322
  %v2579 = vmax.f32 %v2067, %v2323
  %v2580 = vmax.f32 %v2068, %v2324
  %v2581 = vmax.f32 %v2069, %v2325
  %v2582 = vmax.f32 %v2070, %v2326
  %v2583 = vmax.f32 %v2071, %v2327
  %v2584 = vmax.f32 %v2072, %v2328
  %v2585 = vmax.f32 %v2073, %v2329
  %v2586 = vmax.f32 %v2074, %v2330
  %v2587 = vmax.f32 %v2075, %v2331
  %v2588 = vmax.f32 %v2076, %v2332
  %v2589 = vmax.f32 %v2077, %v2333
  %v2590 = vmax.f32 %v2078, %v2334
  %v2591 = vmax.f32 %v2079, %v2335
  %v2592 = vmax.f32 %v2080, %v2336
  %v2593 = vmax.f32 %v2081, %v2337
  %v2594 = vmax.f32 %v2082, %v2338
  %v2595 = vmax.f32 %v2083, %v2339
  %v2596 = vmax.f32 %v2084, %v2340
  %v2597 = vmax.f32 %v2085, %v2341
  %v2598 = vmax.f32 %v2086, %v2342
  %v2599 = vmax.f32 %v2087, %v2343
  %v2600 = vmax.f32 %v2088, %v2344
  %v2601 = vmax.f32 %v2089, %v2345
  %v2602 = vmax.f32 %v2090, %v2346
  %v2603 = vmax.f32 %v2091, %v2347
  %v2604 = vmax.f32 %v2092, %v2348
  %v2605 = vmax.f32 %v2093, %v2349
  %v2606 = vmax.f32 %v2094, %v2350
  %v2607 = vmax.f32 %v2095, %v2351
  %v2608 = vmax.f32 %v2096, %v2352
  %v2609 = vmax.f32 %v2097, %v2353
  %v2610 = vmax.f32 %v2098, %v2354
  %v2611 = vmax.f32 %v2099, %v2355
  %v2612 = vmax.f32 %v2100, %v2356
  %v2613 = vmax.f32 %v2101, %v2357
  %v2614 = vmax.f32 %v2102, %v2358
  %v2615 = vmax.f32 %v2103, %v2359
  %v2616 = vmax.f32 %v2104, %v2360
  %v2617 = vmax.f32 %v2105, %v2361
  %v2618 = vmax.f32 %v2106, %v2362
  %v2619 = vmax.f32 %v2107, %v2363
  %v2620 = vmax.f32 %v2108, %v2364
  %v2621 = vmax.f32 %v2109, %v2365
  %v2622 = vmax.f32 %v2110, %v2366
  %v2623 = vmax.f32 %v2111, %v2367
  %v2624 = vmax.f32 %v2112, %v2368
  %v2625 = vmax.f32 %v2113, %v2369
  %v2626 = vmax.f32 %v2114, %v2370
  %v2627 = vmax.f32 %v2115, %v2371
  %v2628 = vmax.f32 %v2116, %v2372
  %v2629 = vmax.f32 %v2117, %v2373
  %v2630 = vmax.f32 %v2118, %v2374
  %v2631 = vmax.f32 %v2119, %v2375
  %v2632 = vmax.f32 %v2120, %v2376
  %v2633 = vmax.f32 %v2121, %v2377
  %v2634 = vmax.f32 %v2122, %v2378
  %v2635 = vmax.f32 %v2123, %v2379
  %v2636 = vmax.f32 %v2124, %v2380
  %v2637 = vmax.f32 %v2125, %v2381
  %v2638 = vmax.f32 %v2126, %v2382
  %v2639 = vmax.f32 %v2127, %v2383
  %v2640 = vmax.f32 %v2128, %v2384
  %v2641 = vmax.f32 %v2129, %v2385
  %v2642 = vmax.f32 %v2130, %v2386
  %v2643 = vmax.f32 %v2131, %v2387
  %v2644 = vmax.f32 %v2132, %v2388
  %v2645 = vmax.f32 %v2133, %v2389
  %v2646 = vmax.f32 %v2134, %v2390
  %v2647 = vmax.f32 %v2135, %v2391
  %v2648 = vmax.f32 %v2136, %v2392
  %v2649 = vmax.f32 %v2137, %v2393
  %v2650 = vmax.f32 %v2138, %v2394
  %v2651 = vmax.f32 %v2139, %v2395
  %v2652 = vmax.f32 %v2140, %v2396
  %v2653 = vmax.f32 %v2141, %v2397
  %v2654 = vmax.f32 %v2142, %v2398
  %v2655 = vmax.f32 %v2143, %v2399
  %v2656 = vmax.f32 %v2144, %v2400
  %v2657 = vmax.f32 %v2145, %v2401
  %v2658 = vmax.f32 %v2146, %v2402
  %v2659 = vmax.f32 %v2147, %v2403
  %v2660 = vmax.f32 %v2148, %v2404
  %v2661 = vmax.f32 %v2149, %v2405
  %v2662 = vmax.f32 %v2150, %v2406
  %v2663 = vmax.f32 %v2151, %v2407
  %v2664 = vmax.f32 %v2152, %v2408
  %v2665 = vmax.f32 %v2153, %v2409
  %v2666 = vmax.f32 %v2154, %v2410
  %v2667 = vmax.f32 %v2155, %v2411
  %v2668 = vmax.f32 %v2156, %v2412
  %v2669 = vmax.f32 %v2157, %v2413
  %v2670 = vmax.f32 %v2158, %v2414
  %v2671 = vmax.f32 %v2159, %v2415
  %v2672 = vmax.f32 %v2160, %v2416
  %v2673 = vmax.f32 %v2161, %v2417
  %v2674 = vmax.f32 %v2162, %v2418
  %v2675 = vmax.f32 %v2163, %v2419
  %v2676 = vmax.f32 %v2164, %v2420
  %v2677 = vmax.f32 %v2165, %v2421
  %v2678 = vmax.f32 %v2166, %v2422
  %v2679 = vmax.f32 %v2167, %v2423
  %v2680 = vmax.f32 %v2168, %v2424
  %v2681 = vmax.f32 %v2169, %v2425
  %v2682 = vmax.f32 %v2170, %v2426
  %v2683 = vmax.f32 %v2171, %v2427
  %v2684 = vmax.f32 %v2172, %v2428
  %v2685 = vmax.f32 %v2173, %v2429
  %v2686 = vmax.f32 %v2174, %v2430
  %v2687 = vmax.f32 %v2175, %v2431
  %v2688 = vmax.f32 %v2176, %v2432
  %v2689 = vmax.f32 %v2177, %v2433
  %v2690 = vmax.f32 %v2178, %v2434
  %v2691 = vmax.f32 %v2179, %v2435
  %v2692 = vmax.f32 %v2180, %v2436
  %v2693 = vmax.f32 %v2181, %v2437
  %v2694 = vmax.f32 %v2182, %v2438
  %v2695 = vmax.f32 %v2183, %v2439
  %v2696 = vmax.f32 %v2184, %v2440
  %v2697 = vmax.f32 %v2185, %v2441
  %v2698 = vmax.f32 %v2186, %v2442
  %v2699 = vmax.f32 %v2187, %v2443
  %v2700 = vmax.f32 %v2188, %v2444
  %v2701 = vmax.f32 %v2189, %v2445
  %v2702 = vmax.f32 %v2190, %v2446
  %v2703 = vmax.f32 %v2191, %v2447
  %v2704 = vmax.f32 %v2192, %v2448
  %v2705 = vmax.f32 %v2193, %v2449
  %v2706 = vmax.f32 %v2194, %v2450
  %v2707 = vmax.f32 %v2195, %v2451
  %v2708 = vmax.f32 %v2196, %v2452
  %v2709 = vmax.f32 %v2197, %v2453
  %v2710 = vmax.f32 %v2198, %v2454
  %v2711 = vmax.f32 %v2199, %v2455
  %v2712 = vmax.f32 %v2200, %v2456
  %v2713 = vmax.f32 %v2201, %v2457
  %v2714 = vmax.f32 %v2202, %v2458
  %v2715 = vmax.f32 %v2203, %v2459
  %v2716 = vmax.f32 %v2204, %v2460
  %v2717 = vmax.f32 %v2205, %v2461
  %v2718 = vmax.f32 %v2206, %v2462
  %v2719 = vmax.f32 %v2207, %v2463
  %v2720 = vmax.f32 %v2208, %v2464
  %v2721 = vmax.f32 %v2209, %v2465
  %v2722 = vmax.f32 %v2210, %v2466
  %v2723 = vmax.f32 %v2211, %v2467
  %v2724 = vmax.f32 %v2212, %v2468
  %v2725 = vmax.f32 %v2213, %v2469
  %v2726 = vmax.f32 %v2470, %v2471
  %v2727 = vmax.f32 %v2534, %v2535
  %v2728 = vmax.f32 %v2598, %v2599
  %v2729 = vmax.f32 %v2662, %v2663
  %v2730 = vmax.f32 %v2472, %v2473
  %v2731 = vmax.f32 %v2536, %v2537
  %v2732 = vmax.f32 %v2600, %v2601
  %v2733 = vmax.f32 %v2664, %v2665
  %v2734 = vmax.f32 %v2474, %v2475
  %v2735 = vmax.f32 %v2538, %v2539
  %v2736 = vmax.f32 %v2602, %v2603
  %v2737 = vmax.f32 %v2666, %v2667
  %v2738 = vmax.f32 %v2476, %v2477
  %v2739 = vmax.f32 %v2540, %v2541
  %v2740 = vmax.f32 %v2604, %v2605
  %v2741 = vmax.f32 %v2668, %v2669
  %v2742 = vmax.f32 %v2478, %v2479
  %v2743 = vmax.f32 %v2542, %v2543
  %v2744 = vmax.f32 %v2606, %v2607
  %v2745 = vmax.f32 %v2670, %v2671
  %v2746 = vmax.f32 %v2480, %v2481
  %v2747 = vmax.f32 %v2544, %v2545
  %v2748 = vmax.f32 %v2608, %v2609
  %v2749 = vmax.f32 %v2672, %v2673
  %v2750 = vmax.f32 %v2482, %v2483
  %v2751 = vmax.f32 %v2546, %v2547
  %v2752 = vmax.f32 %v2610, %v2611
  %v2753 = vmax.f32 %v2674, %v2675
  %v2754 = vmax.f32 %v2484, %v2485
  %v2755 = vmax.f32 %v2548, %v2549
  %v2756 = vmax.f32 %v2612, %v2613
  %v2757 = vmax.f32 %v2676, %v2677
  %v2758 = vmax.f32 %v2486, %v2487
  %v2759 = vmax.f32 %v2550, %v2551
  %v2760 = vmax.f32 %v2614, %v2615
  %v2761 = vmax.f32 %v2678, %v2679
  %v2762 = vmax.f32 %v2488, %v2489
  %v2763 = vmax.f32 %v2552, %v2553
  %v2764 = vmax.f32 %v2616, %v2617
  %v2765 = vmax.f32 %v2680, %v2681
  %v2766 = vmax.f32 %v2490, %v2491
  %v2767 = vmax.f32 %v2554, %v2555
  %v2768 = vmax.f32 %v2618, %v2619
  %v2769 = vmax.f32 %v2682, %v2683
  %v2770 = vmax.f32 %v2492, %v2493
  %v2771 = vmax.f32 %v2556, %v2557
  %v2772 = vmax.f32 %v2620, %v2621
  %v2773 = vmax.f32 %v2684, %v2685
  %v2774 = vmax.f32 %v2494, %v2495
  %v2775 = vmax.f32 %v2558, %v2559
  %v2776 = vmax.f32 %v2622, %v2623
  %v2777 = vmax.f32 %v2686, %v2687
  %v2778 = vmax.f32 %v2496, %v2497
  %v2779 = vmax.f32 %v2560, %v2561
  %v2780 = vmax.f32 %v2624, %v2625
  %v2781 = vmax.f32 %v2688, %v2689
  %v2782 = vmax.f32 %v2498, %v2499
  %v2783 = vmax.f32 %v2562, %v2563
  %v2784 = vmax.f32 %v2626, %v2627
  %v2785 = vmax.f32 %v2690, %v2691
  %v2786 = vmax.f32 %v2500, %v2501
  %v2787 = vmax.f32 %v2564, %v2565
  %v2788 = vmax.f32 %v2628, %v2629
  %v2789 = vmax.f32 %v2692, %v2693
  %v2790 = vmax.f32 %v2502, %v2503
  %v2791 = vmax.f32 %v2566, %v2567
  %v2792 = vmax.f32 %v2630, %v2631
  %v2793 = vmax.f32 %v2694, %v2695
  %v2794 = vmax.f32 %v2504, %v2505
  %v2795 = vmax.f32 %v2568, %v2569
  %v2796 = vmax.f32 %v2632, %v2633
  %v2797 = vmax.f32 %v2696, %v2697
  %v2798 = vmax.f32 %v2506, %v2507
  %v2799 = vmax.f32 %v2570, %v2571
  %v2800 = vmax.f32 %v2634, %v2635
  %v2801 = vmax.f32 %v2698, %v2699
  %v2802 = vmax.f32 %v2508, %v2509
  %v2803 = vmax.f32 %v2572, %v2573
  %v2804 = vmax.f32 %v2636, %v2637
  %v2805 = vmax.f32 %v2700, %v2701
  %v2806 = vmax.f32 %v2510, %v2511
  %v2807 = vmax.f32 %v2574, %v2575
  %v2808 = vmax.f32 %v2638, %v2639
  %v2809 = vmax.f32 %v2702, %v2703
  %v2810 = vmax.f32 %v2512, %v2513
  %v2811 = vmax.f32 %v2576, %v2577
  %v2812 = vmax.f32 %v2640, %v2641
  %v2813 = vmax.f32 %v2704, %v2705
  %v2814 = vmax.f32 %v2514, %v2515
  %v2815 = vmax.f32 %v2578, %v2579
  %v2816 = vmax.f32 %v2642, %v2643
  %v2817 = vmax.f32 %v2706, %v2707
  %v2818 = vmax.f32 %v2516, %v2517
  %v2819 = vmax.f32 %v2580, %v2581
  %v2820 = vmax.f32 %v2644, %v2645
  %v2821 = vmax.f32 %v2708, %v2709
  %v2822 = vmax.f32 %v2518, %v2519
  %v2823 = vmax.f32 %v2582, %v2583
  %v2824 = vmax.f32 %v2646, %v2647
  %v2825 = vmax.f32 %v2710, %v2711
  %v2826 = vmax.f32 %v2520, %v2521
  %v2827 = vmax.f32 %v2584, %v2585
  %v2828 = vmax.f32 %v2648, %v2649
  %v2829 = vmax.f32 %v2712, %v2713
  %v2830 = vmax.f32 %v2522, %v2523
  %v2831 = vmax.f32 %v2586, %v2587
  %v2832 = vmax.f32 %v2650, %v2651
  %v2833 = vmax.f32 %v2714, %v2715
  %v2834 = vmax.f32 %v2524, %v2525
  %v2835 = vmax.f32 %v2588, %v2589
  %v2836 = vmax.f32 %v2652, %v2653
  %v2837 = vmax.f32 %v2716, %v2717
  %v2838 = vmax.f32 %v2526, %v2527
  %v2839 = vmax.f32 %v2590, %v2591
  %v2840 = vmax.f32 %v2654, %v2655
  %v2841 = vmax.f32 %v2718, %v2719
  %v2842 = vmax.f32 %v2528, %v2529
  %v2843 = vmax.f32 %v2592, %v2593
  %v2844 = vmax.f32 %v2656, %v2657
  %v2845 = vmax.f32 %v2720, %v2721
  %v2846 = vmax.f32 %v2530, %v2531
  %v2847 = vmax.f32 %v2594, %v2595
  %v2848 = vmax.f32 %v2658, %v2659
  %v2849 = vmax.f32 %v2722, %v2723
  %v2850 = vmax.f32 %v2532, %v2533
  %v2851 = vmax.f32 %v2596, %v2597
  %v2852 = vmax.f32 %v2660, %v2661
  %v2853 = vmax.f32 %v2724, %v2725
  %v2854 = vld [vmem:[%s0 + $0x20] sm:$0xff]
  %v2855 = vld [vmem:[%s0 + $0x28] sm:$0xf]
  %2857 = vset.pattern.permute.xlu0 96
  %2858 = vperm.xlu0 %2857, %v2854
  %v2859 = vpop.permute.xlu0 %2858
  %2862 = vset.pattern.permute.xlu0 96
  %2863 = vperm.xlu0 %2862, %v2855
  %v2864 = vpop.permute.xlu0 %2863
  %vm2866 = vcmask 785408
  %v2867 = vsel %vm2866, %v2854, 0
  %v2869 = vsel %vm2866, %v2855, 0
  %2871 = vmatprep.subr.mxu0 %v2726
  %2872 = vmatpush1.msra.mxu0 0.0
  %2873 = vmatprep.subr.mxu0 %v2727
  %2874 = vmatpush1.msra.mxu0 0.0
  %2875 = vmatprep.subr.mxu0 %v2728
  %2876 = vmatpush1.msra.mxu0 0.0
  %2877 = vmatprep.subr.mxu0 %v2729
  %2878 = vmatpush1.msra.mxu0 0.0
  %2879 = vmatprep.subr.mxu0 %v2730
  %2880 = vmatpush1.msra.mxu0 %v2726
  %2881 = vmatprep.subr.mxu0 %v2731
  %2882 = vmatpush1.msra.mxu0 %v2727
  %2883 = vmatprep.subr.mxu0 %v2732
  %2884 = vmatpush1.msra.mxu0 %v2728
  %2885 = vmatprep.subr.mxu0 %v2733
  %2886 = vmatpush1.msra.mxu0 %v2729
  %2887 = vmatprep.subr.mxu0 %v2734
  %2888 = vmatpush1.msra.mxu0 %v2730
  %2889 = vmatprep.subr.mxu0 %v2735
  %2890 = vmatpush1.msra.mxu0 %v2731
  %2891 = vmatprep.subr.mxu0 %v2736
  %2892 = vmatpush1.msra.mxu0 %v2732
  %2893 = vmatprep.subr.mxu0 %v2737
  %2894 = vmatpush1.msra.mxu0 %v2733
  %2895 = vmatprep.subr.mxu0 0.0
  %2896 = vmatpush1.msra.mxu0 0.0
  %2897 = vmatprep.subr.mxu0 0.0
  %2898 = vmatpush1.msra.mxu0 0.0
  %2899 = vmatprep.subr.mxu0 0.0
  %2900 = vmatpush1.msra.mxu0 0.0
  %2901 = vmatprep.subr.mxu0 0.0
  %2902 = vmatpush1.msra.mxu0 0.0
  %2903 = vmatprep.subr.mxu0 0.0
  %2904 = vmatpush1.msra.mxu0 0.0
  %2905 = vmatprep.subr.mxu0 0.0
  %2906 = vmatpush1.msra.mxu0 0.0
  %2907 = vmatprep.subr.mxu0 0.0
  %2908 = vmatpush1.msra.mxu0 0.0
  %2909 = vmatprep.subr.mxu0 0.0
  %2910 = vmatpush1.msra.mxu0 0.0
  %2911 = vmatprep.subr.mxu0 0.0
  %2912 = vmatpush1.msra.mxu0 0.0
  %2913 = vmatprep.subr.mxu0 0.0
  %2914 = vmatpush1.msra.mxu0 0.0
  %2915 = vmatprep.subr.mxu0 0.0
  %2916 = vmatpush1.msra.mxu0 0.0
  %2917 = vmatprep.subr.mxu0 0.0
  %2918 = vmatpush1.msra.mxu0 0.0
  %2919 = vmatprep.subr.mxu0 0.0
  %2920 = vmatpush1.msra.mxu0 0.0
  %2921 = vmatprep.subr.mxu0 0.0
  %2922 = vmatpush1.msra.mxu0 0.0
  %2923 = vmatprep.subr.mxu0 0.0
  %2924 = vmatpush1.msra.mxu0 0.0
  %2925 = vmatprep.subr.mxu0 0.0
  %2926 = vmatpush1.msra.mxu0 0.0
  %2927 = vmatprep.subr.mxu0 0.0
  %2928 = vmatpush1.msra.mxu0 0.0
  %2929 = vmatprep.subr.mxu0 0.0
  %2930 = vmatpush1.msra.mxu0 0.0
  %2931 = vmatprep.subr.mxu0 0.0
  %2932 = vmatpush1.msra.mxu0 0.0
  %2933 = vmatprep.subr.mxu0 0.0
  %2934 = vmatpush1.msra.mxu0 0.0
  %2935 = vmatprep.mubr.f32.mxu0 0.0
  %2936 = vmatmul.mubr.f32.gmra.mrb[0].mxu0 %v2867
  %v2937 = vpop.f32.mrb[0].mxu0
  %v2938 = vadd.f32 %v2859, %v2937
  %v2939 = vpop.f32.mrb[0].mxu0
  %v2940 = vadd.f32 %v2859, %v2939
  %2941 = vmatprep.mubr.f32.mxu0 0.0
  %2942 = vmatmul.mubr.f32.gmra.mrb[0].mxu0 %v2869
  %v2943 = vpop.f32.mrb[0].mxu0
  %v2944 = vadd.f32 %v2864, %v2943
  %v2945 = vpop.f32.mrb[0].mxu0
  %v2946 = vadd.f32 %v2864, %v2945
  %2947 = vdwg.mxu0
  %2948 = vmatprep.subr.mxu0 %v2734
  %2949 = vmatpush1.msra.mxu0 %v2730
  %2950 = vmatprep.subr.mxu0 %v2735
  %2951 = vmatpush1.msra.mxu0 %v2731
  %2952 = vmatprep.subr.mxu0 %v2736
  %2953 = vmatpush1.msra.mxu0 %v2732
  %2954 = vmatprep.subr.mxu0 %v2737
  %2955 = vmatpush1.msra.mxu0 %v2733
  %2956 = vmatprep.subr.mxu0 %v2738
  %2957 = vmatpush1.msra.mxu0 %v2734
  %2958 = vmatprep.subr.mxu0 %v2739
  %2959 = vmatpush1.msra.mxu0 %v2735
  %2960 = vmatprep.subr.mxu0 %v2740
  %2961 = vmatpush1.msra.mxu0 %v2736
  %2962 = vmatprep.subr.mxu0 %v2741
  %2963 = vmatpush1.msra.mxu0 %v2737
  %2964 = vmatprep.subr.mxu0 %v2742
  %2965 = vmatpush1.msra.mxu0 %v2738
  %2966 = vmatprep.subr.mxu0 %v2743
  %2967 = vmatpush1.msra.mxu0 %v2739
  %2968 = vmatprep.subr.mxu0 %v2744
  %2969 = vmatpush1.msra.mxu0 %v2740
  %2970 = vmatprep.subr.mxu0 %v2745
  %2971 = vmatpush1.msra.mxu0 %v2741
  %2972 = vmatprep.subr.mxu0 0.0
  %2973 = vmatpush1.msra.mxu0 0.0
  %2974 = vmatprep.subr.mxu0 0.0
  %2975 = vmatpush1.msra.mxu0 0.0
  %2976 = vmatprep.subr.mxu0 0.0
  %2977 = vmatpush1.msra.mxu0 0.0
  %2978 = vmatprep.subr.mxu0 0.0
  %2979 = vmatpush1.msra.mxu0 0.0
  %2980 = vmatprep.subr.mxu0 0.0
  %2981 = vmatpush1.msra.mxu0 0.0
  %2982 = vmatprep.subr.mxu0 0.0
  %2983 = vmatpush1.msra.mxu0 0.0
  %2984 = vmatprep.subr.mxu0 0.0
  %2985 = vmatpush1.msra.mxu0 0.0
  %2986 = vmatprep.subr.mxu0 0.0
  %2987 = vmatpush1.msra.mxu0 0.0
  %2988 = vmatprep.subr.mxu0 0.0
  %2989 = vmatpush1.msra.mxu0 0.0
  %2990 = vmatprep.subr.mxu0 0.0
  %2991 = vmatpush1.msra.mxu0 0.0
  %2992 = vmatprep.subr.mxu0 0.0
  %2993 = vmatpush1.msra.mxu0 0.0
  %2994 = vmatprep.subr.mxu0 0.0
  %2995 = vmatpush1.msra.mxu0 0.0
  %2996 = vmatprep.subr.mxu0 0.0
  %2997 = vmatpush1.msra.mxu0 0.0
  %2998 = vmatprep.subr.mxu0 0.0
  %2999 = vmatpush1.msra.mxu0 0.0
  %3000 = vmatprep.subr.mxu0 0.0
  %3001 = vmatpush1.msra.mxu0 0.0
  %3002 = vmatprep.subr.mxu0 0.0
  %3003 = vmatpush1.msra.mxu0 0.0
  %3004 = vmatprep.subr.mxu0 0.0
  %3005 = vmatpush1.msra.mxu0 0.0
  %3006 = vmatprep.subr.mxu0 0.0
  %3007 = vmatpush1.msra.mxu0 0.0
  %3008 = vmatprep.subr.mxu0 0.0
  %3009 = vmatpush1.msra.mxu0 0.0
  %3010 = vmatprep.subr.mxu0 0.0
  %3011 = vmatpush1.msra.mxu0 0.0
  %3012 = vmatprep.mubr.f32.mxu0 0.0
  %3013 = vmatmul.mubr.f32.gmra.mrb[0].mxu0 %v2867
  %v3014 = vpop.f32.mrb[0].mxu0
  %v3015 = vadd.f32 %v2859, %v3014
  %v3016 = vpop.f32.mrb[0].mxu0
  %v3017 = vadd.f32 %v2859, %v3016
  %3018 = vmatprep.mubr.f32.mxu0 0.0
  %3019 = vmatmul.mubr.f32.gmra.mrb[0].mxu0 %v2869
  %v3020 = vpop.f32.mrb[0].mxu0
  %v3021 = vadd.f32 %v2864, %v3020
  %v3022 = vpop.f32.mrb[0].mxu0
  %v3023 = vadd.f32 %v2864, %v3022
  %3024 = vdwg.mxu0
  %3025 = vmatprep.subr.mxu0 %v2742
  %3026 = vmatpush1.msra.mxu0 %v2738
  %3027 = vmatprep.subr.mxu0 %v2743
  %3028 = vmatpush1.msra.mxu0 %v2739
  %3029 = vmatprep.subr.mxu0 %v2744
  %3030 = vmatpush1.msra.mxu0 %v2740
  %3031 = vmatprep.subr.mxu0 %v2745
  %3032 = vmatpush1.msra.mxu0 %v2741
  %3033 = vmatprep.subr.mxu0 %v2746
  %3034 = vmatpush1.msra.mxu0 %v2742
  %3035 = vmatprep.subr.mxu0 %v2747
  %3036 = vmatpush1.msra.mxu0 %v2743
  %3037 = vmatprep.subr.mxu0 %v2748
  %3038 = vmatpush1.msra.mxu0 %v2744
  %3039 = vmatprep.subr.mxu0 %v2749
  %3040 = vmatpush1.msra.mxu0 %v2745
  %3041 = vmatprep.subr.mxu0 %v2750
  %3042 = vmatpush1.msra.mxu0 %v2746
  %3043 = vmatprep.subr.mxu0 %v2751
  %3044 = vmatpush1.msra.mxu0 %v2747
  %3045 = vmatprep.subr.mxu0 %v2752
  %3046 = vmatpush1.msra.mxu0 %v2748
  %3047 = vmatprep.subr.mxu0 %v2753
  %3048 = vmatpush1.msra.mxu0 %v2749
  %3049 = vmatprep.subr.mxu0 0.0
  %3050 = vmatpush1.msra.mxu0 0.0
  %3051 = vmatprep.subr.mxu0 0.0
  %3052 = vmatpush1.msra.mxu0 0.0
  %3053 = vmatprep.subr.mxu0 0.0
  %3054 = vmatpush1.msra.mxu0 0.0
  %3055 = vmatprep.subr.mxu0 0.0
  %3056 = vmatpush1.msra.mxu0 0.0
  %3057 = vmatprep.subr.mxu0 0.0
  %3058 = vmatpush1.msra.mxu0 0.0
  %3059 = vmatprep.subr.mxu0 0.0
  %3060 = vmatpush1.msra.mxu0 0.0
  %3061 = vmatprep.subr.mxu0 0.0
  %3062 = vmatpush1.msra.mxu0 0.0
  %3063 = vmatprep.subr.mxu0 0.0
  %3064 = vmatpush1.msra.mxu0 0.0
  %3065 = vmatprep.subr.mxu0 0.0
  %3066 = vmatpush1.msra.mxu0 0.0
  %3067 = vmatprep.subr.mxu0 0.0
  %3068 = vmatpush1.msra.mxu0 0.0
  %3069 = vmatprep.subr.mxu0 0.0
  %3070 = vmatpush1.msra.mxu0 0.0
  %3071 = vmatprep.subr.mxu0 0.0
  %3072 = vmatpush1.msra.mxu0 0.0
  %3073 = vmatprep.subr.mxu0 0.0
  %3074 = vmatpush1.msra.mxu0 0.0
  %3075 = vmatprep.subr.mxu0 0.0
  %3076 = vmatpush1.msra.mxu0 0.0
  %3077 = vmatprep.subr.mxu0 0.0
  %3078 = vmatpush1.msra.mxu0 0.0
  %3079 = vmatprep.subr.mxu0 0.0
  %3080 = vmatpush1.msra.mxu0 0.0
  %3081 = vmatprep.subr.mxu0 0.0
  %3082 = vmatpush1.msra.mxu0 0.0
  %3083 = vmatprep.subr.mxu0 0.0
  %3084 = vmatpush1.msra.mxu0 0.0
  %3085 = vmatprep.subr.mxu0 0.0
  %3086 = vmatpush1.msra.mxu0 0.0
  %3087 = vmatprep.subr.mxu0 0.0
  %3088 = vmatpush1.msra.mxu0 0.0
  %3089 = vmatprep.mubr.f32.mxu0 0.0
  %3090 = vmatmul.mubr.f32.gmra.mrb[0].mxu0 %v2867
  %v3091 = vpop.f32.mrb[0].mxu0
  %v3092 = vadd.f32 %v2859, %v3091
  %v3093 = vpop.f32.mrb[0].mxu0
  %v3094 = vadd.f32 %v2859, %v3093
  %3095 = vmatprep.mubr.f32.mxu0 0.0
  %3096 = vmatmul.mubr.f32.gmra.mrb[0].mxu0 %v2869
  %v3097 = vpop.f32.mrb[0].mxu0
  %v3098 = vadd.f32 %v2864, %v3097
  %v3099 = vpop.f32.mrb[0].mxu0
  %v3100 = vadd.f32 %v2864, %v3099
  %3101 = vdwg.mxu0
  %3102 = vmatprep.subr.mxu0 %v2750
  %3103 = vmatpush1.msra.mxu0 %v2746
  %3104 = vmatprep.subr.mxu0 %v2751
  %3105 = vmatpush1.msra.mxu0 %v2747
  %3106 = vmatprep.subr.mxu0 %v2752
  %3107 = vmatpush1.msra.mxu0 %v2748
  %3108 = vmatprep.subr.mxu0 %v2753
  %3109 = vmatpush1.msra.mxu0 %v2749
  %3110 = vmatprep.subr.mxu0 %v2754
  %3111 = vmatpush1.msra.mxu0 %v2750
  %3112 = vmatprep.subr.mxu0 %v2755
  %3113 = vmatpush1.msra.mxu0 %v2751
  %3114 = vmatprep.subr.mxu0 %v2756
  %3115 = vmatpush1.msra.mxu0 %v2752
  %3116 = vmatprep.subr.mxu0 %v2757
  %3117 = vmatpush1.msra.mxu0 %v2753
  %3118 = vmatprep.subr.mxu0 %v2758
  %3119 = vmatpush1.msra.mxu0 %v2754
  %3120 = vmatprep.subr.mxu0 %v2759
  %3121 = vmatpush1.msra.mxu0 %v2755
  %3122 = vmatprep.subr.mxu0 %v2760
  %3123 = vmatpush1.msra.mxu0 %v2756
  %3124 = vmatprep.subr.mxu0 %v2761
  %3125 = vmatpush1.msra.mxu0 %v2757
  %3126 = vmatprep.subr.mxu0 0.0
  %3127 = vmatpush1.msra.mxu0 0.0
  %3128 = vmatprep.subr.mxu0 0.0
  %3129 = vmatpush1.msra.mxu0 0.0
  %3130 = vmatprep.subr.mxu0 0.0
  %3131 = vmatpush1.msra.mxu0 0.0
  %3132 = vmatprep.subr.mxu0 0.0
  %3133 = vmatpush1.msra.mxu0 0.0
  %3134 = vmatprep.subr.mxu0 0.0
  %3135 = vmatpush1.msra.mxu0 0.0
  %3136 = vmatprep.subr.mxu0 0.0
  %3137 = vmatpush1.msra.mxu0 0.0
  %3138 = vmatprep.subr.mxu0 0.0
  %3139 = vmatpush1.msra.mxu0 0.0
  %3140 = vmatprep.subr.mxu0 0.0
  %3141 = vmatpush1.msra.mxu0 0.0
  %3142 = vmatprep.subr.mxu0 0.0
  %3143 = vmatpush1.msra.mxu0 0.0
  %3144 = vmatprep.subr.mxu0 0.0
  %3145 = vmatpush1.msra.mxu0 0.0
  %3146 = vmatprep.subr.mxu0 0.0
  %3147 = vmatpush1.msra.mxu0 0.0
  %3148 = vmatprep.subr.mxu0 0.0
  %3149 = vmatpush1.msra.mxu0 0.0
  %3150 = vmatprep.subr.mxu0 0.0
  %3151 = vmatpush1.msra.mxu0 0.0
  %3152 = vmatprep.subr.mxu0 0.0
  %3153 = vmatpush1.msra.mxu0 0.0
  %3154 = vmatprep.subr.mxu0 0.0
  %3155 = vmatpush1.msra.mxu0 0.0
  %3156 = vmatprep.subr.mxu0 0.0
  %3157 = vmatpush1.msra.mxu0 0.0
  %3158 = vmatprep.subr.mxu0 0.0
  %3159 = vmatpush1.msra.mxu0 0.0
  %3160 = vmatprep.subr.mxu0 0.0
  %3161 = vmatpush1.msra.mxu0 0.0
  %3162 = vmatprep.subr.mxu0 0.0
  %3163 = vmatpush1.msra.mxu0 0.0
  %3164 = vmatprep.subr.mxu0 0.0
  %3165 = vmatpush1.msra.mxu0 0.0
  %3166 = vmatprep.mubr.f32.mxu0 0.0
  %3167 = vmatmul.mubr.f32.gmra.mrb[0].mxu0 %v2867
  %v3168 = vpop.f32.mrb[0].mxu0
  %v3169 = vadd.f32 %v2859, %v3168
  %v3170 = vpop.f32.mrb[0].mxu0
  %v3171 = vadd.f32 %v2859, %v3170
  %3172 = vmatprep.mubr.f32.mxu0 0.0
  %3173 = vmatmul.mubr.f32.gmra.mrb[0].mxu0 %v2869
  %v3174 = vpop.f32.mrb[0].mxu0
  %v3175 = vadd.f32 %v2864, %v3174
  %v3176 = vpop.f32.mrb[0].mxu0
  %v3177 = vadd.f32 %v2864, %v3176
  %3178 = vdwg.mxu0
  %3179 = vmatprep.subr.mxu0 %v2758
  %3180 = vmatpush1.msra.mxu0 %v2754
  %3181 = vmatprep.subr.mxu0 %v2759
  %3182 = vmatpush1.msra.mxu0 %v2755
  %3183 = vmatprep.subr.mxu0 %v2760
  %3184 = vmatpush1.msra.mxu0 %v2756
  %3185 = vmatprep.subr.mxu0 %v2761
  %3186 = vmatpush1.msra.mxu0 %v2757
  %3187 = vmatprep.subr.mxu0 %v2762
  %3188 = vmatpush1.msra.mxu0 %v2758
  %3189 = vmatprep.subr.mxu0 %v2763
  %3190 = vmatpush1.msra.mxu0 %v2759
  %3191 = vmatprep.subr.mxu0 %v2764
  %3192 = vmatpush1.msra.mxu0 %v2760
  %3193 = vmatprep.subr.mxu0 %v2765
  %3194 = vmatpush1.msra.mxu0 %v2761
  %3195 = vmatprep.subr.mxu0 %v2766
  %3196 = vmatpush1.msra.mxu0 %v2762
  %3197 = vmatprep.subr.mxu0 %v2767
  %3198 = vmatpush1.msra.mxu0 %v2763
  %3199 = vmatprep.subr.mxu0 %v2768
  %3200 = vmatpush1.msra.mxu0 %v2764
  %3201 = vmatprep.subr.mxu0 %v2769
  %3202 = vmatpush1.msra.mxu0 %v2765
  %3203 = vmatprep.subr.mxu0 0.0
  %3204 = vmatpush1.msra.mxu0 0.0
  %3205 = vmatprep.subr.mxu0 0.0
  %3206 = vmatpush1.msra.mxu0 0.0
  %3207 = vmatprep.subr.mxu0 0.0
  %3208 = vmatpush1.msra.mxu0 0.0
  %3209 = vmatprep.subr.mxu0 0.0
  %3210 = vmatpush1.msra.mxu0 0.0
  %3211 = vmatprep.subr.mxu0 0.0
  %3212 = vmatpush1.msra.mxu0 0.0
  %3213 = vmatprep.subr.mxu0 0.0
  %3214 = vmatpush1.msra.mxu0 0.0
  %3215 = vmatprep.subr.mxu0 0.0
  %3216 = vmatpush1.msra.mxu0 0.0
  %3217 = vmatprep.subr.mxu0 0.0
  %3218 = vmatpush1.msra.mxu0 0.0
  %3219 = vmatprep.subr.mxu0 0.0
  %3220 = vmatpush1.msra.mxu0 0.0
  %3221 = vmatprep.subr.mxu0 0.0
  %3222 = vmatpush1.msra.mxu0 0.0
  %3223 = vmatprep.subr.mxu0 0.0
  %3224 = vmatpush1.msra.mxu0 0.0
  %3225 = vmatprep.subr.mxu0 0.0
  %3226 = vmatpush1.msra.mxu0 0.0
  %3227 = vmatprep.subr.mxu0 0.0
  %3228 = vmatpush1.msra.mxu0 0.0
  %3229 = vmatprep.subr.mxu0 0.0
  %3230 = vmatpush1.msra.mxu0 0.0
  %3231 = vmatprep.subr.mxu0 0.0
  %3232 = vmatpush1.msra.mxu0 0.0
  %3233 = vmatprep.subr.mxu0 0.0
  %3234 = vmatpush1.msra.mxu0 0.0
  %3235 = vmatprep.subr.mxu0 0.0
  %3236 = vmatpush1.msra.mxu0 0.0
  %3237 = vmatprep.subr.mxu0 0.0
  %3238 = vmatpush1.msra.mxu0 0.0
  %3239 = vmatprep.subr.mxu0 0.0
  %3240 = vmatpush1.msra.mxu0 0.0
  %3241 = vmatprep.subr.mxu0 0.0
  %3242 = vmatpush1.msra.mxu0 0.0
  %3243 = vmatprep.mubr.f32.mxu0 0.0
  %3244 = vmatmul.mubr.f32.gmra.mrb[0].mxu0 %v2867
  %v3245 = vpop.f32.mrb[0].mxu0
  %v3246 = vadd.f32 %v2859, %v3245
  %v3247 = vpop.f32.mrb[0].mxu0
  %v3248 = vadd.f32 %v2859, %v3247
  %3249 = vmatprep.mubr.f32.mxu0 0.0
  %3250 = vmatmul.mubr.f32.gmra.mrb[0].mxu0 %v2869
  %v3251 = vpop.f32.mrb[0].mxu0
  %v3252 = vadd.f32 %v2864, %v3251
  %v3253 = vpop.f32.mrb[0].mxu0
  %v3254 = vadd.f32 %v2864, %v3253
  %3255 = vdwg.mxu0
  %3256 = vmatprep.subr.mxu0 %v2766
  %3257 = vmatpush1.msra.mxu0 %v2762
  %3258 = vmatprep.subr.mxu0 %v2767
  %3259 = vmatpush1.msra.mxu0 %v2763
  %3260 = vmatprep.subr.mxu0 %v2768
  %3261 = vmatpush1.msra.mxu0 %v2764
  %3262 = vmatprep.subr.mxu0 %v2769
  %3263 = vmatpush1.msra.mxu0 %v2765
  %3264 = vmatprep.subr.mxu0 %v2770
  %3265 = vmatpush1.msra.mxu0 %v2766
  %3266 = vmatprep.subr.mxu0 %v2771
  %3267 = vmatpush1.msra.mxu0 %v2767
  %3268 = vmatprep.subr.mxu0 %v2772
  %3269 = vmatpush1.msra.mxu0 %v2768
  %3270 = vmatprep.subr.mxu0 %v2773
  %3271 = vmatpush1.msra.mxu0 %v2769
  %3272 = vmatprep.subr.mxu0 %v2774
  %3273 = vmatpush1.msra.mxu0 %v2770
  %3274 = vmatprep.subr.mxu0 %v2775
  %3275 = vmatpush1.msra.mxu0 %v2771
  %3276 = vmatprep.subr.mxu0 %v2776
  %3277 = vmatpush1.msra.mxu0 %v2772
  %3278 = vmatprep.subr.mxu0 %v2777
  %3279 = vmatpush1.msra.mxu0 %v2773
  %3280 = vmatprep.subr.mxu0 0.0
  %3281 = vmatpush1.msra.mxu0 0.0
  %3282 = vmatprep.subr.mxu0 0.0
  %3283 = vmatpush1.msra.mxu0 0.0
  %3284 = vmatprep.subr.mxu0 0.0
  %3285 = vmatpush1.msra.mxu0 0.0
  %3286 = vmatprep.subr.mxu0 0.0
  %3287 = vmatpush1.msra.mxu0 0.0
  %3288 = vmatprep.subr.mxu0 0.0
  %3289 = vmatpush1.msra.mxu0 0.0
  %3290 = vmatprep.subr.mxu0 0.0
  %3291 = vmatpush1.msra.mxu0 0.0
  %3292 = vmatprep.subr.mxu0 0.0
  %3293 = vmatpush1.msra.mxu0 0.0
  %3294 = vmatprep.subr.mxu0 0.0
  %3295 = vmatpush1.msra.mxu0 0.0
  %3296 = vmatprep.subr.mxu0 0.0
  %3297 = vmatpush1.msra.mxu0 0.0
  %3298 = vmatprep.subr.mxu0 0.0
  %3299 = vmatpush1.msra.mxu0 0.0
  %3300 = vmatprep.subr.mxu0 0.0
  %3301 = vmatpush1.msra.mxu0 0.0
  %3302 = vmatprep.subr.mxu0 0.0
  %3303 = vmatpush1.msra.mxu0 0.0
  %3304 = vmatprep.subr.mxu0 0.0
  %3305 = vmatpush1.msra.mxu0 0.0
  %3306 = vmatprep.subr.mxu0 0.0
  %3307 = vmatpush1.msra.mxu0 0.0
  %3308 = vmatprep.subr.mxu0 0.0
  %3309 = vmatpush1.msra.mxu0 0.0
  %3310 = vmatprep.subr.mxu0 0.0
  %3311 = vmatpush1.msra.mxu0 0.0
  %3312 = vmatprep.subr.mxu0 0.0
  %3313 = vmatpush1.msra.mxu0 0.0
  %3314 = vmatprep.subr.mxu0 0.0
  %3315 = vmatpush1.msra.mxu0 0.0
  %3316 = vmatprep.subr.mxu0 0.0
  %3317 = vmatpush1.msra.mxu0 0.0
  %3318 = vmatprep.subr.mxu0 0.0
  %3319 = vmatpush1.msra.mxu0 0.0
  %3320 = vmatprep.mubr.f32.mxu0 0.0
  %3321 = vmatmul.mubr.f32.gmra.mrb[0].mxu0 %v2867
  %v3322 = vpop.f32.mrb[0].mxu0
  %v3323 = vadd.f32 %v2859, %v3322
  %v3324 = vpop.f32.mrb[0].mxu0
  %v3325 = vadd.f32 %v2859, %v3324
  %3326 = vmatprep.mubr.f32.mxu0 0.0
  %3327 = vmatmul.mubr.f32.gmra.mrb[0].mxu0 %v2869
  %v3328 = vpop.f32.mrb[0].mxu0
  %v3329 = vadd.f32 %v2864, %v3328
  %v3330 = vpop.f32.mrb[0].mxu0
  %v3331 = vadd.f32 %v2864, %v3330
  %3332 = vdwg.mxu0
  %3333 = vmatprep.subr.mxu0 %v2774
  %3334 = vmatpush1.msra.mxu0 %v2770
  %3335 = vmatprep.subr.mxu0 %v2775
  %3336 = vmatpush1.msra.mxu0 %v2771
  %3337 = vmatprep.subr.mxu0 %v2776
  %3338 = vmatpush1.msra.mxu0 %v2772
  %3339 = vmatprep.subr.mxu0 %v2777
  %3340 = vmatpush1.msra.mxu0 %v2773
  %3341 = vmatprep.subr.mxu0 %v2778
  %3342 = vmatpush1.msra.mxu0 %v2774
  %3343 = vmatprep.subr.mxu0 %v2779
  %3344 = vmatpush1.msra.mxu0 %v2775
  %3345 = vmatprep.subr.mxu0 %v2780
  %3346 = vmatpush1.msra.mxu0 %v2776
  %3347 = vmatprep.subr.mxu0 %v2781
  %3348 = vmatpush1.msra.mxu0 %v2777
  %3349 = vmatprep.subr.mxu0 %v2782
  %3350 = vmatpush1.msra.mxu0 %v2778
  %3351 = vmatprep.subr.mxu0 %v2783
  %3352 = vmatpush1.msra.mxu0 %v2779
  %3353 = vmatprep.subr.mxu0 %v2784
  %3354 = vmatpush1.msra.mxu0 %v2780
  %3355 = vmatprep.subr.mxu0 %v2785
  %3356 = vmatpush1.msra.mxu0 %v2781
  %3357 = vmatprep.subr.mxu0 0.0
  %3358 = vmatpush1.msra.mxu0 0.0
  %3359 = vmatprep.subr.mxu0 0.0
  %3360 = vmatpush1.msra.mxu0 0.0
  %3361 = vmatprep.subr.mxu0 0.0
  %3362 = vmatpush1.msra.mxu0 0.0
  %3363 = vmatprep.subr.mxu0 0.0
  %3364 = vmatpush1.msra.mxu0 0.0
  %3365 = vmatprep.subr.mxu0 0.0
  %3366 = vmatpush1.msra.mxu0 0.0
  %3367 = vmatprep.subr.mxu0 0.0
  %3368 = vmatpush1.msra.mxu0 0.0
  %3369 = vmatprep.subr.mxu0 0.0
  %3370 = vmatpush1.msra.mxu0 0.0
  %3371 = vmatprep.subr.mxu0 0.0
  %3372 = vmatpush1.msra.mxu0 0.0
  %3373 = vmatprep.subr.mxu0 0.0
  %3374 = vmatpush1.msra.mxu0 0.0
  %3375 = vmatprep.subr.mxu0 0.0
  %3376 = vmatpush1.msra.mxu0 0.0
  %3377 = vmatprep.subr.mxu0 0.0
  %3378 = vmatpush1.msra.mxu0 0.0
  %3379 = vmatprep.subr.mxu0 0.0
  %3380 = vmatpush1.msra.mxu0 0.0
  %3381 = vmatprep.subr.mxu0 0.0
  %3382 = vmatpush1.msra.mxu0 0.0
  %3383 = vmatprep.subr.mxu0 0.0
  %3384 = vmatpush1.msra.mxu0 0.0
  %3385 = vmatprep.subr.mxu0 0.0
  %3386 = vmatpush1.msra.mxu0 0.0
  %3387 = vmatprep.subr.mxu0 0.0
  %3388 = vmatpush1.msra.mxu0 0.0
  %3389 = vmatprep.subr.mxu0 0.0
  %3390 = vmatpush1.msra.mxu0 0.0
  %3391 = vmatprep.subr.mxu0 0.0
  %3392 = vmatpush1.msra.mxu0 0.0
  %3393 = vmatprep.subr.mxu0 0.0
  %3394 = vmatpush1.msra.mxu0 0.0
  %3395 = vmatprep.subr.mxu0 0.0
  %3396 = vmatpush1.msra.mxu0 0.0
  %3397 = vmatprep.mubr.f32.mxu0 0.0
  %3398 = vmatmul.mubr.f32.gmra.mrb[0].mxu0 %v2867
  %v3399 = vpop.f32.mrb[0].mxu0
  %v3400 = vadd.f32 %v2859, %v3399
  %v3401 = vpop.f32.mrb[0].mxu0
  %v3402 = vadd.f32 %v2859, %v3401
  %3403 = vmatprep.mubr.f32.mxu0 0.0
  %3404 = vmatmul.mubr.f32.gmra.mrb[0].mxu0 %v2869
  %v3405 = vpop.f32.mrb[0].mxu0
  %v3406 = vadd.f32 %v2864, %v3405
  %v3407 = vpop.f32.mrb[0].mxu0
  %v3408 = vadd.f32 %v2864, %v3407
  %3409 = vdwg.mxu0
  %3410 = vmatprep.subr.mxu0 %v2782
  %3411 = vmatpush1.msra.mxu0 %v2778
  %3412 = vmatprep.subr.mxu0 %v2783
  %3413 = vmatpush1.msra.mxu0 %v2779
  %3414 = vmatprep.subr.mxu0 %v2784
  %3415 = vmatpush1.msra.mxu0 %v2780
  %3416 = vmatprep.subr.mxu0 %v2785
  %3417 = vmatpush1.msra.mxu0 %v2781
  %3418 = vmatprep.subr.mxu0 %v2786
  %3419 = vmatpush1.msra.mxu0 %v2782
  %3420 = vmatprep.subr.mxu0 %v2787
  %3421 = vmatpush1.msra.mxu0 %v2783
  %3422 = vmatprep.subr.mxu0 %v2788
  %3423 = vmatpush1.msra.mxu0 %v2784
  %3424 = vmatprep.subr.mxu0 %v2789
  %3425 = vmatpush1.msra.mxu0 %v2785
  %3426 = vmatprep.subr.mxu0 %v2790
  %3427 = vmatpush1.msra.mxu0 %v2786
  %3428 = vmatprep.subr.mxu0 %v2791
  %3429 = vmatpush1.msra.mxu0 %v2787
  %3430 = vmatprep.subr.mxu0 %v2792
  %3431 = vmatpush1.msra.mxu0 %v2788
  %3432 = vmatprep.subr.mxu0 %v2793
  %3433 = vmatpush1.msra.mxu0 %v2789
  %3434 = vmatprep.subr.mxu0 0.0
  %3435 = vmatpush1.msra.mxu0 0.0
  %3436 = vmatprep.subr.mxu0 0.0
  %3437 = vmatpush1.msra.mxu0 0.0
  %3438 = vmatprep.subr.mxu0 0.0
  %3439 = vmatpush1.msra.mxu0 0.0
  %3440 = vmatprep.subr.mxu0 0.0
  %3441 = vmatpush1.msra.mxu0 0.0
  %3442 = vmatprep.subr.mxu0 0.0
  %3443 = vmatpush1.msra.mxu0 0.0
  %3444 = vmatprep.subr.mxu0 0.0
  %3445 = vmatpush1.msra.mxu0 0.0
  %3446 = vmatprep.subr.mxu0 0.0
  %3447 = vmatpush1.msra.mxu0 0.0
  %3448 = vmatprep.subr.mxu0 0.0
  %3449 = vmatpush1.msra.mxu0 0.0
  %3450 = vmatprep.subr.mxu0 0.0
  %3451 = vmatpush1.msra.mxu0 0.0
  %3452 = vmatprep.subr.mxu0 0.0
  %3453 = vmatpush1.msra.mxu0 0.0
  %3454 = vmatprep.subr.mxu0 0.0
  %3455 = vmatpush1.msra.mxu0 0.0
  %3456 = vmatprep.subr.mxu0 0.0
  %3457 = vmatpush1.msra.mxu0 0.0
  %3458 = vmatprep.subr.mxu0 0.0
  %3459 = vmatpush1.msra.mxu0 0.0
  %3460 = vmatprep.subr.mxu0 0.0
  %3461 = vmatpush1.msra.mxu0 0.0
  %3462 = vmatprep.subr.mxu0 0.0
  %3463 = vmatpush1.msra.mxu0 0.0
  %3464 = vmatprep.subr.mxu0 0.0
  %3465 = vmatpush1.msra.mxu0 0.0
  %3466 = vmatprep.subr.mxu0 0.0
  %3467 = vmatpush1.msra.mxu0 0.0
  %3468 = vmatprep.subr.mxu0 0.0
  %3469 = vmatpush1.msra.mxu0 0.0
  %3470 = vmatprep.subr.mxu0 0.0
  %3471 = vmatpush1.msra.mxu0 0.0
  %3472 = vmatprep.subr.mxu0 0.0
  %3473 = vmatpush1.msra.mxu0 0.0
  %3474 = vmatprep.mubr.f32.mxu0 0.0
  %3475 = vmatmul.mubr.f32.gmra.mrb[0].mxu0 %v2867
  %v3476 = vpop.f32.mrb[0].mxu0
  %v3477 = vadd.f32 %v2859, %v3476
  %v3478 = vpop.f32.mrb[0].mxu0
  %v3479 = vadd.f32 %v2859, %v3478
  %3480 = vmatprep.mubr.f32.mxu0 0.0
  %3481 = vmatmul.mubr.f32.gmra.mrb[0].mxu0 %v2869
  %v3482 = vpop.f32.mrb[0].mxu0
  %v3483 = vadd.f32 %v2864, %v3482
  %v3484 = vpop.f32.mrb[0].mxu0
  %v3485 = vadd.f32 %v2864, %v3484
  %3486 = vdwg.mxu0
  %3487 = vmatprep.subr.mxu0 %v2790
  %3488 = vmatpush1.msra.mxu0 %v2786
  %3489 = vmatprep.subr.mxu0 %v2791
  %3490 = vmatpush1.msra.mxu0 %v2787
  %3491 = vmatprep.subr.mxu0 %v2792
  %3492 = vmatpush1.msra.mxu0 %v2788
  %3493 = vmatprep.subr.mxu0 %v2793
  %3494 = vmatpush1.msra.mxu0 %v2789
  %3495 = vmatprep.subr.mxu0 %v2794
  %3496 = vmatpush1.msra.mxu0 %v2790
  %3497 = vmatprep.subr.mxu0 %v2795
  %3498 = vmatpush1.msra.mxu0 %v2791
  %3499 = vmatprep.subr.mxu0 %v2796
  %3500 = vmatpush1.msra.mxu0 %v2792
  %3501 = vmatprep.subr.mxu0 %v2797
  %3502 = vmatpush1.msra.mxu0 %v2793
  %3503 = vmatprep.subr.mxu0 %v2798
  %3504 = vmatpush1.msra.mxu0 %v2794
  %3505 = vmatprep.subr.mxu0 %v2799
  %3506 = vmatpush1.msra.mxu0 %v2795
  %3507 = vmatprep.subr.mxu0 %v2800
  %3508 = vmatpush1.msra.mxu0 %v2796
  %3509 = vmatprep.subr.mxu0 %v2801
  %3510 = vmatpush1.msra.mxu0 %v2797
  %3511 = vmatprep.subr.mxu0 0.0
  %3512 = vmatpush1.msra.mxu0 0.0
  %3513 = vmatprep.subr.mxu0 0.0
  %3514 = vmatpush1.msra.mxu0 0.0
  %3515 = vmatprep.subr.mxu0 0.0
  %3516 = vmatpush1.msra.mxu0 0.0
  %3517 = vmatprep.subr.mxu0 0.0
  %3518 = vmatpush1.msra.mxu0 0.0
  %3519 = vmatprep.subr.mxu0 0.0
  %3520 = vmatpush1.msra.mxu0 0.0
  %3521 = vmatprep.subr.mxu0 0.0
  %3522 = vmatpush1.msra.mxu0 0.0
  %3523 = vmatprep.subr.mxu0 0.0
  %3524 = vmatpush1.msra.mxu0 0.0
  %3525 = vmatprep.subr.mxu0 0.0
  %3526 = vmatpush1.msra.mxu0 0.0
  %3527 = vmatprep.subr.mxu0 0.0
  %3528 = vmatpush1.msra.mxu0 0.0
  %3529 = vmatprep.subr.mxu0 0.0
  %3530 = vmatpush1.msra.mxu0 0.0
  %3531 = vmatprep.subr.mxu0 0.0
  %3532 = vmatpush1.msra.mxu0 0.0
  %3533 = vmatprep.subr.mxu0 0.0
  %3534 = vmatpush1.msra.mxu0 0.0
  %3535 = vmatprep.subr.mxu0 0.0
  %3536 = vmatpush1.msra.mxu0 0.0
  %3537 = vmatprep.subr.mxu0 0.0
  %3538 = vmatpush1.msra.mxu0 0.0
  %3539 = vmatprep.subr.mxu0 0.0
  %3540 = vmatpush1.msra.mxu0 0.0
  %3541 = vmatprep.subr.mxu0 0.0
  %3542 = vmatpush1.msra.mxu0 0.0
  %3543 = vmatprep.subr.mxu0 0.0
  %3544 = vmatpush1.msra.mxu0 0.0
  %3545 = vmatprep.subr.mxu0 0.0
  %3546 = vmatpush1.msra.mxu0 0.0
  %3547 = vmatprep.subr.mxu0 0.0
  %3548 = vmatpush1.msra.mxu0 0.0
  %3549 = vmatprep.subr.mxu0 0.0
  %3550 = vmatpush1.msra.mxu0 0.0
  %3551 = vmatprep.mubr.f32.mxu0 0.0
  %3552 = vmatmul.mubr.f32.gmra.mrb[0].mxu0 %v2867
  %v3553 = vpop.f32.mrb[0].mxu0
  %v3554 = vadd.f32 %v2859, %v3553
  %v3555 = vpop.f32.mrb[0].mxu0
  %v3556 = vadd.f32 %v2859, %v3555
  %3557 = vmatprep.mubr.f32.mxu0 0.0
  %3558 = vmatmul.mubr.f32.gmra.mrb[0].mxu0 %v2869
  %v3559 = vpop.f32.mrb[0].mxu0
  %v3560 = vadd.f32 %v2864, %v3559
  %v3561 = vpop.f32.mrb[0].mxu0
  %v3562 = vadd.f32 %v2864, %v3561
  %3563 = vdwg.mxu0
  %3564 = vmatprep.subr.mxu0 %v2798
  %3565 = vmatpush1.msra.mxu0 %v2794
  %3566 = vmatprep.subr.mxu0 %v2799
  %3567 = vmatpush1.msra.mxu0 %v2795
  %3568 = vmatprep.subr.mxu0 %v2800
  %3569 = vmatpush1.msra.mxu0 %v2796
  %3570 = vmatprep.subr.mxu0 %v2801
  %3571 = vmatpush1.msra.mxu0 %v2797
  %3572 = vmatprep.subr.mxu0 %v2802
  %3573 = vmatpush1.msra.mxu0 %v2798
  %3574 = vmatprep.subr.mxu0 %v2803
  %3575 = vmatpush1.msra.mxu0 %v2799
  %3576 = vmatprep.subr.mxu0 %v2804
  %3577 = vmatpush1.msra.mxu0 %v2800
  %3578 = vmatprep.subr.mxu0 %v2805
  %3579 = vmatpush1.msra.mxu0 %v2801
  %3580 = vmatprep.subr.mxu0 %v2806
  %3581 = vmatpush1.msra.mxu0 %v2802
  %3582 = vmatprep.subr.mxu0 %v2807
  %3583 = vmatpush1.msra.mxu0 %v2803
  %3584 = vmatprep.subr.mxu0 %v2808
  %3585 = vmatpush1.msra.mxu0 %v2804
  %3586 = vmatprep.subr.mxu0 %v2809
  %3587 = vmatpush1.msra.mxu0 %v2805
  %3588 = vmatprep.subr.mxu0 0.0
  %3589 = vmatpush1.msra.mxu0 0.0
  %3590 = vmatprep.subr.mxu0 0.0
  %3591 = vmatpush1.msra.mxu0 0.0
  %3592 = vmatprep.subr.mxu0 0.0
  %3593 = vmatpush1.msra.mxu0 0.0
  %3594 = vmatprep.subr.mxu0 0.0
  %3595 = vmatpush1.msra.mxu0 0.0
  %3596 = vmatprep.subr.mxu0 0.0
  %3597 = vmatpush1.msra.mxu0 0.0
  %3598 = vmatprep.subr.mxu0 0.0
  %3599 = vmatpush1.msra.mxu0 0.0
  %3600 = vmatprep.subr.mxu0 0.0
  %3601 = vmatpush1.msra.mxu0 0.0
  %3602 = vmatprep.subr.mxu0 0.0
  %3603 = vmatpush1.msra.mxu0 0.0
  %3604 = vmatprep.subr.mxu0 0.0
  %3605 = vmatpush1.msra.mxu0 0.0
  %3606 = vmatprep.subr.mxu0 0.0
  %3607 = vmatpush1.msra.mxu0 0.0
  %3608 = vmatprep.subr.mxu0 0.0
  %3609 = vmatpush1.msra.mxu0 0.0
  %3610 = vmatprep.subr.mxu0 0.0
  %3611 = vmatpush1.msra.mxu0 0.0
  %3612 = vmatprep.subr.mxu0 0.0
  %3613 = vmatpush1.msra.mxu0 0.0
  %3614 = vmatprep.subr.mxu0 0.0
  %3615 = vmatpush1.msra.mxu0 0.0
  %3616 = vmatprep.subr.mxu0 0.0
  %3617 = vmatpush1.msra.mxu0 0.0
  %3618 = vmatprep.subr.mxu0 0.0
  %3619 = vmatpush1.msra.mxu0 0.0
  %3620 = vmatprep.subr.mxu0 0.0
  %3621 = vmatpush1.msra.mxu0 0.0
  %3622 = vmatprep.subr.mxu0 0.0
  %3623 = vmatpush1.msra.mxu0 0.0
  %3624 = vmatprep.subr.mxu0 0.0
  %3625 = vmatpush1.msra.mxu0 0.0
  %3626 = vmatprep.subr.mxu0 0.0
  %3627 = vmatpush1.msra.mxu0 0.0
  %3628 = vmatprep.mubr.f32.mxu0 0.0
  %3629 = vmatmul.mubr.f32.gmra.mrb[0].mxu0 %v2867
  %v3630 = vpop.f32.mrb[0].mxu0
  %v3631 = vadd.f32 %v2859, %v3630
  %v3632 = vpop.f32.mrb[0].mxu0
  %v3633 = vadd.f32 %v2859, %v3632
  %3634 = vmatprep.mubr.f32.mxu0 0.0
  %3635 = vmatmul.mubr.f32.gmra.mrb[0].mxu0 %v2869
  %v3636 = vpop.f32.mrb[0].mxu0
  %v3637 = vadd.f32 %v2864, %v3636
  %v3638 = vpop.f32.mrb[0].mxu0
  %v3639 = vadd.f32 %v2864, %v3638
  %3640 = vdwg.mxu0
  %3641 = vmatprep.subr.mxu0 %v2806
  %3642 = vmatpush1.msra.mxu0 %v2802
  %3643 = vmatprep.subr.mxu0 %v2807
  %3644 = vmatpush1.msra.mxu0 %v2803
  %3645 = vmatprep.subr.mxu0 %v2808
  %3646 = vmatpush1.msra.mxu0 %v2804
  %3647 = vmatprep.subr.mxu0 %v2809
  %3648 = vmatpush1.msra.mxu0 %v2805
  %3649 = vmatprep.subr.mxu0 %v2810
  %3650 = vmatpush1.msra.mxu0 %v2806
  %3651 = vmatprep.subr.mxu0 %v2811
  %3652 = vmatpush1.msra.mxu0 %v2807
  %3653 = vmatprep.subr.mxu0 %v2812
  %3654 = vmatpush1.msra.mxu0 %v2808
  %3655 = vmatprep.subr.mxu0 %v2813
  %3656 = vmatpush1.msra.mxu0 %v2809
  %3657 = vmatprep.subr.mxu0 %v2814
  %3658 = vmatpush1.msra.mxu0 %v2810
  %3659 = vmatprep.subr.mxu0 %v2815
  %3660 = vmatpush1.msra.mxu0 %v2811
  %3661 = vmatprep.subr.mxu0 %v2816
  %3662 = vmatpush1.msra.mxu0 %v2812
  %3663 = vmatprep.subr.mxu0 %v2817
  %3664 = vmatpush1.msra.mxu0 %v2813
  %3665 = vmatprep.subr.mxu0 0.0
  %3666 = vmatpush1.msra.mxu0 0.0
  %3667 = vmatprep.subr.mxu0 0.0
  %3668 = vmatpush1.msra.mxu0 0.0
  %3669 = vmatprep.subr.mxu0 0.0
  %3670 = vmatpush1.msra.mxu0 0.0
  %3671 = vmatprep.subr.mxu0 0.0
  %3672 = vmatpush1.msra.mxu0 0.0
  %3673 = vmatprep.subr.mxu0 0.0
  %3674 = vmatpush1.msra.mxu0 0.0
  %3675 = vmatprep.subr.mxu0 0.0
  %3676 = vmatpush1.msra.mxu0 0.0
  %3677 = vmatprep.subr.mxu0 0.0
  %3678 = vmatpush1.msra.mxu0 0.0
  %3679 = vmatprep.subr.mxu0 0.0
  %3680 = vmatpush1.msra.mxu0 0.0
  %3681 = vmatprep.subr.mxu0 0.0
  %3682 = vmatpush1.msra.mxu0 0.0
  %3683 = vmatprep.subr.mxu0 0.0
  %3684 = vmatpush1.msra.mxu0 0.0
  %3685 = vmatprep.subr.mxu0 0.0
  %3686 = vmatpush1.msra.mxu0 0.0
  %3687 = vmatprep.subr.mxu0 0.0
  %3688 = vmatpush1.msra.mxu0 0.0
  %3689 = vmatprep.subr.mxu0 0.0
  %3690 = vmatpush1.msra.mxu0 0.0
  %3691 = vmatprep.subr.mxu0 0.0
  %3692 = vmatpush1.msra.mxu0 0.0
  %3693 = vmatprep.subr.mxu0 0.0
  %3694 = vmatpush1.msra.mxu0 0.0
  %3695 = vmatprep.subr.mxu0 0.0
  %3696 = vmatpush1.msra.mxu0 0.0
  %3697 = vmatprep.subr.mxu0 0.0
  %3698 = vmatpush1.msra.mxu0 0.0
  %3699 = vmatprep.subr.mxu0 0.0
  %3700 = vmatpush1.msra.mxu0 0.0
  %3701 = vmatprep.subr.mxu0 0.0
  %3702 = vmatpush1.msra.mxu0 0.0
  %3703 = vmatprep.subr.mxu0 0.0
  %3704 = vmatpush1.msra.mxu0 0.0
  %3705 = vmatprep.mubr.f32.mxu0 0.0
  %3706 = vmatmul.mubr.f32.gmra.mrb[0].mxu0 %v2867
  %v3707 = vpop.f32.mrb[0].mxu0
  %v3708 = vadd.f32 %v2859, %v3707
  %v3709 = vpop.f32.mrb[0].mxu0
  %v3710 = vadd.f32 %v2859, %v3709
  %3711 = vmatprep.mubr.f32.mxu0 0.0
  %3712 = vmatmul.mubr.f32.gmra.mrb[0].mxu0 %v2869
  %v3713 = vpop.f32.mrb[0].mxu0
  %v3714 = vadd.f32 %v2864, %v3713
  %v3715 = vpop.f32.mrb[0].mxu0
  %v3716 = vadd.f32 %v2864, %v3715
  %3717 = vdwg.mxu0
  %3718 = vmatprep.subr.mxu0 %v2814
  %3719 = vmatpush1.msra.mxu0 %v2810
  %3720 = vmatprep.subr.mxu0 %v2815
  %3721 = vmatpush1.msra.mxu0 %v2811
  %3722 = vmatprep.subr.mxu0 %v2816
  %3723 = vmatpush1.msra.mxu0 %v2812
  %3724 = vmatprep.subr.mxu0 %v2817
  %3725 = vmatpush1.msra.mxu0 %v2813
  %3726 = vmatprep.subr.mxu0 %v2818
  %3727 = vmatpush1.msra.mxu0 %v2814
  %3728 = vmatprep.subr.mxu0 %v2819
  %3729 = vmatpush1.msra.mxu0 %v2815
  %3730 = vmatprep.subr.mxu0 %v2820
  %3731 = vmatpush1.msra.mxu0 %v2816
  %3732 = vmatprep.subr.mxu0 %v2821
  %3733 = vmatpush1.msra.mxu0 %v2817
  %3734 = vmatprep.subr.mxu0 %v2822
  %3735 = vmatpush1.msra.mxu0 %v2818
  %3736 = vmatprep.subr.mxu0 %v2823
  %3737 = vmatpush1.msra.mxu0 %v2819
  %3738 = vmatprep.subr.mxu0 %v2824
  %3739 = vmatpush1.msra.mxu0 %v2820
  %3740 = vmatprep.subr.mxu0 %v2825
  %3741 = vmatpush1.msra.mxu0 %v2821
  %3742 = vmatprep.subr.mxu0 0.0
  %3743 = vmatpush1.msra.mxu0 0.0
  %3744 = vmatprep.subr.mxu0 0.0
  %3745 = vmatpush1.msra.mxu0 0.0
  %3746 = vmatprep.subr.mxu0 0.0
  %3747 = vmatpush1.msra.mxu0 0.0
  %3748 = vmatprep.subr.mxu0 0.0
  %3749 = vmatpush1.msra.mxu0 0.0
  %3750 = vmatprep.subr.mxu0 0.0
  %3751 = vmatpush1.msra.mxu0 0.0
  %3752 = vmatprep.subr.mxu0 0.0
  %3753 = vmatpush1.msra.mxu0 0.0
  %3754 = vmatprep.subr.mxu0 0.0
  %3755 = vmatpush1.msra.mxu0 0.0
  %3756 = vmatprep.subr.mxu0 0.0
  %3757 = vmatpush1.msra.mxu0 0.0
  %3758 = vmatprep.subr.mxu0 0.0
  %3759 = vmatpush1.msra.mxu0 0.0
  %3760 = vmatprep.subr.mxu0 0.0
  %3761 = vmatpush1.msra.mxu0 0.0
  %3762 = vmatprep.subr.mxu0 0.0
  %3763 = vmatpush1.msra.mxu0 0.0
  %3764 = vmatprep.subr.mxu0 0.0
  %3765 = vmatpush1.msra.mxu0 0.0
  %3766 = vmatprep.subr.mxu0 0.0
  %3767 = vmatpush1.msra.mxu0 0.0
  %3768 = vmatprep.subr.mxu0 0.0
  %3769 = vmatpush1.msra.mxu0 0.0
  %3770 = vmatprep.subr.mxu0 0.0
  %3771 = vmatpush1.msra.mxu0 0.0
  %3772 = vmatprep.subr.mxu0 0.0
  %3773 = vmatpush1.msra.mxu0 0.0
  %3774 = vmatprep.subr.mxu0 0.0
  %3775 = vmatpush1.msra.mxu0 0.0
  %3776 = vmatprep.subr.mxu0 0.0
  %3777 = vmatpush1.msra.mxu0 0.0
  %3778 = vmatprep.subr.mxu0 0.0
  %3779 = vmatpush1.msra.mxu0 0.0
  %3780 = vmatprep.subr.mxu0 0.0
  %3781 = vmatpush1.msra.mxu0 0.0
  %3782 = vmatprep.mubr.f32.mxu0 0.0
  %3783 = vmatmul.mubr.f32.gmra.mrb[0].mxu0 %v2867
  %v3784 = vpop.f32.mrb[0].mxu0
  %v3785 = vadd.f32 %v2859, %v3784
  %v3786 = vpop.f32.mrb[0].mxu0
  %v3787 = vadd.f32 %v2859, %v3786
  %3788 = vmatprep.mubr.f32.mxu0 0.0
  %3789 = vmatmul.mubr.f32.gmra.mrb[0].mxu0 %v2869
  %v3790 = vpop.f32.mrb[0].mxu0
  %v3791 = vadd.f32 %v2864, %v3790
  %v3792 = vpop.f32.mrb[0].mxu0
  %v3793 = vadd.f32 %v2864, %v3792
  %3794 = vdwg.mxu0
  %3795 = vmatprep.subr.mxu0 %v2822
  %3796 = vmatpush1.msra.mxu0 %v2818
  %3797 = vmatprep.subr.mxu0 %v2823
  %3798 = vmatpush1.msra.mxu0 %v2819
  %3799 = vmatprep.subr.mxu0 %v2824
  %3800 = vmatpush1.msra.mxu0 %v2820
  %3801 = vmatprep.subr.mxu0 %v2825
  %3802 = vmatpush1.msra.mxu0 %v2821
  %3803 = vmatprep.subr.mxu0 %v2826
  %3804 = vmatpush1.msra.mxu0 %v2822
  %3805 = vmatprep.subr.mxu0 %v2827
  %3806 = vmatpush1.msra.mxu0 %v2823
  %3807 = vmatprep.subr.mxu0 %v2828
  %3808 = vmatpush1.msra.mxu0 %v2824
  %3809 = vmatprep.subr.mxu0 %v2829
  %3810 = vmatpush1.msra.mxu0 %v2825
  %3811 = vmatprep.subr.mxu0 %v2830
  %3812 = vmatpush1.msra.mxu0 %v2826
  %3813 = vmatprep.subr.mxu0 %v2831
  %3814 = vmatpush1.msra.mxu0 %v2827
  %3815 = vmatprep.subr.mxu0 %v2832
  %3816 = vmatpush1.msra.mxu0 %v2828
  %3817 = vmatprep.subr.mxu0 %v2833
  %3818 = vmatpush1.msra.mxu0 %v2829
  %3819 = vmatprep.subr.mxu0 0.0
  %3820 = vmatpush1.msra.mxu0 0.0
  %3821 = vmatprep.subr.mxu0 0.0
  %3822 = vmatpush1.msra.mxu0 0.0
  %3823 = vmatprep.subr.mxu0 0.0
  %3824 = vmatpush1.msra.mxu0 0.0
  %3825 = vmatprep.subr.mxu0 0.0
  %3826 = vmatpush1.msra.mxu0 0.0
  %3827 = vmatprep.subr.mxu0 0.0
  %3828 = vmatpush1.msra.mxu0 0.0
  %3829 = vmatprep.subr.mxu0 0.0
  %3830 = vmatpush1.msra.mxu0 0.0
  %3831 = vmatprep.subr.mxu0 0.0
  %3832 = vmatpush1.msra.mxu0 0.0
  %3833 = vmatprep.subr.mxu0 0.0
  %3834 = vmatpush1.msra.mxu0 0.0
  %3835 = vmatprep.subr.mxu0 0.0
  %3836 = vmatpush1.msra.mxu0 0.0
  %3837 = vmatprep.subr.mxu0 0.0
  %3838 = vmatpush1.msra.mxu0 0.0
  %3839 = vmatprep.subr.mxu0 0.0
  %3840 = vmatpush1.msra.mxu0 0.0
  %3841 = vmatprep.subr.mxu0 0.0
  %3842 = vmatpush1.msra.mxu0 0.0
  %3843 = vmatprep.subr.mxu0 0.0
  %3844 = vmatpush1.msra.mxu0 0.0
  %3845 = vmatprep.subr.mxu0 0.0
  %3846 = vmatpush1.msra.mxu0 0.0
  %3847 = vmatprep.subr.mxu0 0.0
  %3848 = vmatpush1.msra.mxu0 0.0
  %3849 = vmatprep.subr.mxu0 0.0
  %3850 = vmatpush1.msra.mxu0 0.0
  %3851 = vmatprep.subr.mxu0 0.0
  %3852 = vmatpush1.msra.mxu0 0.0
  %3853 = vmatprep.subr.mxu0 0.0
  %3854 = vmatpush1.msra.mxu0 0.0
  %3855 = vmatprep.subr.mxu0 0.0
  %3856 = vmatpush1.msra.mxu0 0.0
  %3857 = vmatprep.subr.mxu0 0.0
  %3858 = vmatpush1.msra.mxu0 0.0
  %3859 = vmatprep.mubr.f32.mxu0 0.0
  %3860 = vmatmul.mubr.f32.gmra.mrb[0].mxu0 %v2867
  %v3861 = vpop.f32.mrb[0].mxu0
  %v3862 = vadd.f32 %v2859, %v3861
  %v3863 = vpop.f32.mrb[0].mxu0
  %v3864 = vadd.f32 %v2859, %v3863
  %3865 = vmatprep.mubr.f32.mxu0 0.0
  %3866 = vmatmul.mubr.f32.gmra.mrb[0].mxu0 %v2869
  %v3867 = vpop.f32.mrb[0].mxu0
  %v3868 = vadd.f32 %v2864, %v3867
  %v3869 = vpop.f32.mrb[0].mxu0
  %v3870 = vadd.f32 %v2864, %v3869
  %3871 = vdwg.mxu0
  %3872 = vmatprep.subr.mxu0 %v2830
  %3873 = vmatpush1.msra.mxu0 %v2826
  %3874 = vmatprep.subr.mxu0 %v2831
  %3875 = vmatpush1.msra.mxu0 %v2827
  %3876 = vmatprep.subr.mxu0 %v2832
  %3877 = vmatpush1.msra.mxu0 %v2828
  %3878 = vmatprep.subr.mxu0 %v2833
  %3879 = vmatpush1.msra.mxu0 %v2829
  %3880 = vmatprep.subr.mxu0 %v2834
  %3881 = vmatpush1.msra.mxu0 %v2830
  %3882 = vmatprep.subr.mxu0 %v2835
  %3883 = vmatpush1.msra.mxu0 %v2831
  %3884 = vmatprep.subr.mxu0 %v2836
  %3885 = vmatpush1.msra.mxu0 %v2832
  %3886 = vmatprep.subr.mxu0 %v2837
  %3887 = vmatpush1.msra.mxu0 %v2833
  %3888 = vmatprep.subr.mxu0 %v2838
  %3889 = vmatpush1.msra.mxu0 %v2834
  %3890 = vmatprep.subr.mxu0 %v2839
  %3891 = vmatpush1.msra.mxu0 %v2835
  %3892 = vmatprep.subr.mxu0 %v2840
  %3893 = vmatpush1.msra.mxu0 %v2836
  %3894 = vmatprep.subr.mxu0 %v2841
  %3895 = vmatpush1.msra.mxu0 %v2837
  %3896 = vmatprep.subr.mxu0 0.0
  %3897 = vmatpush1.msra.mxu0 0.0
  %3898 = vmatprep.subr.mxu0 0.0
  %3899 = vmatpush1.msra.mxu0 0.0
  %3900 = vmatprep.subr.mxu0 0.0
  %3901 = vmatpush1.msra.mxu0 0.0
  %3902 = vmatprep.subr.mxu0 0.0
  %3903 = vmatpush1.msra.mxu0 0.0
  %3904 = vmatprep.subr.mxu0 0.0
  %3905 = vmatpush1.msra.mxu0 0.0
  %3906 = vmatprep.subr.mxu0 0.0
  %3907 = vmatpush1.msra.mxu0 0.0
  %3908 = vmatprep.subr.mxu0 0.0
  %3909 = vmatpush1.msra.mxu0 0.0
  %3910 = vmatprep.subr.mxu0 0.0
  %3911 = vmatpush1.msra.mxu0 0.0
  %3912 = vmatprep.subr.mxu0 0.0
  %3913 = vmatpush1.msra.mxu0 0.0
  %3914 = vmatprep.subr.mxu0 0.0
  %3915 = vmatpush1.msra.mxu0 0.0
  %3916 = vmatprep.subr.mxu0 0.0
  %3917 = vmatpush1.msra.mxu0 0.0
  %3918 = vmatprep.subr.mxu0 0.0
  %3919 = vmatpush1.msra.mxu0 0.0
  %3920 = vmatprep.subr.mxu0 0.0
  %3921 = vmatpush1.msra.mxu0 0.0
  %3922 = vmatprep.subr.mxu0 0.0
  %3923 = vmatpush1.msra.mxu0 0.0
  %3924 = vmatprep.subr.mxu0 0.0
  %3925 = vmatpush1.msra.mxu0 0.0
  %3926 = vmatprep.subr.mxu0 0.0
  %3927 = vmatpush1.msra.mxu0 0.0
  %3928 = vmatprep.subr.mxu0 0.0
  %3929 = vmatpush1.msra.mxu0 0.0
  %3930 = vmatprep.subr.mxu0 0.0
  %3931 = vmatpush1.msra.mxu0 0.0
  %3932 = vmatprep.subr.mxu0 0.0
  %3933 = vmatpush1.msra.mxu0 0.0
  %3934 = vmatprep.subr.mxu0 0.0
  %3935 = vmatpush1.msra.mxu0 0.0
  %3936 = vmatprep.mubr.f32.mxu0 0.0
  %3937 = vmatmul.mubr.f32.gmra.mrb[0].mxu0 %v2867
  %v3938 = vpop.f32.mrb[0].mxu0
  %v3939 = vadd.f32 %v2859, %v3938
  %v3940 = vpop.f32.mrb[0].mxu0
  %v3941 = vadd.f32 %v2859, %v3940
  %3942 = vmatprep.mubr.f32.mxu0 0.0
  %3943 = vmatmul.mubr.f32.gmra.mrb[0].mxu0 %v2869
  %v3944 = vpop.f32.mrb[0].mxu0
  %v3945 = vadd.f32 %v2864, %v3944
  %v3946 = vpop.f32.mrb[0].mxu0
  %v3947 = vadd.f32 %v2864, %v3946
  %3948 = vdwg.mxu0
  %3949 = vmatprep.subr.mxu0 %v2838
  %3950 = vmatpush1.msra.mxu0 %v2834
  %3951 = vmatprep.subr.mxu0 %v2839
  %3952 = vmatpush1.msra.mxu0 %v2835
  %3953 = vmatprep.subr.mxu0 %v2840
  %3954 = vmatpush1.msra.mxu0 %v2836
  %3955 = vmatprep.subr.mxu0 %v2841
  %3956 = vmatpush1.msra.mxu0 %v2837
  %3957 = vmatprep.subr.mxu0 %v2842
  %3958 = vmatpush1.msra.mxu0 %v2838
  %3959 = vmatprep.subr.mxu0 %v2843
  %3960 = vmatpush1.msra.mxu0 %v2839
  %3961 = vmatprep.subr.mxu0 %v2844
  %3962 = vmatpush1.msra.mxu0 %v2840
  %3963 = vmatprep.subr.mxu0 %v2845
  %3964 = vmatpush1.msra.mxu0 %v2841
  %3965 = vmatprep.subr.mxu0 %v2846
  %3966 = vmatpush1.msra.mxu0 %v2842
  %3967 = vmatprep.subr.mxu0 %v2847
  %3968 = vmatpush1.msra.mxu0 %v2843
  %3969 = vmatprep.subr.mxu0 %v2848
  %3970 = vmatpush1.msra.mxu0 %v2844
  %3971 = vmatprep.subr.mxu0 %v2849
  %3972 = vmatpush1.msra.mxu0 %v2845
  %3973 = vmatprep.subr.mxu0 0.0
  %3974 = vmatpush1.msra.mxu0 0.0
  %3975 = vmatprep.subr.mxu0 0.0
  %3976 = vmatpush1.msra.mxu0 0.0
  %3977 = vmatprep.subr.mxu0 0.0
  %3978 = vmatpush1.msra.mxu0 0.0
  %3979 = vmatprep.subr.mxu0 0.0
  %3980 = vmatpush1.msra.mxu0 0.0
  %3981 = vmatprep.subr.mxu0 0.0
  %3982 = vmatpush1.msra.mxu0 0.0
  %3983 = vmatprep.subr.mxu0 0.0
  %3984 = vmatpush1.msra.mxu0 0.0
  %3985 = vmatprep.subr.mxu0 0.0
  %3986 = vmatpush1.msra.mxu0 0.0
  %3987 = vmatprep.subr.mxu0 0.0
  %3988 = vmatpush1.msra.mxu0 0.0
  %3989 = vmatprep.subr.mxu0 0.0
  %3990 = vmatpush1.msra.mxu0 0.0
  %3991 = vmatprep.subr.mxu0 0.0
  %3992 = vmatpush1.msra.mxu0 0.0
  %3993 = vmatprep.subr.mxu0 0.0
  %3994 = vmatpush1.msra.mxu0 0.0
  %3995 = vmatprep.subr.mxu0 0.0
  %3996 = vmatpush1.msra.mxu0 0.0
  %3997 = vmatprep.subr.mxu0 0.0
  %3998 = vmatpush1.msra.mxu0 0.0
  %3999 = vmatprep.subr.mxu0 0.0
  %4000 = vmatpush1.msra.mxu0 0.0
  %4001 = vmatprep.subr.mxu0 0.0
  %4002 = vmatpush1.msra.mxu0 0.0
  %4003 = vmatprep.subr.mxu0 0.0
  %4004 = vmatpush1.msra.mxu0 0.0
  %4005 = vmatprep.subr.mxu0 0.0
  %4006 = vmatpush1.msra.mxu0 0.0
  %4007 = vmatprep.subr.mxu0 0.0
  %4008 = vmatpush1.msra.mxu0 0.0
  %4009 = vmatprep.subr.mxu0 0.0
  %4010 = vmatpush1.msra.mxu0 0.0
  %4011 = vmatprep.subr.mxu0 0.0
  %4012 = vmatpush1.msra.mxu0 0.0
  %4013 = vmatprep.mubr.f32.mxu0 0.0
  %4014 = vmatmul.mubr.f32.gmra.mrb[0].mxu0 %v2867
  %v4015 = vpop.f32.mrb[0].mxu0
  %v4016 = vadd.f32 %v2859, %v4015
  %v4017 = vpop.f32.mrb[0].mxu0
  %v4018 = vadd.f32 %v2859, %v4017
  %4019 = vmatprep.mubr.f32.mxu0 0.0
  %4020 = vmatmul.mubr.f32.gmra.mrb[0].mxu0 %v2869
  %v4021 = vpop.f32.mrb[0].mxu0
  %v4022 = vadd.f32 %v2864, %v4021
  %v4023 = vpop.f32.mrb[0].mxu0
  %v4024 = vadd.f32 %v2864, %v4023
  %4025 = vdwg.mxu0
  %4026 = vmatprep.subr.mxu0 %v2846
  %4027 = vmatpush1.msra.mxu0 %v2842
  %4028 = vmatprep.subr.mxu0 %v2847
  %4029 = vmatpush1.msra.mxu0 %v2843
  %4030 = vmatprep.subr.mxu0 %v2848
  %4031 = vmatpush1.msra.mxu0 %v2844
  %4032 = vmatprep.subr.mxu0 %v2849
  %4033 = vmatpush1.msra.mxu0 %v2845
  %4034 = vmatprep.subr.mxu0 %v2850
  %4035 = vmatpush1.msra.mxu0 %v2846
  %4036 = vmatprep.subr.mxu0 %v2851
  %4037 = vmatpush1.msra.mxu0 %v2847
  %4038 = vmatprep.subr.mxu0 %v2852
  %4039 = vmatpush1.msra.mxu0 %v2848
  %4040 = vmatprep.subr.mxu0 %v2853
  %4041 = vmatpush1.msra.mxu0 %v2849
  %4042 = vmatprep.subr.mxu0 0.0
  %4043 = vmatpush1.msra.mxu0 %v2850
  %4044 = vmatprep.subr.mxu0 0.0
  %4045 = vmatpush1.msra.mxu0 %v2851
  %4046 = vmatprep.subr.mxu0 0.0
  %4047 = vmatpush1.msra.mxu0 %v2852
  %4048 = vmatprep.subr.mxu0 0.0
  %4049 = vmatpush1.msra.mxu0 %v2853
  %4050 = vmatprep.subr.mxu0 0.0
  %4051 = vmatpush1.msra.mxu0 0.0
  %4052 = vmatprep.subr.mxu0 0.0
  %4053 = vmatpush1.msra.mxu0 0.0
  %4054 = vmatprep.subr.mxu0 0.0
  %4055 = vmatpush1.msra.mxu0 0.0
  %4056 = vmatprep.subr.mxu0 0.0
  %4057 = vmatpush1.msra.mxu0 0.0
  %4058 = vmatprep.subr.mxu0 0.0
  %4059 = vmatpush1.msra.mxu0 0.0
  %4060 = vmatprep.subr.mxu0 0.0
  %4061 = vmatpush1.msra.mxu0 0.0
  %4062 = vmatprep.subr.mxu0 0.0
  %4063 = vmatpush1.msra.mxu0 0.0
  %4064 = vmatprep.subr.mxu0 0.0
  %4065 = vmatpush1.msra.mxu0 0.0
  %4066 = vmatprep.subr.mxu0 0.0
  %4067 = vmatpush1.msra.mxu0 0.0
  %4068 = vmatprep.subr.mxu0 0.0
  %4069 = vmatpush1.msra.mxu0 0.0
  %4070 = vmatprep.subr.mxu0 0.0
  %4071 = vmatpush1.msra.mxu0 0.0
  %4072 = vmatprep.subr.mxu0 0.0
  %4073 = vmatpush1.msra.mxu0 0.0
  %4074 = vmatprep.subr.mxu0 0.0
  %4075 = vmatpush1.msra.mxu0 0.0
  %4076 = vmatprep.subr.mxu0 0.0
  %4077 = vmatpush1.msra.mxu0 0.0
  %4078 = vmatprep.subr.mxu0 0.0
  %4079 = vmatpush1.msra.mxu0 0.0
  %4080 = vmatprep.subr.mxu0 0.0
  %4081 = vmatpush1.msra.mxu0 0.0
  %4082 = vmatprep.subr.mxu0 0.0
  %4083 = vmatpush1.msra.mxu0 0.0
  %4084 = vmatprep.subr.mxu0 0.0
  %4085 = vmatpush1.msra.mxu0 0.0
  %4086 = vmatprep.subr.mxu0 0.0
  %4087 = vmatpush1.msra.mxu0 0.0
  %4088 = vmatprep.subr.mxu0 0.0
  %4089 = vmatpush1.msra.mxu0 0.0
  %4090 = vmatprep.mubr.f32.mxu0 0.0
  %4091 = vmatmul.mubr.f32.gmra.mrb[0].mxu0 %v2867
  %v4092 = vpop.f32.mrb[0].mxu0
  %v4093 = vadd.f32 %v2859, %v4092
  %v4094 = vpop.f32.mrb[0].mxu0
  %v4095 = vadd.f32 %v2859, %v4094
  %4096 = vmatprep.mubr.f32.mxu0 0.0
  %4097 = vmatmul.mubr.f32.gmra.mrb[0].mxu0 %v2869
  %v4098 = vpop.f32.mrb[0].mxu0
  %v4099 = vadd.f32 %v2864, %v4098
  %v4100 = vpop.f32.mrb[0].mxu0
  %v4101 = vadd.f32 %v2864, %v4100
  %4102 = vdwg.mxu0
  %v4103 = vmul.f32 %v2938, 0.2
  %v4104 = vmul.f32 %v2940, 0.2
  %v4105 = vmul.f32 %v3015, 0.2
  %v4106 = vmul.f32 %v3017, 0.2
  %v4107 = vmul.f32 %v3092, 0.2
  %v4108 = vmul.f32 %v3094, 0.2
  %v4109 = vmul.f32 %v3169, 0.2
  %v4110 = vmul.f32 %v3171, 0.2
  %v4111 = vmul.f32 %v3246, 0.2
  %v4112 = vmul.f32 %v3248, 0.2
  %v4113 = vmul.f32 %v3323, 0.2
  %v4114 = vmul.f32 %v3325, 0.2
  %v4115 = vmul.f32 %v3400, 0.2
  %v4116 = vmul.f32 %v3402, 0.2
  %v4117 = vmul.f32 %v3477, 0.2
  %v4118 = vmul.f32 %v3479, 0.2
  %v4119 = vmul.f32 %v3554, 0.2
  %v4120 = vmul.f32 %v3556, 0.2
  %v4121 = vmul.f32 %v3631, 0.2
  %v4122 = vmul.f32 %v3633, 0.2
  %v4123 = vmul.f32 %v3708, 0.2
  %v4124 = vmul.f32 %v3710, 0.2
  %v4125 = vmul.f32 %v3785, 0.2
  %v4126 = vmul.f32 %v3787, 0.2
  %v4127 = vmul.f32 %v3862, 0.2
  %v4128 = vmul.f32 %v3864, 0.2
  %v4129 = vmul.f32 %v3939, 0.2
  %v4130 = vmul.f32 %v3941, 0.2
  %v4131 = vmul.f32 %v4016, 0.2
  %v4132 = vmul.f32 %v4018, 0.2
  %v4133 = vmul.f32 %v4093, 0.2
  %v4134 = vmul.f32 %v4095, 0.2
  %v4135 = vmul.f32 %v2944, 0.2
  %v4136 = vmul.f32 %v2946, 0.2
  %v4137 = vmul.f32 %v3021, 0.2
  %v4138 = vmul.f32 %v3023, 0.2
  %v4139 = vmul.f32 %v3098, 0.2
  %v4140 = vmul.f32 %v3100, 0.2
  %v4141 = vmul.f32 %v3175, 0.2
  %v4142 = vmul.f32 %v3177, 0.2
  %v4143 = vmul.f32 %v3252, 0.2
  %v4144 = vmul.f32 %v3254, 0.2
  %v4145 = vmul.f32 %v3329, 0.2
  %v4146 = vmul.f32 %v3331, 0.2
  %v4147 = vmul.f32 %v3406, 0.2
  %v4148 = vmul.f32 %v3408, 0.2
  %v4149 = vmul.f32 %v3483, 0.2
  %v4150 = vmul.f32 %v3485, 0.2
  %v4151 = vmul.f32 %v3560, 0.2
  %v4152 = vmul.f32 %v3562, 0.2
  %v4153 = vmul.f32 %v3637, 0.2
  %v4154 = vmul.f32 %v3639, 0.2
  %v4155 = vmul.f32 %v3714, 0.2
  %v4156 = vmul.f32 %v3716, 0.2
  %v4157 = vmul.f32 %v3791, 0.2
  %v4158 = vmul.f32 %v3793, 0.2
  %v4159 = vmul.f32 %v3868, 0.2
  %v4160 = vmul.f32 %v3870, 0.2
  %v4161 = vmul.f32 %v3945, 0.2
  %v4162 = vmul.f32 %v3947, 0.2
  %v4163 = vmul.f32 %v4022, 0.2
  %v4164 = vmul.f32 %v4024, 0.2
  %v4165 = vmul.f32 %v4099, 0.2
  %v4166 = vmul.f32 %v4101, 0.2
  %v4167 = vmax.f32 %v2938, %v4103
  %v4168 = vmax.f32 %v2940, %v4104
  %v4169 = vmax.f32 %v3015, %v4105
  %v4170 = vmax.f32 %v3017, %v4106
  %v4171 = vmax.f32 %v3092, %v4107
  %v4172 = vmax.f32 %v3094, %v4108
  %v4173 = vmax.f32 %v3169, %v4109
  %v4174 = vmax.f32 %v3171, %v4110
  %v4175 = vmax.f32 %v3246, %v4111
  %v4176 = vmax.f32 %v3248, %v4112
  %v4177 = vmax.f32 %v3323, %v4113
  %v4178 = vmax.f32 %v3325, %v4114
  %v4179 = vmax.f32 %v3400, %v4115
  %v4180 = vmax.f32 %v3402, %v4116
  %v4181 = vmax.f32 %v3477, %v4117
  %v4182 = vmax.f32 %v3479, %v4118
  %v4183 = vmax.f32 %v3554, %v4119
  %v4184 = vmax.f32 %v3556, %v4120
  %v4185 = vmax.f32 %v3631, %v4121
  %v4186 = vmax.f32 %v3633, %v4122
  %v4187 = vmax.f32 %v3708, %v4123
  %v4188 = vmax.f32 %v3710, %v4124
  %v4189 = vmax.f32 %v3785, %v4125
  %v4190 = vmax.f32 %v3787, %v4126
  %v4191 = vmax.f32 %v3862, %v4127
  %v4192 = vmax.f32 %v3864, %v4128
  %v4193 = vmax.f32 %v3939, %v4129
  %v4194 = vmax.f32 %v3941, %v4130
  %v4195 = vmax.f32 %v4016, %v4131
  %v4196 = vmax.f32 %v4018, %v4132
  %v4197 = vmax.f32 %v4093, %v4133
  %v4198 = vmax.f32 %v4095, %v4134
  %v4199 = vmax.f32 %v2944, %v4135
  %v4200 = vmax.f32 %v2946, %v4136
  %v4201 = vmax.f32 %v3021, %v4137
  %v4202 = vmax.f32 %v3023, %v4138
  %v4203 = vmax.f32 %v3098, %v4139
  %v4204 = vmax.f32 %v3100, %v4140
  %v4205 = vmax.f32 %v3175, %v4141
  %v4206 = vmax.f32 %v3177, %v4142
  %v4207 = vmax.f32 %v3252, %v4143
  %v4208 = vmax.f32 %v3254, %v4144
  %v4209 = vmax.f32 %v3329, %v4145
  %v4210 = vmax.f32 %v3331, %v4146
  %v4211 = vmax.f32 %v3406, %v4147
  %v4212 = vmax.f32 %v3408, %v4148
  %v4213 = vmax.f32 %v3483, %v4149
  %v4214 = vmax.f32 %v3485, %v4150
  %v4215 = vmax.f32 %v3560, %v4151
  %v4216 = vmax.f32 %v3562, %v4152
  %v4217 = vmax.f32 %v3637, %v4153
  %v4218 = vmax.f32 %v3639, %v4154
  %v4219 = vmax.f32 %v3714, %v4155
  %v4220 = vmax.f32 %v3716, %v4156
  %v4221 = vmax.f32 %v3791, %v4157
  %v4222 = vmax.f32 %v3793, %v4158
  %v4223 = vmax.f32 %v3868, %v4159
  %v4224 = vmax.f32 %v3870, %v4160
  %v4225 = vmax.f32 %v3945, %v4161
  %v4226 = vmax.f32 %v3947, %v4162
  %v4227 = vmax.f32 %v4022, %v4163
  %v4228 = vmax.f32 %v4024, %v4164
  %v4229 = vmax.f32 %v4099, %v4165
  %v4230 = vmax.f32 %v4101, %v4166
  %v4231 = vmax.f32 %v4167, %v4168
  %v4232 = vmax.f32 %v4199, %v4200
  %v4233 = vmax.f32 %v4169, %v4170
  %v4234 = vmax.f32 %v4201, %v4202
  %v4235 = vmax.f32 %v4171, %v4172
  %v4236 = vmax.f32 %v4203, %v4204
  %v4237 = vmax.f32 %v4173, %v4174
  %v4238 = vmax.f32 %v4205, %v4206
  %v4239 = vmax.f32 %v4175, %v4176
  %v4240 = vmax.f32 %v4207, %v4208
  %v4241 = vmax.f32 %v4177, %v4178
  %v4242 = vmax.f32 %v4209, %v4210
  %v4243 = vmax.f32 %v4179, %v4180
  %v4244 = vmax.f32 %v4211, %v4212
  %v4245 = vmax.f32 %v4181, %v4182
  %v4246 = vmax.f32 %v4213, %v4214
  %v4247 = vmax.f32 %v4183, %v4184
  %v4248 = vmax.f32 %v4215, %v4216
  %v4249 = vmax.f32 %v4185, %v4186
  %v4250 = vmax.f32 %v4217, %v4218
  %v4251 = vmax.f32 %v4187, %v4188
  %v4252 = vmax.f32 %v4219, %v4220
  %v4253 = vmax.f32 %v4189, %v4190
  %v4254 = vmax.f32 %v4221, %v4222
  %v4255 = vmax.f32 %v4191, %v4192
  %v4256 = vmax.f32 %v4223, %v4224
  %v4257 = vmax.f32 %v4193, %v4194
  %v4258 = vmax.f32 %v4225, %v4226
  %v4259 = vmax.f32 %v4195, %v4196
  %v4260 = vmax.f32 %v4227, %v4228
  %v4261 = vmax.f32 %v4197, %v4198
  %v4262 = vmax.f32 %v4229, %v4230
  %v4263 = vld [vmem:[%s0 + $0x30] sm:$0xff]
  %v4264 = vld [vmem:[%s0 + $0x38] sm:$0xff]
  %v4265 = vld [vmem:[%s0 + $0x40] sm:$0xff]
  %v4266 = vld [vmem:[%s0 + $0x48] sm:$0xff]
  %v4267 = vld [vmem:[%s0 + $0x50] sm:$0xff]
  %v4268 = vld [vmem:[%s0 + $0x58] sm:$0xff]
  %v4269 = vld [vmem:[%s0 + $0x60] sm:$0xff]
  %v4270 = vld [vmem:[%s0 + $0x68] sm:$0xff]
  %4272 = vset.pattern.permute.xlu0 12
  %4273 = vperm.xlu0 %4272, %v4263
  %v4274 = vpop.permute.xlu0 %4273
  %4277 = vset.pattern.permute.xlu0 12
  %4278 = vperm.xlu0 %4277, %v4264
  %v4279 = vpop.permute.xlu0 %4278
  %4282 = vset.pattern.permute.xlu0 12
  %4283 = vperm.xlu0 %4282, %v4265
  %v4284 = vpop.permute.xlu0 %4283
  %4287 = vset.pattern.permute.xlu0 12
  %4288 = vperm.xlu0 %4287, %v4266
  %v4289 = vpop.permute.xlu0 %4288
  %4292 = vset.pattern.permute.xlu0 12
  %4293 = vperm.xlu0 %4292, %v4267
  %v4294 = vpop.permute.xlu0 %4293
  %4297 = vset.pattern.permute.xlu0 12
  %4298 = vperm.xlu0 %4297, %v4268
  %v4299 = vpop.permute.xlu0 %4298
  %4302 = vset.pattern.permute.xlu0 12
  %4303 = vperm.xlu0 %4302, %v4269
  %v4304 = vpop.permute.xlu0 %4303
  %4307 = vset.pattern.permute.xlu0 12
  %4308 = vperm.xlu0 %4307, %v4270
  %v4309 = vpop.permute.xlu0 %4308
  %vm4311 = vcmask 97280
  %v4312 = vsel %vm4311, %v4263, 0
  %v4314 = vsel %vm4311, %v4264, 0
  %v4316 = vsel %vm4311, %v4265, 0
  %v4318 = vsel %vm4311, %v4266, 0
  %v4320 = vsel %vm4311, %v4267, 0
  %v4322 = vsel %vm4311, %v4268, 0
  %v4324 = vsel %vm4311, %v4269, 0
  %v4326 = vsel %vm4311, %v4270, 0
  %vm4328 = vcmask 1043456
  %v4330 = vsel %vm4328, %v4232, 0
  %v4333 = vsel %vm4328, %v4234, 0
  %v4336 = vsel %vm4328, %v4236, 0
  %v4339 = vsel %vm4328, %v4238, 0
  %v4342 = vsel %vm4328, %v4240, 0
  %v4345 = vsel %vm4328, %v4242, 0
  %v4348 = vsel %vm4328, %v4244, 0
  %v4351 = vsel %vm4328, %v4246, 0
  %v4354 = vsel %vm4328, %v4248, 0
  %v4357 = vsel %vm4328, %v4250, 0
  %v4360 = vsel %vm4328, %v4252, 0
  %v4363 = vsel %vm4328, %v4254, 0
  %v4366 = vsel %vm4328, %v4256, 0
  %v4369 = vsel %vm4328, %v4258, 0
  %v4372 = vsel %vm4328, %v4260, 0
  %v4375 = vsel %vm4328, %v4262, 0
  %4377 = vmatprep.subr.mxu0 %v4233
  %4378 = vmatpush1.msra.mxu0 %v4231
  %4379 = vmatprep.subr.mxu0 %v4333
  %4380 = vmatpush1.msra.mxu0 %v4330
  %4381 = vmatprep.subr.mxu0 0.0
  %4382 = vmatpush1.msra.mxu0 0.0
  %4383 = vmatprep.subr.mxu0 0.0
  %4384 = vmatpush1.msra.mxu0 0.0
  %4385 = vmatprep.subr.mxu0 0.0
  %4386 = vmatpush1.msra.mxu0 0.0
  %4387 = vmatprep.subr.mxu0 0.0
  %4388 = vmatpush1.msra.mxu0 0.0
  %4389 = vmatprep.subr.mxu0 0.0
  %4390 = vmatpush1.msra.mxu0 0.0
  %4391 = vmatprep.subr.mxu0 0.0
  %4392 = vmatpush1.msra.mxu0 0.0
  %4393 = vmatprep.subr.mxu0 0.0
  %4394 = vmatpush1.msra.mxu0 0.0
  %4395 = vmatprep.subr.mxu0 0.0
  %4396 = vmatpush1.msra.mxu0 0.0
  %4397 = vmatprep.subr.mxu0 0.0
  %4398 = vmatpush1.msra.mxu0 0.0
  %4399 = vmatprep.subr.mxu0 0.0
  %4400 = vmatpush1.msra.mxu0 0.0
  %4401 = vmatprep.subr.mxu0 0.0
  %4402 = vmatpush1.msra.mxu0 0.0
  %4403 = vmatprep.subr.mxu0 0.0
  %4404 = vmatpush1.msra.mxu0 0.0
  %4405 = vmatprep.subr.mxu0 0.0
  %4406 = vmatpush1.msra.mxu0 0.0
  %4407 = vmatprep.subr.mxu0 0.0
  %4408 = vmatpush1.msra.mxu0 0.0
  %4409 = vmatprep.subr.mxu0 0.0
  %4410 = vmatpush1.msra.mxu0 0.0
  %4411 = vmatprep.subr.mxu0 0.0
  %4412 = vmatpush1.msra.mxu0 0.0
  %4413 = vmatprep.subr.mxu0 0.0
  %4414 = vmatpush1.msra.mxu0 0.0
  %4415 = vmatprep.subr.mxu0 0.0
  %4416 = vmatpush1.msra.mxu0 0.0
  %4417 = vmatprep.subr.mxu0 0.0
  %4418 = vmatpush1.msra.mxu0 0.0
  %4419 = vmatprep.subr.mxu0 0.0
  %4420 = vmatpush1.msra.mxu0 0.0
  %4421 = vmatprep.subr.mxu0 0.0
  %4422 = vmatpush1.msra.mxu0 0.0
  %4423 = vmatprep.subr.mxu0 0.0
  %4424 = vmatpush1.msra.mxu0 0.0
  %4425 = vmatprep.subr.mxu0 0.0
  %4426 = vmatpush1.msra.mxu0 0.0
  %4427 = vmatprep.subr.mxu0 0.0
  %4428 = vmatpush1.msra.mxu0 0.0
  %4429 = vmatprep.subr.mxu0 0.0
  %4430 = vmatpush1.msra.mxu0 0.0
  %4431 = vmatprep.subr.mxu0 0.0
  %4432 = vmatpush1.msra.mxu0 0.0
  %4433 = vmatprep.subr.mxu0 0.0
  %4434 = vmatpush1.msra.mxu0 0.0
  %4435 = vmatprep.subr.mxu0 0.0
  %4436 = vmatpush1.msra.mxu0 0.0
  %4437 = vmatprep.subr.mxu0 0.0
  %4438 = vmatpush1.msra.mxu0 0.0
  %4439 = vmatprep.subr.mxu0 0.0
  %4440 = vmatpush1.msra.mxu0 0.0
  %4441 = vmatprep.mubr.f32.mxu0 0.0
  %4442 = vmatmul.mubr.f32.gmra.mrb[0].mxu0 %v4312
  %v4443 = vpop.f32.mrb[0].mxu0
  %v4444 = vadd.f32 %v4274, %v4443
  %v4445 = vpop.f32.mrb[0].mxu0
  %v4446 = vadd.f32 %v4274, %v4445
  %4447 = vmatprep.mubr.f32.mxu0 0.0
  %4448 = vmatmul.mubr.f32.gmra.mrb[0].mxu0 %v4314
  %v4449 = vpop.f32.mrb[0].mxu0
  %v4450 = vadd.f32 %v4279, %v4449
  %v4451 = vpop.f32.mrb[0].mxu0
  %v4452 = vadd.f32 %v4279, %v4451
  %4453 = vmatprep.mubr.f32.mxu0 0.0
  %4454 = vmatmul.mubr.f32.gmra.mrb[0].mxu0 %v4316
  %v4455 = vpop.f32.mrb[0].mxu0
  %v4456 = vadd.f32 %v4284, %v4455
  %v4457 = vpop.f32.mrb[0].mxu0
  %v4458 = vadd.f32 %v4284, %v4457
  %4459 = vmatprep.mubr.f32.mxu0 0.0
  %4460 = vmatmul.mubr.f32.gmra.mrb[0].mxu0 %v4318
  %v4461 = vpop.f32.mrb[0].mxu0
  %v4462 = vadd.f32 %v4289, %v4461
  %v4463 = vpop.f32.mrb[0].mxu0
  %v4464 = vadd.f32 %v4289, %v4463
  %4465 = vmatprep.mubr.f32.mxu0 0.0
  %4466 = vmatmul.mubr.f32.gmra.mrb[0].mxu0 %v4320
  %v4467 = vpop.f32.mrb[0].mxu0
  %v4468 = vadd.f32 %v4294, %v4467
  %v4469 = vpop.f32.mrb[0].mxu0
  %v4470 = vadd.f32 %v4294, %v4469
  %4471 = vmatprep.mubr.f32.mxu0 0.0
  %4472 = vmatmul.mubr.f32.gmra.mrb[0].mxu0 %v4322
  %v4473 = vpop.f32.mrb[0].mxu0
  %v4474 = vadd.f32 %v4299, %v4473
  %v4475 = vpop.f32.mrb[0].mxu0
  %v4476 = vadd.f32 %v4299, %v4475
  %4477 = vmatprep.mubr.f32.mxu0 0.0
  %4478 = vmatmul.mubr.f32.gmra.mrb[0].mxu0 %v4324
  %v4479 = vpop.f32.mrb[0].mxu0
  %v4480 = vadd.f32 %v4304, %v4479
  %v4481 = vpop.f32.mrb[0].mxu0
  %v4482 = vadd.f32 %v4304, %v4481
  %4483 = vmatprep.mubr.f32.mxu0 0.0
  %4484 = vmatmul.mubr.f32.gmra.mrb[0].mxu0 %v4326
  %v4485 = vpop.f32.mrb[0].mxu0
  %v4486 = vadd.f32 %v4309, %v4485
  %v4487 = vpop.f32.mrb[0].mxu0
  %v4488 = vadd.f32 %v4309, %v4487
  %4489 = vdwg.mxu0
  %4490 = vmatprep.subr.mxu0 %v4237
  %4491 = vmatpush1.msra.mxu0 %v4235
  %4492 = vmatprep.subr.mxu0 %v4339
  %4493 = vmatpush1.msra.mxu0 %v4336
  %4494 = vmatprep.subr.mxu0 0.0
  %4495 = vmatpush1.msra.mxu0 0.0
  %4496 = vmatprep.subr.mxu0 0.0
  %4497 = vmatpush1.msra.mxu0 0.0
  %4498 = vmatprep.subr.mxu0 0.0
  %4499 = vmatpush1.msra.mxu0 0.0
  %4500 = vmatprep.subr.mxu0 0.0
  %4501 = vmatpush1.msra.mxu0 0.0
  %4502 = vmatprep.subr.mxu0 0.0
  %4503 = vmatpush1.msra.mxu0 0.0
  %4504 = vmatprep.subr.mxu0 0.0
  %4505 = vmatpush1.msra.mxu0 0.0
  %4506 = vmatprep.subr.mxu0 0.0
  %4507 = vmatpush1.msra.mxu0 0.0
  %4508 = vmatprep.subr.mxu0 0.0
  %4509 = vmatpush1.msra.mxu0 0.0
  %4510 = vmatprep.subr.mxu0 0.0
  %4511 = vmatpush1.msra.mxu0 0.0
  %4512 = vmatprep.subr.mxu0 0.0
  %4513 = vmatpush1.msra.mxu0 0.0
  %4514 = vmatprep.subr.mxu0 0.0
  %4515 = vmatpush1.msra.mxu0 0.0
  %4516 = vmatprep.subr.mxu0 0.0
  %4517 = vmatpush1.msra.mxu0 0.0
  %4518 = vmatprep.subr.mxu0 0.0
  %4519 = vmatpush1.msra.mxu0 0.0
  %4520 = vmatprep.subr.mxu0 0.0
  %4521 = vmatpush1.msra.mxu0 0.0
  %4522 = vmatprep.subr.mxu0 0.0
  %4523 = vmatpush1.msra.mxu0 0.0
  %4524 = vmatprep.subr.mxu0 0.0
  %4525 = vmatpush1.msra.mxu0 0.0
  %4526 = vmatprep.subr.mxu0 0.0
  %4527 = vmatpush1.msra.mxu0 0.0
  %4528 = vmatprep.subr.mxu0 0.0
  %4529 = vmatpush1.msra.mxu0 0.0
  %4530 = vmatprep.subr.mxu0 0.0
  %4531 = vmatpush1.msra.mxu0 0.0
  %4532 = vmatprep.subr.mxu0 0.0
  %4533 = vmatpush1.msra.mxu0 0.0
  %4534 = vmatprep.subr.mxu0 0.0
  %4535 = vmatpush1.msra.mxu0 0.0
  %4536 = vmatprep.subr.mxu0 0.0
  %4537 = vmatpush1.msra.mxu0 0.0
  %4538 = vmatprep.subr.mxu0 0.0
  %4539 = vmatpush1.msra.mxu0 0.0
  %4540 = vmatprep.subr.mxu0 0.0
  %4541 = vmatpush1.msra.mxu0 0.0
  %4542 = vmatprep.subr.mxu0 0.0
  %4543 = vmatpush1.msra.mxu0 0.0
  %4544 = vmatprep.subr.mxu0 0.0
  %4545 = vmatpush1.msra.mxu0 0.0
  %4546 = vmatprep.subr.mxu0 0.0
  %4547 = vmatpush1.msra.mxu0 0.0
  %4548 = vmatprep.subr.mxu0 0.0
  %4549 = vmatpush1.msra.mxu0 0.0
  %4550 = vmatprep.subr.mxu0 0.0
  %4551 = vmatpush1.msra.mxu0 0.0
  %4552 = vmatprep.subr.mxu0 0.0
  %4553 = vmatpush1.msra.mxu0 0.0
  %4554 = vmatprep.mubr.f32.mxu0 0.0
  %4555 = vmatmul.mubr.f32.gmra.mrb[0].mxu0 %v4312
  %v4556 = vpop.f32.mrb[0].mxu0
  %v4557 = vadd.f32 %v4274, %v4556
  %v4558 = vpop.f32.mrb[0].mxu0
  %v4559 = vadd.f32 %v4274, %v4558
  %4560 = vmatprep.mubr.f32.mxu0 0.0
  %4561 = vmatmul.mubr.f32.gmra.mrb[0].mxu0 %v4314
  %v4562 = vpop.f32.mrb[0].mxu0
  %v4563 = vadd.f32 %v4279, %v4562
  %v4564 = vpop.f32.mrb[0].mxu0
  %v4565 = vadd.f32 %v4279, %v4564
  %4566 = vmatprep.mubr.f32.mxu0 0.0
  %4567 = vmatmul.mubr.f32.gmra.mrb[0].mxu0 %v4316
  %v4568 = vpop.f32.mrb[0].mxu0
  %v4569 = vadd.f32 %v4284, %v4568
  %v4570 = vpop.f32.mrb[0].mxu0
  %v4571 = vadd.f32 %v4284, %v4570
  %4572 = vmatprep.mubr.f32.mxu0 0.0
  %4573 = vmatmul.mubr.f32.gmra.mrb[0].mxu0 %v4318
  %v4574 = vpop.f32.mrb[0].mxu0
  %v4575 = vadd.f32 %v4289, %v4574
  %v4576 = vpop.f32.mrb[0].mxu0
  %v4577 = vadd.f32 %v4289, %v4576
  %4578 = vmatprep.mubr.f32.mxu0 0.0
  %4579 = vmatmul.mubr.f32.gmra.mrb[0].mxu0 %v4320
  %v4580 = vpop.f32.mrb[0].mxu0
  %v4581 = vadd.f32 %v4294, %v4580
  %v4582 = vpop.f32.mrb[0].mxu0
  %v4583 = vadd.f32 %v4294, %v4582
  %4584 = vmatprep.mubr.f32.mxu0 0.0
  %4585 = vmatmul.mubr.f32.gmra.mrb[0].mxu0 %v4322
  %v4586 = vpop.f32.mrb[0].mxu0
  %v4587 = vadd.f32 %v4299, %v4586
  %v4588 = vpop.f32.mrb[0].mxu0
  %v4589 = vadd.f32 %v4299, %v4588
  %4590 = vmatprep.mubr.f32.mxu0 0.0
  %4591 = vmatmul.mubr.f32.gmra.mrb[0].mxu0 %v4324
  %v4592 = vpop.f32.mrb[0].mxu0
  %v4593 = vadd.f32 %v4304, %v4592
  %v4594 = vpop.f32.mrb[0].mxu0
  %v4595 = vadd.f32 %v4304, %v4594
  %4596 = vmatprep.mubr.f32.mxu0 0.0
  %4597 = vmatmul.mubr.f32.gmra.mrb[0].mxu0 %v4326
  %v4598 = vpop.f32.mrb[0].mxu0
  %v4599 = vadd.f32 %v4309, %v4598
  %v4600 = vpop.f32.mrb[0].mxu0
  %v4601 = vadd.f32 %v4309, %v4600
  %4602 = vdwg.mxu0
  %4603 = vmatprep.subr.mxu0 %v4241
  %4604 = vmatpush1.msra.mxu0 %v4239
  %4605 = vmatprep.subr.mxu0 %v4345
  %4606 = vmatpush1.msra.mxu0 %v4342
  %4607 = vmatprep.subr.mxu0 0.0
  %4608 = vmatpush1.msra.mxu0 0.0
  %4609 = vmatprep.subr.mxu0 0.0
  %4610 = vmatpush1.msra.mxu0 0.0
  %4611 = vmatprep.subr.mxu0 0.0
  %4612 = vmatpush1.msra.mxu0 0.0
  %4613 = vmatprep.subr.mxu0 0.0
  %4614 = vmatpush1.msra.mxu0 0.0
  %4615 = vmatprep.subr.mxu0 0.0
  %4616 = vmatpush1.msra.mxu0 0.0
  %4617 = vmatprep.subr.mxu0 0.0
  %4618 = vmatpush1.msra.mxu0 0.0
  %4619 = vmatprep.subr.mxu0 0.0
  %4620 = vmatpush1.msra.mxu0 0.0
  %4621 = vmatprep.subr.mxu0 0.0
  %4622 = vmatpush1.msra.mxu0 0.0
  %4623 = vmatprep.subr.mxu0 0.0
  %4624 = vmatpush1.msra.mxu0 0.0
  %4625 = vmatprep.subr.mxu0 0.0
  %4626 = vmatpush1.msra.mxu0 0.0
  %4627 = vmatprep.subr.mxu0 0.0
  %4628 = vmatpush1.msra.mxu0 0.0
  %4629 = vmatprep.subr.mxu0 0.0
  %4630 = vmatpush1.msra.mxu0 0.0
  %4631 = vmatprep.subr.mxu0 0.0
  %4632 = vmatpush1.msra.mxu0 0.0
  %4633 = vmatprep.subr.mxu0 0.0
  %4634 = vmatpush1.msra.mxu0 0.0
  %4635 = vmatprep.subr.mxu0 0.0
  %4636 = vmatpush1.msra.mxu0 0.0
  %4637 = vmatprep.subr.mxu0 0.0
  %4638 = vmatpush1.msra.mxu0 0.0
  %4639 = vmatprep.subr.mxu0 0.0
  %4640 = vmatpush1.msra.mxu0 0.0
  %4641 = vmatprep.subr.mxu0 0.0
  %4642 = vmatpush1.msra.mxu0 0.0
  %4643 = vmatprep.subr.mxu0 0.0
  %4644 = vmatpush1.msra.mxu0 0.0
  %4645 = vmatprep.subr.mxu0 0.0
  %4646 = vmatpush1.msra.mxu0 0.0
  %4647 = vmatprep.subr.mxu0 0.0
  %4648 = vmatpush1.msra.mxu0 0.0
  %4649 = vmatprep.subr.mxu0 0.0
  %4650 = vmatpush1.msra.mxu0 0.0
  %4651 = vmatprep.subr.mxu0 0.0
  %4652 = vmatpush1.msra.mxu0 0.0
  %4653 = vmatprep.subr.mxu0 0.0
  %4654 = vmatpush1.msra.mxu0 0.0
  %4655 = vmatprep.subr.mxu0 0.0
  %4656 = vmatpush1.msra.mxu0 0.0
  %4657 = vmatprep.subr.mxu0 0.0
  %4658 = vmatpush1.msra.mxu0 0.0
  %4659 = vmatprep.subr.mxu0 0.0
  %4660 = vmatpush1.msra.mxu0 0.0
  %4661 = vmatprep.subr.mxu0 0.0
  %4662 = vmatpush1.msra.mxu0 0.0
  %4663 = vmatprep.subr.mxu0 0.0
  %4664 = vmatpush1.msra.mxu0 0.0
  %4665 = vmatprep.subr.mxu0 0.0
  %4666 = vmatpush1.msra.mxu0 0.0
  %4667 = vmatprep.mubr.f32.mxu0 0.0
  %4668 = vmatmul.mubr.f32.gmra.mrb[0].mxu0 %v4312
  %v4669 = vpop.f32.mrb[0].mxu0
  %v4670 = vadd.f32 %v4274, %v4669
  %v4671 = vpop.f32.mrb[0].mxu0
  %v4672 = vadd.f32 %v4274, %v4671
  %4673 = vmatprep.mubr.f32.mxu0 0.0
  %4674 = vmatmul.mubr.f32.gmra.mrb[0].mxu0 %v4314
  %v4675 = vpop.f32.mrb[0].mxu0
  %v4676 = vadd.f32 %v4279, %v4675
  %v4677 = vpop.f32.mrb[0].mxu0
  %v4678 = vadd.f32 %v4279, %v4677
  %4679 = vmatprep.mubr.f32.mxu0 0.0
  %4680 = vmatmul.mubr.f32.gmra.mrb[0].mxu0 %v4316
  %v4681 = vpop.f32.mrb[0].mxu0
  %v4682 = vadd.f32 %v4284, %v4681
  %v4683 = vpop.f32.mrb[0].mxu0
  %v4684 = vadd.f32 %v4284, %v4683
  %4685 = vmatprep.mubr.f32.mxu0 0.0
  %4686 = vmatmul.mubr.f32.gmra.mrb[0].mxu0 %v4318
  %v4687 = vpop.f32.mrb[0].mxu0
  %v4688 = vadd.f32 %v4289, %v4687
  %v4689 = vpop.f32.mrb[0].mxu0
  %v4690 = vadd.f32 %v4289, %v4689
  %4691 = vmatprep.mubr.f32.mxu0 0.0
  %4692 = vmatmul.mubr.f32.gmra.mrb[0].mxu0 %v4320
  %v4693 = vpop.f32.mrb[0].mxu0
  %v4694 = vadd.f32 %v4294, %v4693
  %v4695 = vpop.f32.mrb[0].mxu0
  %v4696 = vadd.f32 %v4294, %v4695
  %4697 = vmatprep.mubr.f32.mxu0 0.0
  %4698 = vmatmul.mubr.f32.gmra.mrb[0].mxu0 %v4322
  %v4699 = vpop.f32.mrb[0].mxu0
  %v4700 = vadd.f32 %v4299, %v4699
  %v4701 = vpop.f32.mrb[0].mxu0
  %v4702 = vadd.f32 %v4299, %v4701
  %4703 = vmatprep.mubr.f32.mxu0 0.0
  %4704 = vmatmul.mubr.f32.gmra.mrb[0].mxu0 %v4324
  %v4705 = vpop.f32.mrb[0].mxu0
  %v4706 = vadd.f32 %v4304, %v4705
  %v4707 = vpop.f32.mrb[0].mxu0
  %v4708 = vadd.f32 %v4304, %v4707
  %4709 = vmatprep.mubr.f32.mxu0 0.0
  %4710 = vmatmul.mubr.f32.gmra.mrb[0].mxu0 %v4326
  %v4711 = vpop.f32.mrb[0].mxu0
  %v4712 = vadd.f32 %v4309, %v4711
  %v4713 = vpop.f32.mrb[0].mxu0
  %v4714 = vadd.f32 %v4309, %v4713
  %4715 = vdwg.mxu0
  %4716 = vmatprep.subr.mxu0 %v4245
  %4717 = vmatpush1.msra.mxu0 %v4243
  %4718 = vmatprep.subr.mxu0 %v4351
  %4719 = vmatpush1.msra.mxu0 %v4348
  %4720 = vmatprep.subr.mxu0 0.0
  %4721 = vmatpush1.msra.mxu0 0.0
  %4722 = vmatprep.subr.mxu0 0.0
  %4723 = vmatpush1.msra.mxu0 0.0
  %4724 = vmatprep.subr.mxu0 0.0
  %4725 = vmatpush1.msra.mxu0 0.0
  %4726 = vmatprep.subr.mxu0 0.0
  %4727 = vmatpush1.msra.mxu0 0.0
  %4728 = vmatprep.subr.mxu0 0.0
  %4729 = vmatpush1.msra.mxu0 0.0
  %4730 = vmatprep.subr.mxu0 0.0
  %4731 = vmatpush1.msra.mxu0 0.0
  %4732 = vmatprep.subr.mxu0 0.0
  %4733 = vmatpush1.msra.mxu0 0.0
  %4734 = vmatprep.subr.mxu0 0.0
  %4735 = vmatpush1.msra.mxu0 0.0
  %4736 = vmatprep.subr.mxu0 0.0
  %4737 = vmatpush1.msra.mxu0 0.0
  %4738 = vmatprep.subr.mxu0 0.0
  %4739 = vmatpush1.msra.mxu0 0.0
  %4740 = vmatprep.subr.mxu0 0.0
  %4741 = vmatpush1.msra.mxu0 0.0
  %4742 = vmatprep.subr.mxu0 0.0
  %4743 = vmatpush1.msra.mxu0 0.0
  %4744 = vmatprep.subr.mxu0 0.0
  %4745 = vmatpush1.msra.mxu0 0.0
  %4746 = vmatprep.subr.mxu0 0.0
  %4747 = vmatpush1.msra.mxu0 0.0
  %4748 = vmatprep.subr.mxu0 0.0
  %4749 = vmatpush1.msra.mxu0 0.0
  %4750 = vmatprep.subr.mxu0 0.0
  %4751 = vmatpush1.msra.mxu0 0.0
  %4752 = vmatprep.subr.mxu0 0.0
  %4753 = vmatpush1.msra.mxu0 0.0
  %4754 = vmatprep.subr.mxu0 0.0
  %4755 = vmatpush1.msra.mxu0 0.0
  %4756 = vmatprep.subr.mxu0 0.0
  %4757 = vmatpush1.msra.mxu0 0.0
  %4758 = vmatprep.subr.mxu0 0.0
  %4759 = vmatpush1.msra.mxu0 0.0
  %4760 = vmatprep.subr.mxu0 0.0
  %4761 = vmatpush1.msra.mxu0 0.0
  %4762 = vmatprep.subr.mxu0 0.0
  %4763 = vmatpush1.msra.mxu0 0.0
  %4764 = vmatprep.subr.mxu0 0.0
  %4765 = vmatpush1.msra.mxu0 0.0
  %4766 = vmatprep.subr.mxu0 0.0
  %4767 = vmatpush1.msra.mxu0 0.0
  %4768 = vmatprep.subr.mxu0 0.0
  %4769 = vmatpush1.msra.mxu0 0.0
  %4770 = vmatprep.subr.mxu0 0.0
  %4771 = vmatpush1.msra.mxu0 0.0
  %4772 = vmatprep.subr.mxu0 0.0
  %4773 = vmatpush1.msra.mxu0 0.0
  %4774 = vmatprep.subr.mxu0 0.0
  %4775 = vmatpush1.msra.mxu0 0.0
  %4776 = vmatprep.subr.mxu0 0.0
  %4777 = vmatpush1.msra.mxu0 0.0
  %4778 = vmatprep.subr.mxu0 0.0
  %4779 = vmatpush1.msra.mxu0 0.0
  %4780 = vmatprep.mubr.f32.mxu0 0.0
  %4781 = vmatmul.mubr.f32.gmra.mrb[0].mxu0 %v4312
  %v4782 = vpop.f32.mrb[0].mxu0
  %v4783 = vadd.f32 %v4274, %v4782
  %v4784 = vpop.f32.mrb[0].mxu0
  %v4785 = vadd.f32 %v4274, %v4784
  %4786 = vmatprep.mubr.f32.mxu0 0.0
  %4787 = vmatmul.mubr.f32.gmra.mrb[0].mxu0 %v4314
  %v4788 = vpop.f32.mrb[0].mxu0
  %v4789 = vadd.f32 %v4279, %v4788
  %v4790 = vpop.f32.mrb[0].mxu0
  %v4791 = vadd.f32 %v4279, %v4790
  %4792 = vmatprep.mubr.f32.mxu0 0.0
  %4793 = vmatmul.mubr.f32.gmra.mrb[0].mxu0 %v4316
  %v4794 = vpop.f32.mrb[0].mxu0
  %v4795 = vadd.f32 %v4284, %v4794
  %v4796 = vpop.f32.mrb[0].mxu0
  %v4797 = vadd.f32 %v4284, %v4796
  %4798 = vmatprep.mubr.f32.mxu0 0.0
  %4799 = vmatmul.mubr.f32.gmra.mrb[0].mxu0 %v4318
  %v4800 = vpop.f32.mrb[0].mxu0
  %v4801 = vadd.f32 %v4289, %v4800
  %v4802 = vpop.f32.mrb[0].mxu0
  %v4803 = vadd.f32 %v4289, %v4802
  %4804 = vmatprep.mubr.f32.mxu0 0.0
  %4805 = vmatmul.mubr.f32.gmra.mrb[0].mxu0 %v4320
  %v4806 = vpop.f32.mrb[0].mxu0
  %v4807 = vadd.f32 %v4294, %v4806
  %v4808 = vpop.f32.mrb[0].mxu0
  %v4809 = vadd.f32 %v4294, %v4808
  %4810 = vmatprep.mubr.f32.mxu0 0.0
  %4811 = vmatmul.mubr.f32.gmra.mrb[0].mxu0 %v4322
  %v4812 = vpop.f32.mrb[0].mxu0
  %v4813 = vadd.f32 %v4299, %v4812
  %v4814 = vpop.f32.mrb[0].mxu0
  %v4815 = vadd.f32 %v4299, %v4814
  %4816 = vmatprep.mubr.f32.mxu0 0.0
  %4817 = vmatmul.mubr.f32.gmra.mrb[0].mxu0 %v4324
  %v4818 = vpop.f32.mrb[0].mxu0
  %v4819 = vadd.f32 %v4304, %v4818
  %v4820 = vpop.f32.mrb[0].mxu0
  %v4821 = vadd.f32 %v4304, %v4820
  %4822 = vmatprep.mubr.f32.mxu0 0.0
  %4823 = vmatmul.mubr.f32.gmra.mrb[0].mxu0 %v4326
  %v4824 = vpop.f32.mrb[0].mxu0
  %v4825 = vadd.f32 %v4309, %v4824
  %v4826 = vpop.f32.mrb[0].mxu0
  %v4827 = vadd.f32 %v4309, %v4826
  %4828 = vdwg.mxu0
  %4829 = vmatprep.subr.mxu0 %v4249
  %4830 = vmatpush1.msra.mxu0 %v4247
  %4831 = vmatprep.subr.mxu0 %v4357
  %4832 = vmatpush1.msra.mxu0 %v4354
  %4833 = vmatprep.subr.mxu0 0.0
  %4834 = vmatpush1.msra.mxu0 0.0
  %4835 = vmatprep.subr.mxu0 0.0
  %4836 = vmatpush1.msra.mxu0 0.0
  %4837 = vmatprep.subr.mxu0 0.0
  %4838 = vmatpush1.msra.mxu0 0.0
  %4839 = vmatprep.subr.mxu0 0.0
  %4840 = vmatpush1.msra.mxu0 0.0
  %4841 = vmatprep.subr.mxu0 0.0
  %4842 = vmatpush1.msra.mxu0 0.0
  %4843 = vmatprep.subr.mxu0 0.0
  %4844 = vmatpush1.msra.mxu0 0.0
  %4845 = vmatprep.subr.mxu0 0.0
  %4846 = vmatpush1.msra.mxu0 0.0
  %4847 = vmatprep.subr.mxu0 0.0
  %4848 = vmatpush1.msra.mxu0 0.0
  %4849 = vmatprep.subr.mxu0 0.0
  %4850 = vmatpush1.msra.mxu0 0.0
  %4851 = vmatprep.subr.mxu0 0.0
  %4852 = vmatpush1.msra.mxu0 0.0
  %4853 = vmatprep.subr.mxu0 0.0
  %4854 = vmatpush1.msra.mxu0 0.0
  %4855 = vmatprep.subr.mxu0 0.0
  %4856 = vmatpush1.msra.mxu0 0.0
  %4857 = vmatprep.subr.mxu0 0.0
  %4858 = vmatpush1.msra.mxu0 0.0
  %4859 = vmatprep.subr.mxu0 0.0
  %4860 = vmatpush1.msra.mxu0 0.0
  %4861 = vmatprep.subr.mxu0 0.0
  %4862 = vmatpush1.msra.mxu0 0.0
  %4863 = vmatprep.subr.mxu0 0.0
  %4864 = vmatpush1.msra.mxu0 0.0
  %4865 = vmatprep.subr.mxu0 0.0
  %4866 = vmatpush1.msra.mxu0 0.0
  %4867 = vmatprep.subr.mxu0 0.0
  %4868 = vmatpush1.msra.mxu0 0.0
  %4869 = vmatprep.subr.mxu0 0.0
  %4870 = vmatpush1.msra.mxu0 0.0
  %4871 = vmatprep.subr.mxu0 0.0
  %4872 = vmatpush1.msra.mxu0 0.0
  %4873 = vmatprep.subr.mxu0 0.0
  %4874 = vmatpush1.msra.mxu0 0.0
  %4875 = vmatprep.subr.mxu0 0.0
  %4876 = vmatpush1.msra.mxu0 0.0
  %4877 = vmatprep.subr.mxu0 0.0
  %4878 = vmatpush1.msra.mxu0 0.0
  %4879 = vmatprep.subr.mxu0 0.0
  %4880 = vmatpush1.msra.mxu0 0.0
  %4881 = vmatprep.subr.mxu0 0.0
  %4882 = vmatpush1.msra.mxu0 0.0
  %4883 = vmatprep.subr.mxu0 0.0
  %4884 = vmatpush1.msra.mxu0 0.0
  %4885 = vmatprep.subr.mxu0 0.0
  %4886 = vmatpush1.msra.mxu0 0.0
  %4887 = vmatprep.subr.mxu0 0.0
  %4888 = vmatpush1.msra.mxu0 0.0
  %4889 = vmatprep.subr.mxu0 0.0
  %4890 = vmatpush1.msra.mxu0 0.0
  %4891 = vmatprep.subr.mxu0 0.0
  %4892 = vmatpush1.msra.mxu0 0.0
  %4893 = vmatprep.mubr.f32.mxu0 0.0
  %4894 = vmatmul.mubr.f32.gmra.mrb[0].mxu0 %v4312
  %v4895 = vpop.f32.mrb[0].mxu0
  %v4896 = vadd.f32 %v4274, %v4895
  %v4897 = vpop.f32.mrb[0].mxu0
  %v4898 = vadd.f32 %v4274, %v4897
  %4899 = vmatprep.mubr.f32.mxu0 0.0
  %4900 = vmatmul.mubr.f32.gmra.mrb[0].mxu0 %v4314
  %v4901 = vpop.f32.mrb[0].mxu0
  %v4902 = vadd.f32 %v4279, %v4901
  %v4903 = vpop.f32.mrb[0].mxu0
  %v4904 = vadd.f32 %v4279, %v4903
  %4905 = vmatprep.mubr.f32.mxu0 0.0
  %4906 = vmatmul.mubr.f32.gmra.mrb[0].mxu0 %v4316
  %v4907 = vpop.f32.mrb[0].mxu0
  %v4908 = vadd.f32 %v4284, %v4907
  %v4909 = vpop.f32.mrb[0].mxu0
  %v4910 = vadd.f32 %v4284, %v4909
  %4911 = vmatprep.mubr.f32.mxu0 0.0
  %4912 = vmatmul.mubr.f32.gmra.mrb[0].mxu0 %v4318
  %v4913 = vpop.f32.mrb[0].mxu0
  %v4914 = vadd.f32 %v4289, %v4913
  %v4915 = vpop.f32.mrb[0].mxu0
  %v4916 = vadd.f32 %v4289, %v4915
  %4917 = vmatprep.mubr.f32.mxu0 0.0
  %4918 = vmatmul.mubr.f32.gmra.mrb[0].mxu0 %v4320
  %v4919 = vpop.f32.mrb[0].mxu0
  %v4920 = vadd.f32 %v4294, %v4919
  %v4921 = vpop.f32.mrb[0].mxu0
  %v4922 = vadd.f32 %v4294, %v4921
  %4923 = vmatprep.mubr.f32.mxu0 0.0
  %4924 = vmatmul.mubr.f32.gmra.mrb[0].mxu0 %v4322
  %v4925 = vpop.f32.mrb[0].mxu0
  %v4926 = vadd.f32 %v4299, %v4925
  %v4927 = vpop.f32.mrb[0].mxu0
  %v4928 = vadd.f32 %v4299, %v4927
  %4929 = vmatprep.mubr.f32.mxu0 0.0
  %4930 = vmatmul.mubr.f32.gmra.mrb[0].mxu0 %v4324
  %v4931 = vpop.f32.mrb[0].mxu0
  %v4932 = vadd.f32 %v4304, %v4931
  %v4933 = vpop.f32.mrb[0].mxu0
  %v4934 = vadd.f32 %v4304, %v4933
  %4935 = vmatprep.mubr.f32.mxu0 0.0
  %4936 = vmatmul.mubr.f32.gmra.mrb[0].mxu0 %v4326
  %v4937 = vpop.f32.mrb[0].mxu0
  %v4938 = vadd.f32 %v4309, %v4937
  %v4939 = vpop.f32.mrb[0].mxu0
  %v4940 = vadd.f32 %v4309, %v4939
  %4941 = vdwg.mxu0
  %4942 = vmatprep.subr.mxu0 %v4253
  %4943 = vmatpush1.msra.mxu0 %v4251
  %4944 = vmatprep.subr.mxu0 %v4363
  %4945 = vmatpush1.msra.mxu0 %v4360
  %4946 = vmatprep.subr.mxu0 0.0
  %4947 = vmatpush1.msra.mxu0 0.0
  %4948 = vmatprep.subr.mxu0 0.0
  %4949 = vmatpush1.msra.mxu0 0.0
  %4950 = vmatprep.subr.mxu0 0.0
  %4951 = vmatpush1.msra.mxu0 0.0
  %4952 = vmatprep.subr.mxu0 0.0
  %4953 = vmatpush1.msra.mxu0 0.0
  %4954 = vmatprep.subr.mxu0 0.0
  %4955 = vmatpush1.msra.mxu0 0.0
  %4956 = vmatprep.subr.mxu0 0.0
  %4957 = vmatpush1.msra.mxu0 0.0
  %4958 = vmatprep.subr.mxu0 0.0
  %4959 = vmatpush1.msra.mxu0 0.0
  %4960 = vmatprep.subr.mxu0 0.0
  %4961 = vmatpush1.msra.mxu0 0.0
  %4962 = vmatprep.subr.mxu0 0.0
  %4963 = vmatpush1.msra.mxu0 0.0
  %4964 = vmatprep.subr.mxu0 0.0
  %4965 = vmatpush1.msra.mxu0 0.0
  %4966 = vmatprep.subr.mxu0 0.0
  %4967 = vmatpush1.msra.mxu0 0.0
  %4968 = vmatprep.subr.mxu0 0.0
  %4969 = vmatpush1.msra.mxu0 0.0
  %4970 = vmatprep.subr.mxu0 0.0
  %4971 = vmatpush1.msra.mxu0 0.0
  %4972 = vmatprep.subr.mxu0 0.0
  %4973 = vmatpush1.msra.mxu0 0.0
  %4974 = vmatprep.subr.mxu0 0.0
  %4975 = vmatpush1.msra.mxu0 0.0
  %4976 = vmatprep.subr.mxu0 0.0
  %4977 = vmatpush1.msra.mxu0 0.0
  %4978 = vmatprep.subr.mxu0 0.0
  %4979 = vmatpush1.msra.mxu0 0.0
  %4980 = vmatprep.subr.mxu0 0.0
  %4981 = vmatpush1.msra.mxu0 0.0
  %4982 = vmatprep.subr.mxu0 0.0
  %4983 = vmatpush1.msra.mxu0 0.0
  %4984 = vmatprep.subr.mxu0 0.0
  %4985 = vmatpush1.msra.mxu0 0.0
  %4986 = vmatprep.subr.mxu0 0.0
  %4987 = vmatpush1.msra.mxu0 0.0
  %4988 = vmatprep.subr.mxu0 0.0
  %4989 = vmatpush1.msra.mxu0 0.0
  %4990 = vmatprep.subr.mxu0 0.0
  %4991 = vmatpush1.msra.mxu0 0.0
  %4992 = vmatprep.subr.mxu0 0.0
  %4993 = vmatpush1.msra.mxu0 0.0
  %4994 = vmatprep.subr.mxu0 0.0
  %4995 = vmatpush1.msra.mxu0 0.0
  %4996 = vmatprep.subr.mxu0 0.0
  %4997 = vmatpush1.msra.mxu0 0.0
  %4998 = vmatprep.subr.mxu0 0.0
  %4999 = vmatpush1.msra.mxu0 0.0
  %5000 = vmatprep.subr.mxu0 0.0
  %5001 = vmatpush1.msra.mxu0 0.0
  %5002 = vmatprep.subr.mxu0 0.0
  %5003 = vmatpush1.msra.mxu0 0.0
  %5004 = vmatprep.subr.mxu0 0.0
  %5005 = vmatpush1.msra.mxu0 0.0
  %5006 = vmatprep.mubr.f32.mxu0 0.0
  %5007 = vmatmul.mubr.f32.gmra.mrb[0].mxu0 %v4312
  %v5008 = vpop.f32.mrb[0].mxu0
  %v5009 = vadd.f32 %v4274, %v5008
  %v5010 = vpop.f32.mrb[0].mxu0
  %v5011 = vadd.f32 %v4274, %v5010
  %5012 = vmatprep.mubr.f32.mxu0 0.0
  %5013 = vmatmul.mubr.f32.gmra.mrb[0].mxu0 %v4314
  %v5014 = vpop.f32.mrb[0].mxu0
  %v5015 = vadd.f32 %v4279, %v5014
  %v5016 = vpop.f32.mrb[0].mxu0
  %v5017 = vadd.f32 %v4279, %v5016
  %5018 = vmatprep.mubr.f32.mxu0 0.0
  %5019 = vmatmul.mubr.f32.gmra.mrb[0].mxu0 %v4316
  %v5020 = vpop.f32.mrb[0].mxu0
  %v5021 = vadd.f32 %v4284, %v5020
  %v5022 = vpop.f32.mrb[0].mxu0
  %v5023 = vadd.f32 %v4284, %v5022
  %5024 = vmatprep.mubr.f32.mxu0 0.0
  %5025 = vmatmul.mubr.f32.gmra.mrb[0].mxu0 %v4318
  %v5026 = vpop.f32.mrb[0].mxu0
  %v5027 = vadd.f32 %v4289, %v5026
  %v5028 = vpop.f32.mrb[0].mxu0
  %v5029 = vadd.f32 %v4289, %v5028
  %5030 = vmatprep.mubr.f32.mxu0 0.0
  %5031 = vmatmul.mubr.f32.gmra.mrb[0].mxu0 %v4320
  %v5032 = vpop.f32.mrb[0].mxu0
  %v5033 = vadd.f32 %v4294, %v5032
  %v5034 = vpop.f32.mrb[0].mxu0
  %v5035 = vadd.f32 %v4294, %v5034
  %5036 = vmatprep.mubr.f32.mxu0 0.0
  %5037 = vmatmul.mubr.f32.gmra.mrb[0].mxu0 %v4322
  %v5038 = vpop.f32.mrb[0].mxu0
  %v5039 = vadd.f32 %v4299, %v5038
  %v5040 = vpop.f32.mrb[0].mxu0
  %v5041 = vadd.f32 %v4299, %v5040
  %5042 = vmatprep.mubr.f32.mxu0 0.0
  %5043 = vmatmul.mubr.f32.gmra.mrb[0].mxu0 %v4324
  %v5044 = vpop.f32.mrb[0].mxu0
  %v5045 = vadd.f32 %v4304, %v5044
  %v5046 = vpop.f32.mrb[0].mxu0
  %v5047 = vadd.f32 %v4304, %v5046
  %5048 = vmatprep.mubr.f32.mxu0 0.0
  %5049 = vmatmul.mubr.f32.gmra.mrb[0].mxu0 %v4326
  %v5050 = vpop.f32.mrb[0].mxu0
  %v5051 = vadd.f32 %v4309, %v5050
  %v5052 = vpop.f32.mrb[0].mxu0
  %v5053 = vadd.f32 %v4309, %v5052
  %5054 = vdwg.mxu0
  %5055 = vmatprep.subr.mxu0 %v4257
  %5056 = vmatpush1.msra.mxu0 %v4255
  %5057 = vmatprep.subr.mxu0 %v4369
  %5058 = vmatpush1.msra.mxu0 %v4366
  %5059 = vmatprep.subr.mxu0 0.0
  %5060 = vmatpush1.msra.mxu0 0.0
  %5061 = vmatprep.subr.mxu0 0.0
  %5062 = vmatpush1.msra.mxu0 0.0
  %5063 = vmatprep.subr.mxu0 0.0
  %5064 = vmatpush1.msra.mxu0 0.0
  %5065 = vmatprep.subr.mxu0 0.0
  %5066 = vmatpush1.msra.mxu0 0.0
  %5067 = vmatprep.subr.mxu0 0.0
  %5068 = vmatpush1.msra.mxu0 0.0
  %5069 = vmatprep.subr.mxu0 0.0
  %5070 = vmatpush1.msra.mxu0 0.0
  %5071 = vmatprep.subr.mxu0 0.0
  %5072 = vmatpush1.msra.mxu0 0.0
  %5073 = vmatprep.subr.mxu0 0.0
  %5074 = vmatpush1.msra.mxu0 0.0
  %5075 = vmatprep.subr.mxu0 0.0
  %5076 = vmatpush1.msra.mxu0 0.0
  %5077 = vmatprep.subr.mxu0 0.0
  %5078 = vmatpush1.msra.mxu0 0.0
  %5079 = vmatprep.subr.mxu0 0.0
  %5080 = vmatpush1.msra.mxu0 0.0
  %5081 = vmatprep.subr.mxu0 0.0
  %5082 = vmatpush1.msra.mxu0 0.0
  %5083 = vmatprep.subr.mxu0 0.0
  %5084 = vmatpush1.msra.mxu0 0.0
  %5085 = vmatprep.subr.mxu0 0.0
  %5086 = vmatpush1.msra.mxu0 0.0
  %5087 = vmatprep.subr.mxu0 0.0
  %5088 = vmatpush1.msra.mxu0 0.0
  %5089 = vmatprep.subr.mxu0 0.0
  %5090 = vmatpush1.msra.mxu0 0.0
  %5091 = vmatprep.subr.mxu0 0.0
  %5092 = vmatpush1.msra.mxu0 0.0
  %5093 = vmatprep.subr.mxu0 0.0
  %5094 = vmatpush1.msra.mxu0 0.0
  %5095 = vmatprep.subr.mxu0 0.0
  %5096 = vmatpush1.msra.mxu0 0.0
  %5097 = vmatprep.subr.mxu0 0.0
  %5098 = vmatpush1.msra.mxu0 0.0
  %5099 = vmatprep.subr.mxu0 0.0
  %5100 = vmatpush1.msra.mxu0 0.0
  %5101 = vmatprep.subr.mxu0 0.0
  %5102 = vmatpush1.msra.mxu0 0.0
  %5103 = vmatprep.subr.mxu0 0.0
  %5104 = vmatpush1.msra.mxu0 0.0
  %5105 = vmatprep.subr.mxu0 0.0
  %5106 = vmatpush1.msra.mxu0 0.0
  %5107 = vmatprep.subr.mxu0 0.0
  %5108 = vmatpush1.msra.mxu0 0.0
  %5109 = vmatprep.subr.mxu0 0.0
  %5110 = vmatpush1.msra.mxu0 0.0
  %5111 = vmatprep.subr.mxu0 0.0
  %5112 = vmatpush1.msra.mxu0 0.0
  %5113 = vmatprep.subr.mxu0 0.0
  %5114 = vmatpush1.msra.mxu0 0.0
  %5115 = vmatprep.subr.mxu0 0.0
  %5116 = vmatpush1.msra.mxu0 0.0
  %5117 = vmatprep.subr.mxu0 0.0
  %5118 = vmatpush1.msra.mxu0 0.0
  %5119 = vmatprep.mubr.f32.mxu0 0.0
  %5120 = vmatmul.mubr.f32.gmra.mrb[0].mxu0 %v4312
  %v5121 = vpop.f32.mrb[0].mxu0
  %v5122 = vadd.f32 %v4274, %v5121
  %v5123 = vpop.f32.mrb[0].mxu0
  %v5124 = vadd.f32 %v4274, %v5123
  %5125 = vmatprep.mubr.f32.mxu0 0.0
  %5126 = vmatmul.mubr.f32.gmra.mrb[0].mxu0 %v4314
  %v5127 = vpop.f32.mrb[0].mxu0
  %v5128 = vadd.f32 %v4279, %v5127
  %v5129 = vpop.f32.mrb[0].mxu0
  %v5130 = vadd.f32 %v4279, %v5129
  %5131 = vmatprep.mubr.f32.mxu0 0.0
  %5132 = vmatmul.mubr.f32.gmra.mrb[0].mxu0 %v4316
  %v5133 = vpop.f32.mrb[0].mxu0
  %v5134 = vadd.f32 %v4284, %v5133
  %v5135 = vpop.f32.mrb[0].mxu0
  %v5136 = vadd.f32 %v4284, %v5135
  %5137 = vmatprep.mubr.f32.mxu0 0.0
  %5138 = vmatmul.mubr.f32.gmra.mrb[0].mxu0 %v4318
  %v5139 = vpop.f32.mrb[0].mxu0
  %v5140 = vadd.f32 %v4289, %v5139
  %v5141 = vpop.f32.mrb[0].mxu0
  %v5142 = vadd.f32 %v4289, %v5141
  %5143 = vmatprep.mubr.f32.mxu0 0.0
  %5144 = vmatmul.mubr.f32.gmra.mrb[0].mxu0 %v4320
  %v5145 = vpop.f32.mrb[0].mxu0
  %v5146 = vadd.f32 %v4294, %v5145
  %v5147 = vpop.f32.mrb[0].mxu0
  %v5148 = vadd.f32 %v4294, %v5147
  %5149 = vmatprep.mubr.f32.mxu0 0.0
  %5150 = vmatmul.mubr.f32.gmra.mrb[0].mxu0 %v4322
  %v5151 = vpop.f32.mrb[0].mxu0
  %v5152 = vadd.f32 %v4299, %v5151
  %v5153 = vpop.f32.mrb[0].mxu0
  %v5154 = vadd.f32 %v4299, %v5153
  %5155 = vmatprep.mubr.f32.mxu0 0.0
  %5156 = vmatmul.mubr.f32.gmra.mrb[0].mxu0 %v4324
  %v5157 = vpop.f32.mrb[0].mxu0
  %v5158 = vadd.f32 %v4304, %v5157
  %v5159 = vpop.f32.mrb[0].mxu0
  %v5160 = vadd.f32 %v4304, %v5159
  %5161 = vmatprep.mubr.f32.mxu0 0.0
  %5162 = vmatmul.mubr.f32.gmra.mrb[0].mxu0 %v4326
  %v5163 = vpop.f32.mrb[0].mxu0
  %v5164 = vadd.f32 %v4309, %v5163
  %v5165 = vpop.f32.mrb[0].mxu0
  %v5166 = vadd.f32 %v4309, %v5165
  %5167 = vdwg.mxu0
  %5168 = vmatprep.subr.mxu0 %v4261
  %5169 = vmatpush1.msra.mxu0 %v4259
  %5170 = vmatprep.subr.mxu0 %v4375
  %5171 = vmatpush1.msra.mxu0 %v4372
  %5172 = vmatprep.subr.mxu0 0.0
  %5173 = vmatpush1.msra.mxu0 0.0
  %5174 = vmatprep.subr.mxu0 0.0
  %5175 = vmatpush1.msra.mxu0 0.0
  %5176 = vmatprep.subr.mxu0 0.0
  %5177 = vmatpush1.msra.mxu0 0.0
  %5178 = vmatprep.subr.mxu0 0.0
  %5179 = vmatpush1.msra.mxu0 0.0
  %5180 = vmatprep.subr.mxu0 0.0
  %5181 = vmatpush1.msra.mxu0 0.0
  %5182 = vmatprep.subr.mxu0 0.0
  %5183 = vmatpush1.msra.mxu0 0.0
  %5184 = vmatprep.subr.mxu0 0.0
  %5185 = vmatpush1.msra.mxu0 0.0
  %5186 = vmatprep.subr.mxu0 0.0
  %5187 = vmatpush1.msra.mxu0 0.0
  %5188 = vmatprep.subr.mxu0 0.0
  %5189 = vmatpush1.msra.mxu0 0.0
  %5190 = vmatprep.subr.mxu0 0.0
  %5191 = vmatpush1.msra.mxu0 0.0
  %5192 = vmatprep.subr.mxu0 0.0
  %5193 = vmatpush1.msra.mxu0 0.0
  %5194 = vmatprep.subr.mxu0 0.0
  %5195 = vmatpush1.msra.mxu0 0.0
  %5196 = vmatprep.subr.mxu0 0.0
  %5197 = vmatpush1.msra.mxu0 0.0
  %5198 = vmatprep.subr.mxu0 0.0
  %5199 = vmatpush1.msra.mxu0 0.0
  %5200 = vmatprep.subr.mxu0 0.0
  %5201 = vmatpush1.msra.mxu0 0.0
  %5202 = vmatprep.subr.mxu0 0.0
  %5203 = vmatpush1.msra.mxu0 0.0
  %5204 = vmatprep.subr.mxu0 0.0
  %5205 = vmatpush1.msra.mxu0 0.0
  %5206 = vmatprep.subr.mxu0 0.0
  %5207 = vmatpush1.msra.mxu0 0.0
  %5208 = vmatprep.subr.mxu0 0.0
  %5209 = vmatpush1.msra.mxu0 0.0
  %5210 = vmatprep.subr.mxu0 0.0
  %5211 = vmatpush1.msra.mxu0 0.0
  %5212 = vmatprep.subr.mxu0 0.0
  %5213 = vmatpush1.msra.mxu0 0.0
  %5214 = vmatprep.subr.mxu0 0.0
  %5215 = vmatpush1.msra.mxu0 0.0
  %5216 = vmatprep.subr.mxu0 0.0
  %5217 = vmatpush1.msra.mxu0 0.0
  %5218 = vmatprep.subr.mxu0 0.0
  %5219 = vmatpush1.msra.mxu0 0.0
  %5220 = vmatprep.subr.mxu0 0.0
  %5221 = vmatpush1.msra.mxu0 0.0
  %5222 = vmatprep.subr.mxu0 0.0
  %5223 = vmatpush1.msra.mxu0 0.0
  %5224 = vmatprep.subr.mxu0 0.0
  %5225 = vmatpush1.msra.mxu0 0.0
  %5226 = vmatprep.subr.mxu0 0.0
  %5227 = vmatpush1.msra.mxu0 0.0
  %5228 = vmatprep.subr.mxu0 0.0
  %5229 = vmatpush1.msra.mxu0 0.0
  %5230 = vmatprep.subr.mxu0 0.0
  %5231 = vmatpush1.msra.mxu0 0.0
  %5232 = vmatprep.mubr.f32.mxu0 0.0
  %5233 = vmatmul.mubr.f32.gmra.mrb[0].mxu0 %v4312
  %v5234 = vpop.f32.mrb[0].mxu0
  %v5235 = vadd.f32 %v4274, %v5234
  %v5236 = vpop.f32.mrb[0].mxu0
  %v5237 = vadd.f32 %v4274, %v5236
  %5238 = vmatprep.mubr.f32.mxu0 0.0
  %5239 = vmatmul.mubr.f32.gmra.mrb[0].mxu0 %v4314
  %v5240 = vpop.f32.mrb[0].mxu0
  %v5241 = vadd.f32 %v4279, %v5240
  %v5242 = vpop.f32.mrb[0].mxu0
  %v5243 = vadd.f32 %v4279, %v5242
  %5244 = vmatprep.mubr.f32.mxu0 0.0
  %5245 = vmatmul.mubr.f32.gmra.mrb[0].mxu0 %v4316
  %v5246 = vpop.f32.mrb[0].mxu0
  %v5247 = vadd.f32 %v4284, %v5246
  %v5248 = vpop.f32.mrb[0].mxu0
  %v5249 = vadd.f32 %v4284, %v5248
  %5250 = vmatprep.mubr.f32.mxu0 0.0
  %5251 = vmatmul.mubr.f32.gmra.mrb[0].mxu0 %v4318
  %v5252 = vpop.f32.mrb[0].mxu0
  %v5253 = vadd.f32 %v4289, %v5252
  %v5254 = vpop.f32.mrb[0].mxu0
  %v5255 = vadd.f32 %v4289, %v5254
  %5256 = vmatprep.mubr.f32.mxu0 0.0
  %5257 = vmatmul.mubr.f32.gmra.mrb[0].mxu0 %v4320
  %v5258 = vpop.f32.mrb[0].mxu0
  %v5259 = vadd.f32 %v4294, %v5258
  %v5260 = vpop.f32.mrb[0].mxu0
  %v5261 = vadd.f32 %v4294, %v5260
  %5262 = vmatprep.mubr.f32.mxu0 0.0
  %5263 = vmatmul.mubr.f32.gmra.mrb[0].mxu0 %v4322
  %v5264 = vpop.f32.mrb[0].mxu0
  %v5265 = vadd.f32 %v4299, %v5264
  %v5266 = vpop.f32.mrb[0].mxu0
  %v5267 = vadd.f32 %v4299, %v5266
  %5268 = vmatprep.mubr.f32.mxu0 0.0
  %5269 = vmatmul.mubr.f32.gmra.mrb[0].mxu0 %v4324
  %v5270 = vpop.f32.mrb[0].mxu0
  %v5271 = vadd.f32 %v4304, %v5270
  %v5272 = vpop.f32.mrb[0].mxu0
  %v5273 = vadd.f32 %v4304, %v5272
  %5274 = vmatprep.mubr.f32.mxu0 0.0
  %5275 = vmatmul.mubr.f32.gmra.mrb[0].mxu0 %v4326
  %v5276 = vpop.f32.mrb[0].mxu0
  %v5277 = vadd.f32 %v4309, %v5276
  %v5278 = vpop.f32.mrb[0].mxu0
  %v5279 = vadd.f32 %v4309, %v5278
  %5280 = vdwg.mxu0
  %v5281 = vmul.f32 %v4444, 0.2
  %v5282 = vmul.f32 %v4446, 0.2
  %v5283 = vmul.f32 %v4557, 0.2
  %v5284 = vmul.f32 %v4559, 0.2
  %v5285 = vmul.f32 %v4670, 0.2
  %v5286 = vmul.f32 %v4672, 0.2
  %v5287 = vmul.f32 %v4783, 0.2
  %v5288 = vmul.f32 %v4785, 0.2
  %v5289 = vmul.f32 %v4896, 0.2
  %v5290 = vmul.f32 %v4898, 0.2
  %v5291 = vmul.f32 %v5009, 0.2
  %v5292 = vmul.f32 %v5011, 0.2
  %v5293 = vmul.f32 %v5122, 0.2
  %v5294 = vmul.f32 %v5124, 0.2
  %v5295 = vmul.f32 %v5235, 0.2
  %v5296 = vmul.f32 %v5237, 0.2
  %v5297 = vmul.f32 %v4450, 0.2
  %v5298 = vmul.f32 %v4452, 0.2
  %v5299 = vmul.f32 %v4563, 0.2
  %v5300 = vmul.f32 %v4565, 0.2
  %v5301 = vmul.f32 %v4676, 0.2
  %v5302 = vmul.f32 %v4678, 0.2
  %v5303 = vmul.f32 %v4789, 0.2
  %v5304 = vmul.f32 %v4791, 0.2
  %v5305 = vmul.f32 %v4902, 0.2
  %v5306 = vmul.f32 %v4904, 0.2
  %v5307 = vmul.f32 %v5015, 0.2
  %v5308 = vmul.f32 %v5017, 0.2
  %v5309 = vmul.f32 %v5128, 0.2
  %v5310 = vmul.f32 %v5130, 0.2
  %v5311 = vmul.f32 %v5241, 0.2
  %v5312 = vmul.f32 %v5243, 0.2
  %v5313 = vmul.f32 %v4456, 0.2
  %v5314 = vmul.f32 %v4458, 0.2
  %v5315 = vmul.f32 %v4569, 0.2
  %v5316 = vmul.f32 %v4571, 0.2
  %v5317 = vmul.f32 %v4682, 0.2
  %v5318 = vmul.f32 %v4684, 0.2
  %v5319 = vmul.f32 %v4795, 0.2
  %v5320 = vmul.f32 %v4797, 0.2
  %v5321 = vmul.f32 %v4908, 0.2
  %v5322 = vmul.f32 %v4910, 0.2
  %v5323 = vmul.f32 %v5021, 0.2
  %v5324 = vmul.f32 %v5023, 0.2
  %v5325 = vmul.f32 %v5134, 0.2
  %v5326 = vmul.f32 %v5136, 0.2
  %v5327 = vmul.f32 %v5247, 0.2
  %v5328 = vmul.f32 %v5249, 0.2
  %v5329 = vmul.f32 %v4462, 0.2
  %v5330 = vmul.f32 %v4464, 0.2
  %v5331 = vmul.f32 %v4575, 0.2
  %v5332 = vmul.f32 %v4577, 0.2
  %v5333 = vmul.f32 %v4688, 0.2
  %v5334 = vmul.f32 %v4690, 0.2
  %v5335 = vmul.f32 %v4801, 0.2
  %v5336 = vmul.f32 %v4803, 0.2
  %v5337 = vmul.f32 %v4914, 0.2
  %v5338 = vmul.f32 %v4916, 0.2
  %v5339 = vmul.f32 %v5027, 0.2
  %v5340 = vmul.f32 %v5029, 0.2
  %v5341 = vmul.f32 %v5140, 0.2
  %v5342 = vmul.f32 %v5142, 0.2
  %v5343 = vmul.f32 %v5253, 0.2
  %v5344 = vmul.f32 %v5255, 0.2
  %v5345 = vmul.f32 %v4468, 0.2
  %v5346 = vmul.f32 %v4470, 0.2
  %v5347 = vmul.f32 %v4581, 0.2
  %v5348 = vmul.f32 %v4583, 0.2
  %v5349 = vmul.f32 %v4694, 0.2
  %v5350 = vmul.f32 %v4696, 0.2
  %v5351 = vmul.f32 %v4807, 0.2
  %v5352 = vmul.f32 %v4809, 0.2
  %v5353 = vmul.f32 %v4920, 0.2
  %v5354 = vmul.f32 %v4922, 0.2
  %v5355 = vmul.f32 %v5033, 0.2
  %v5356 = vmul.f32 %v5035, 0.2
  %v5357 = vmul.f32 %v5146, 0.2
  %v5358 = vmul.f32 %v5148, 0.2
  %v5359 = vmul.f32 %v5259, 0.2
  %v5360 = vmul.f32 %v5261, 0.2
  %v5361 = vmul.f32 %v4474, 0.2
  %v5362 = vmul.f32 %v4476, 0.2
  %v5363 = vmul.f32 %v4587, 0.2
  %v5364 = vmul.f32 %v4589, 0.2
  %v5365 = vmul.f32 %v4700, 0.2
  %v5366 = vmul.f32 %v4702, 0.2
  %v5367 = vmul.f32 %v4813, 0.2
  %v5368 = vmul.f32 %v4815, 0.2
  %v5369 = vmul.f32 %v4926, 0.2
  %v5370 = vmul.f32 %v4928, 0.2
  %v5371 = vmul.f32 %v5039, 0.2
  %v5372 = vmul.f32 %v5041, 0.2
  %v5373 = vmul.f32 %v5152, 0.2
  %v5374 = vmul.f32 %v5154, 0.2
  %v5375 = vmul.f32 %v5265, 0.2
  %v5376 = vmul.f32 %v5267, 0.2
  %v5377 = vmul.f32 %v4480, 0.2
  %v5378 = vmul.f32 %v4482, 0.2
  %v5379 = vmul.f32 %v4593, 0.2
  %v5380 = vmul.f32 %v4595, 0.2
  %v5381 = vmul.f32 %v4706, 0.2
  %v5382 = vmul.f32 %v4708, 0.2
  %v5383 = vmul.f32 %v4819, 0.2
  %v5384 = vmul.f32 %v4821, 0.2
  %v5385 = vmul.f32 %v4932, 0.2
  %v5386 = vmul.f32 %v4934, 0.2
  %v5387 = vmul.f32 %v5045, 0.2
  %v5388 = vmul.f32 %v5047, 0.2
  %v5389 = vmul.f32 %v5158, 0.2
  %v5390 = vmul.f32 %v5160, 0.2
  %v5391 = vmul.f32 %v5271, 0.2
  %v5392 = vmul.f32 %v5273, 0.2
  %v5393 = vmul.f32 %v4486, 0.2
  %v5394 = vmul.f32 %v4488, 0.2
  %v5395 = vmul.f32 %v4599, 0.2
  %v5396 = vmul.f32 %v4601, 0.2
  %v5397 = vmul.f32 %v4712, 0.2
  %v5398 = vmul.f32 %v4714, 0.2
  %v5399 = vmul.f32 %v4825, 0.2
  %v5400 = vmul.f32 %v4827, 0.2
  %v5401 = vmul.f32 %v4938, 0.2
  %v5402 = vmul.f32 %v4940, 0.2
  %v5403 = vmul.f32 %v5051, 0.2
  %v5404 = vmul.f32 %v5053, 0.2
  %v5405 = vmul.f32 %v5164, 0.2
  %v5406 = vmul.f32 %v5166, 0.2
  %v5407 = vmul.f32 %v5277, 0.2
  %v5408 = vmul.f32 %v5279, 0.2
  %v5409 = vmax.f32 %v4444, %v5281
  %v5410 = vmax.f32 %v4446, %v5282
  %v5411 = vmax.f32 %v4557, %v5283
  %v5412 = vmax.f32 %v4559, %v5284
  %v5413 = vmax.f32 %v4670, %v5285
  %v5414 = vmax.f32 %v4672, %v5286
  %v5415 = vmax.f32 %v4783, %v5287
  %v5416 = vmax.f32 %v4785, %v5288
  %v5417 = vmax.f32 %v4896, %v5289
  %v5418 = vmax.f32 %v4898, %v5290
  %v5419 = vmax.f32 %v5009, %v5291
  %v5420 = vmax.f32 %v5011, %v5292
  %v5421 = vmax.f32 %v5122, %v5293
  %v5422 = vmax.f32 %v5124, %v5294
  %v5423 = vmax.f32 %v5235, %v5295
  %v5424 = vmax.f32 %v5237, %v5296
  %v5425 = vmax.f32 %v4450, %v5297
  %v5426 = vmax.f32 %v4452, %v5298
  %v5427 = vmax.f32 %v4563, %v5299
  %v5428 = vmax.f32 %v4565, %v5300
  %v5429 = vmax.f32 %v4676, %v5301
  %v5430 = vmax.f32 %v4678, %v5302
  %v5431 = vmax.f32 %v4789, %v5303
  %v5432 = vmax.f32 %v4791, %v5304
  %v5433 = vmax.f32 %v4902, %v5305
  %v5434 = vmax.f32 %v4904, %v5306
  %v5435 = vmax.f32 %v5015, %v5307
  %v5436 = vmax.f32 %v5017, %v5308
  %v5437 = vmax.f32 %v5128, %v5309
  %v5438 = vmax.f32 %v5130, %v5310
  %v5439 = vmax.f32 %v5241, %v5311
  %v5440 = vmax.f32 %v5243, %v5312
  %v5441 = vmax.f32 %v4456, %v5313
  %v5442 = vmax.f32 %v4458, %v5314
  %v5443 = vmax.f32 %v4569, %v5315
  %v5444 = vmax.f32 %v4571, %v5316
  %v5445 = vmax.f32 %v4682, %v5317
  %v5446 = vmax.f32 %v4684, %v5318
  %v5447 = vmax.f32 %v4795, %v5319
  %v5448 = vmax.f32 %v4797, %v5320
  %v5449 = vmax.f32 %v4908, %v5321
  %v5450 = vmax.f32 %v4910, %v5322
  %v5451 = vmax.f32 %v5021, %v5323
  %v5452 = vmax.f32 %v5023, %v5324
  %v5453 = vmax.f32 %v5134, %v5325
  %v5454 = vmax.f32 %v5136, %v5326
  %v5455 = vmax.f32 %v5247, %v5327
  %v5456 = vmax.f32 %v5249, %v5328
  %v5457 = vmax.f32 %v4462, %v5329
  %v5458 = vmax.f32 %v4464, %v5330
  %v5459 = vmax.f32 %v4575, %v5331
  %v5460 = vmax.f32 %v4577, %v5332
  %v5461 = vmax.f32 %v4688, %v5333
  %v5462 = vmax.f32 %v4690, %v5334
  %v5463 = vmax.f32 %v4801, %v5335
  %v5464 = vmax.f32 %v4803, %v5336
  %v5465 = vmax.f32 %v4914, %v5337
  %v5466 = vmax.f32 %v4916, %v5338
  %v5467 = vmax.f32 %v5027, %v5339
  %v5468 = vmax.f32 %v5029, %v5340
  %v5469 = vmax.f32 %v5140, %v5341
  %v5470 = vmax.f32 %v5142, %v5342
  %v5471 = vmax.f32 %v5253, %v5343
  %v5472 = vmax.f32 %v5255, %v5344
  %v5473 = vmax.f32 %v4468, %v5345
  %v5474 = vmax.f32 %v4470, %v5346
  %v5475 = vmax.f32 %v4581, %v5347
  %v5476 = vmax.f32 %v4583, %v5348
  %v5477 = vmax.f32 %v4694, %v5349
  %v5478 = vmax.f32 %v4696, %v5350
  %v5479 = vmax.f32 %v4807, %v5351
  %v5480 = vmax.f32 %v4809, %v5352
  %v5481 = vmax.f32 %v4920, %v5353
  %v5482 = vmax.f32 %v4922, %v5354
  %v5483 = vmax.f32 %v5033, %v5355
  %v5484 = vmax.f32 %v5035, %v5356
  %v5485 = vmax.f32 %v5146, %v5357
  %v5486 = vmax.f32 %v5148, %v5358
  %v5487 = vmax.f32 %v5259, %v5359
  %v5488 = vmax.f32 %v5261, %v5360
  %v5489 = vmax.f32 %v4474, %v5361
  %v5490 = vmax.f32 %v4476, %v5362
  %v5491 = vmax.f32 %v4587, %v5363
  %v5492 = vmax.f32 %v4589, %v5364
  %v5493 = vmax.f32 %v4700, %v5365
  %v5494 = vmax.f32 %v4702, %v5366
  %v5495 = vmax.f32 %v4813, %v5367
  %v5496 = vmax.f32 %v4815, %v5368
  %v5497 = vmax.f32 %v4926, %v5369
  %v5498 = vmax.f32 %v4928, %v5370
  %v5499 = vmax.f32 %v5039, %v5371
  %v5500 = vmax.f32 %v5041, %v5372
  %v5501 = vmax.f32 %v5152, %v5373
  %v5502 = vmax.f32 %v5154, %v5374
  %v5503 = vmax.f32 %v5265, %v5375
  %v5504 = vmax.f32 %v5267, %v5376
  %v5505 = vmax.f32 %v4480, %v5377
  %v5506 = vmax.f32 %v4482, %v5378
  %v5507 = vmax.f32 %v4593, %v5379
  %v5508 = vmax.f32 %v4595, %v5380
  %v5509 = vmax.f32 %v4706, %v5381
  %v5510 = vmax.f32 %v4708, %v5382
  %v5511 = vmax.f32 %v4819, %v5383
  %v5512 = vmax.f32 %v4821, %v5384
  %v5513 = vmax.f32 %v4932, %v5385
  %v5514 = vmax.f32 %v4934, %v5386
  %v5515 = vmax.f32 %v5045, %v5387
  %v5516 = vmax.f32 %v5047, %v5388
  %v5517 = vmax.f32 %v5158, %v5389
  %v5518 = vmax.f32 %v5160, %v5390
  %v5519 = vmax.f32 %v5271, %v5391
  %v5520 = vmax.f32 %v5273, %v5392
  %v5521 = vmax.f32 %v4486, %v5393
  %v5522 = vmax.f32 %v4488, %v5394
  %v5523 = vmax.f32 %v4599, %v5395
  %v5524 = vmax.f32 %v4601, %v5396
  %v5525 = vmax.f32 %v4712, %v5397
  %v5526 = vmax.f32 %v4714, %v5398
  %v5527 = vmax.f32 %v4825, %v5399
  %v5528 = vmax.f32 %v4827, %v5400
  %v5529 = vmax.f32 %v4938, %v5401
  %v5530 = vmax.f32 %v4940, %v5402
  %v5531 = vmax.f32 %v5051, %v5403
  %v5532 = vmax.f32 %v5053, %v5404
  %v5533 = vmax.f32 %v5164, %v5405
  %v5534 = vmax.f32 %v5166, %v5406
  %v5535 = vmax.f32 %v5277, %v5407
  %v5536 = vmax.f32 %v5279, %v5408
  %v5537 = vld [vmem:[%s0 + $0x70] sm:$0xf]
  %5539 = vset.pattern.permute.xlu0 64
  %5540 = vperm.xlu0 %5539, %v5537
  %v5541 = vpop.permute.xlu0 %5540
  %vm5543 = vcmask 523264
  %v5544 = vsel %vm5543, %v5537, 0
  %5546 = vmatprep.subr.mxu0 %v5410
  %5547 = vmatpush1.msra.mxu0 %v5409
  %5548 = vmatprep.subr.mxu0 %v5426
  %5549 = vmatpush1.msra.mxu0 %v5425
  %5550 = vmatprep.subr.mxu0 %v5442
  %5551 = vmatpush1.msra.mxu0 %v5441
  %5552 = vmatprep.subr.mxu0 %v5458
  %5553 = vmatpush1.msra.mxu0 %v5457
  %5554 = vmatprep.subr.mxu0 %v5474
  %5555 = vmatpush1.msra.mxu0 %v5473
  %5556 = vmatprep.subr.mxu0 %v5490
  %5557 = vmatpush1.msra.mxu0 %v5489
  %5558 = vmatprep.subr.mxu0 %v5506
  %5559 = vmatpush1.msra.mxu0 %v5505
  %5560 = vmatprep.subr.mxu0 %v5522
  %5561 = vmatpush1.msra.mxu0 %v5521
  %5562 = vmatprep.subr.mxu0 0.0
  %5563 = vmatpush1.msra.mxu0 0.0
  %5564 = vmatprep.subr.mxu0 0.0
  %5565 = vmatpush1.msra.mxu0 0.0
  %5566 = vmatprep.subr.mxu0 0.0
  %5567 = vmatpush1.msra.mxu0 0.0
  %5568 = vmatprep.subr.mxu0 0.0
  %5569 = vmatpush1.msra.mxu0 0.0
  %5570 = vmatprep.subr.mxu0 0.0
  %5571 = vmatpush1.msra.mxu0 0.0
  %5572 = vmatprep.subr.mxu0 0.0
  %5573 = vmatpush1.msra.mxu0 0.0
  %5574 = vmatprep.subr.mxu0 0.0
  %5575 = vmatpush1.msra.mxu0 0.0
  %5576 = vmatprep.subr.mxu0 0.0
  %5577 = vmatpush1.msra.mxu0 0.0
  %5578 = vmatprep.subr.mxu0 0.0
  %5579 = vmatpush1.msra.mxu0 0.0
  %5580 = vmatprep.subr.mxu0 0.0
  %5581 = vmatpush1.msra.mxu0 0.0
  %5582 = vmatprep.subr.mxu0 0.0
  %5583 = vmatpush1.msra.mxu0 0.0
  %5584 = vmatprep.subr.mxu0 0.0
  %5585 = vmatpush1.msra.mxu0 0.0
  %5586 = vmatprep.subr.mxu0 0.0
  %5587 = vmatpush1.msra.mxu0 0.0
  %5588 = vmatprep.subr.mxu0 0.0
  %5589 = vmatpush1.msra.mxu0 0.0
  %5590 = vmatprep.subr.mxu0 0.0
  %5591 = vmatpush1.msra.mxu0 0.0
  %5592 = vmatprep.subr.mxu0 0.0
  %5593 = vmatpush1.msra.mxu0 0.0
  %5594 = vmatprep.subr.mxu0 0.0
  %5595 = vmatpush1.msra.mxu0 0.0
  %5596 = vmatprep.subr.mxu0 0.0
  %5597 = vmatpush1.msra.mxu0 0.0
  %5598 = vmatprep.subr.mxu0 0.0
  %5599 = vmatpush1.msra.mxu0 0.0
  %5600 = vmatprep.subr.mxu0 0.0
  %5601 = vmatpush1.msra.mxu0 0.0
  %5602 = vmatprep.subr.mxu0 0.0
  %5603 = vmatpush1.msra.mxu0 0.0
  %5604 = vmatprep.subr.mxu0 0.0
  %5605 = vmatpush1.msra.mxu0 0.0
  %5606 = vmatprep.subr.mxu0 0.0
  %5607 = vmatpush1.msra.mxu0 0.0
  %5608 = vmatprep.subr.mxu0 0.0
  %5609 = vmatpush1.msra.mxu0 0.0
  %5610 = vmatprep.mubr.f32.mxu0 0.0
  %5611 = vmatmul.mubr.f32.gmra.mrb[0].mxu0 %v5544
  %v5612 = vpop.f32.mrb[0].mxu0
  %v5613 = vadd.f32 %v5541, %v5612
  %v5614 = vpop.f32.mrb[0].mxu0
  %v5615 = vadd.f32 %v5541, %v5614
  %5616 = vdwg.mxu0
  %5617 = vmatprep.subr.mxu0 %v5412
  %5618 = vmatpush1.msra.mxu0 %v5411
  %5619 = vmatprep.subr.mxu0 %v5428
  %5620 = vmatpush1.msra.mxu0 %v5427
  %5621 = vmatprep.subr.mxu0 %v5444
  %5622 = vmatpush1.msra.mxu0 %v5443
  %5623 = vmatprep.subr.mxu0 %v5460
  %5624 = vmatpush1.msra.mxu0 %v5459
  %5625 = vmatprep.subr.mxu0 %v5476
  %5626 = vmatpush1.msra.mxu0 %v5475
  %5627 = vmatprep.subr.mxu0 %v5492
  %5628 = vmatpush1.msra.mxu0 %v5491
  %5629 = vmatprep.subr.mxu0 %v5508
  %5630 = vmatpush1.msra.mxu0 %v5507
  %5631 = vmatprep.subr.mxu0 %v5524
  %5632 = vmatpush1.msra.mxu0 %v5523
  %5633 = vmatprep.subr.mxu0 0.0
  %5634 = vmatpush1.msra.mxu0 0.0
  %5635 = vmatprep.subr.mxu0 0.0
  %5636 = vmatpush1.msra.mxu0 0.0
  %5637 = vmatprep.subr.mxu0 0.0
  %5638 = vmatpush1.msra.mxu0 0.0
  %5639 = vmatprep.subr.mxu0 0.0
  %5640 = vmatpush1.msra.mxu0 0.0
  %5641 = vmatprep.subr.mxu0 0.0
  %5642 = vmatpush1.msra.mxu0 0.0
  %5643 = vmatprep.subr.mxu0 0.0
  %5644 = vmatpush1.msra.mxu0 0.0
  %5645 = vmatprep.subr.mxu0 0.0
  %5646 = vmatpush1.msra.mxu0 0.0
  %5647 = vmatprep.subr.mxu0 0.0
  %5648 = vmatpush1.msra.mxu0 0.0
  %5649 = vmatprep.subr.mxu0 0.0
  %5650 = vmatpush1.msra.mxu0 0.0
  %5651 = vmatprep.subr.mxu0 0.0
  %5652 = vmatpush1.msra.mxu0 0.0
  %5653 = vmatprep.subr.mxu0 0.0
  %5654 = vmatpush1.msra.mxu0 0.0
  %5655 = vmatprep.subr.mxu0 0.0
  %5656 = vmatpush1.msra.mxu0 0.0
  %5657 = vmatprep.subr.mxu0 0.0
  %5658 = vmatpush1.msra.mxu0 0.0
  %5659 = vmatprep.subr.mxu0 0.0
  %5660 = vmatpush1.msra.mxu0 0.0
  %5661 = vmatprep.subr.mxu0 0.0
  %5662 = vmatpush1.msra.mxu0 0.0
  %5663 = vmatprep.subr.mxu0 0.0
  %5664 = vmatpush1.msra.mxu0 0.0
  %5665 = vmatprep.subr.mxu0 0.0
  %5666 = vmatpush1.msra.mxu0 0.0
  %5667 = vmatprep.subr.mxu0 0.0
  %5668 = vmatpush1.msra.mxu0 0.0
  %5669 = vmatprep.subr.mxu0 0.0
  %5670 = vmatpush1.msra.mxu0 0.0
  %5671 = vmatprep.subr.mxu0 0.0
  %5672 = vmatpush1.msra.mxu0 0.0
  %5673 = vmatprep.subr.mxu0 0.0
  %5674 = vmatpush1.msra.mxu0 0.0
  %5675 = vmatprep.subr.mxu0 0.0
  %5676 = vmatpush1.msra.mxu0 0.0
  %5677 = vmatprep.subr.mxu0 0.0
  %5678 = vmatpush1.msra.mxu0 0.0
  %5679 = vmatprep.subr.mxu0 0.0
  %5680 = vmatpush1.msra.mxu0 0.0
  %5681 = vmatprep.mubr.f32.mxu0 0.0
  %5682 = vmatmul.mubr.f32.gmra.mrb[0].mxu0 %v5544
  %v5683 = vpop.f32.mrb[0].mxu0
  %v5684 = vadd.f32 %v5541, %v5683
  %v5685 = vpop.f32.mrb[0].mxu0
  %v5686 = vadd.f32 %v5541, %v5685
  %5687 = vdwg.mxu0
  %5688 = vmatprep.subr.mxu0 %v5414
  %5689 = vmatpush1.msra.mxu0 %v5413
  %5690 = vmatprep.subr.mxu0 %v5430
  %5691 = vmatpush1.msra.mxu0 %v5429
  %5692 = vmatprep.subr.mxu0 %v5446
  %5693 = vmatpush1.msra.mxu0 %v5445
  %5694 = vmatprep.subr.mxu0 %v5462
  %5695 = vmatpush1.msra.mxu0 %v5461
  %5696 = vmatprep.subr.mxu0 %v5478
  %5697 = vmatpush1.msra.mxu0 %v5477
  %5698 = vmatprep.subr.mxu0 %v5494
  %5699 = vmatpush1.msra.mxu0 %v5493
  %5700 = vmatprep.subr.mxu0 %v5510
  %5701 = vmatpush1.msra.mxu0 %v5509
  %5702 = vmatprep.subr.mxu0 %v5526
  %5703 = vmatpush1.msra.mxu0 %v5525
  %5704 = vmatprep.subr.mxu0 0.0
  %5705 = vmatpush1.msra.mxu0 0.0
  %5706 = vmatprep.subr.mxu0 0.0
  %5707 = vmatpush1.msra.mxu0 0.0
  %5708 = vmatprep.subr.mxu0 0.0
  %5709 = vmatpush1.msra.mxu0 0.0
  %5710 = vmatprep.subr.mxu0 0.0
  %5711 = vmatpush1.msra.mxu0 0.0
  %5712 = vmatprep.subr.mxu0 0.0
  %5713 = vmatpush1.msra.mxu0 0.0
  %5714 = vmatprep.subr.mxu0 0.0
  %5715 = vmatpush1.msra.mxu0 0.0
  %5716 = vmatprep.subr.mxu0 0.0
  %5717 = vmatpush1.msra.mxu0 0.0
  %5718 = vmatprep.subr.mxu0 0.0
  %5719 = vmatpush1.msra.mxu0 0.0
  %5720 = vmatprep.subr.mxu0 0.0
  %5721 = vmatpush1.msra.mxu0 0.0
  %5722 = vmatprep.subr.mxu0 0.0
  %5723 = vmatpush1.msra.mxu0 0.0
  %5724 = vmatprep.subr.mxu0 0.0
  %5725 = vmatpush1.msra.mxu0 0.0
  %5726 = vmatprep.subr.mxu0 0.0
  %5727 = vmatpush1.msra.mxu0 0.0
  %5728 = vmatprep.subr.mxu0 0.0
  %5729 = vmatpush1.msra.mxu0 0.0
  %5730 = vmatprep.subr.mxu0 0.0
  %5731 = vmatpush1.msra.mxu0 0.0
  %5732 = vmatprep.subr.mxu0 0.0
  %5733 = vmatpush1.msra.mxu0 0.0
  %5734 = vmatprep.subr.mxu0 0.0
  %5735 = vmatpush1.msra.mxu0 0.0
  %5736 = vmatprep.subr.mxu0 0.0
  %5737 = vmatpush1.msra.mxu0 0.0
  %5738 = vmatprep.subr.mxu0 0.0
  %5739 = vmatpush1.msra.mxu0 0.0
  %5740 = vmatprep.subr.mxu0 0.0
  %5741 = vmatpush1.msra.mxu0 0.0
  %5742 = vmatprep.subr.mxu0 0.0
  %5743 = vmatpush1.msra.mxu0 0.0
  %5744 = vmatprep.subr.mxu0 0.0
  %5745 = vmatpush1.msra.mxu0 0.0
  %5746 = vmatprep.subr.mxu0 0.0
  %5747 = vmatpush1.msra.mxu0 0.0
  %5748 = vmatprep.subr.mxu0 0.0
  %5749 = vmatpush1.msra.mxu0 0.0
  %5750 = vmatprep.subr.mxu0 0.0
  %5751 = vmatpush1.msra.mxu0 0.0
  %5752 = vmatprep.mubr.f32.mxu0 0.0
  %5753 = vmatmul.mubr.f32.gmra.mrb[0].mxu0 %v5544
  %v5754 = vpop.f32.mrb[0].mxu0
  %v5755 = vadd.f32 %v5541, %v5754
  %v5756 = vpop.f32.mrb[0].mxu0
  %v5757 = vadd.f32 %v5541, %v5756
  %5758 = vdwg.mxu0
  %5759 = vmatprep.subr.mxu0 %v5416
  %5760 = vmatpush1.msra.mxu0 %v5415
  %5761 = vmatprep.subr.mxu0 %v5432
  %5762 = vmatpush1.msra.mxu0 %v5431
  %5763 = vmatprep.subr.mxu0 %v5448
  %5764 = vmatpush1.msra.mxu0 %v5447
  %5765 = vmatprep.subr.mxu0 %v5464
  %5766 = vmatpush1.msra.mxu0 %v5463
  %5767 = vmatprep.subr.mxu0 %v5480
  %5768 = vmatpush1.msra.mxu0 %v5479
  %5769 = vmatprep.subr.mxu0 %v5496
  %5770 = vmatpush1.msra.mxu0 %v5495
  %5771 = vmatprep.subr.mxu0 %v5512
  %5772 = vmatpush1.msra.mxu0 %v5511
  %5773 = vmatprep.subr.mxu0 %v5528
  %5774 = vmatpush1.msra.mxu0 %v5527
  %5775 = vmatprep.subr.mxu0 0.0
  %5776 = vmatpush1.msra.mxu0 0.0
  %5777 = vmatprep.subr.mxu0 0.0
  %5778 = vmatpush1.msra.mxu0 0.0
  %5779 = vmatprep.subr.mxu0 0.0
  %5780 = vmatpush1.msra.mxu0 0.0
  %5781 = vmatprep.subr.mxu0 0.0
  %5782 = vmatpush1.msra.mxu0 0.0
  %5783 = vmatprep.subr.mxu0 0.0
  %5784 = vmatpush1.msra.mxu0 0.0
  %5785 = vmatprep.subr.mxu0 0.0
  %5786 = vmatpush1.msra.mxu0 0.0
  %5787 = vmatprep.subr.mxu0 0.0
  %5788 = vmatpush1.msra.mxu0 0.0
  %5789 = vmatprep.subr.mxu0 0.0
  %5790 = vmatpush1.msra.mxu0 0.0
  %5791 = vmatprep.subr.mxu0 0.0
  %5792 = vmatpush1.msra.mxu0 0.0
  %5793 = vmatprep.subr.mxu0 0.0
  %5794 = vmatpush1.msra.mxu0 0.0
  %5795 = vmatprep.subr.mxu0 0.0
  %5796 = vmatpush1.msra.mxu0 0.0
  %5797 = vmatprep.subr.mxu0 0.0
  %5798 = vmatpush1.msra.mxu0 0.0
  %5799 = vmatprep.subr.mxu0 0.0
  %5800 = vmatpush1.msra.mxu0 0.0
  %5801 = vmatprep.subr.mxu0 0.0
  %5802 = vmatpush1.msra.mxu0 0.0
  %5803 = vmatprep.subr.mxu0 0.0
  %5804 = vmatpush1.msra.mxu0 0.0
  %5805 = vmatprep.subr.mxu0 0.0
  %5806 = vmatpush1.msra.mxu0 0.0
  %5807 = vmatprep.subr.mxu0 0.0
  %5808 = vmatpush1.msra.mxu0 0.0
  %5809 = vmatprep.subr.mxu0 0.0
  %5810 = vmatpush1.msra.mxu0 0.0
  %5811 = vmatprep.subr.mxu0 0.0
  %5812 = vmatpush1.msra.mxu0 0.0
  %5813 = vmatprep.subr.mxu0 0.0
  %5814 = vmatpush1.msra.mxu0 0.0
  %5815 = vmatprep.subr.mxu0 0.0
  %5816 = vmatpush1.msra.mxu0 0.0
  %5817 = vmatprep.subr.mxu0 0.0
  %5818 = vmatpush1.msra.mxu0 0.0
  %5819 = vmatprep.subr.mxu0 0.0
  %5820 = vmatpush1.msra.mxu0 0.0
  %5821 = vmatprep.subr.mxu0 0.0
  %5822 = vmatpush1.msra.mxu0 0.0
  %5823 = vmatprep.mubr.f32.mxu0 0.0
  %5824 = vmatmul.mubr.f32.gmra.mrb[0].mxu0 %v5544
  %v5825 = vpop.f32.mrb[0].mxu0
  %v5826 = vadd.f32 %v5541, %v5825
  %v5827 = vpop.f32.mrb[0].mxu0
  %v5828 = vadd.f32 %v5541, %v5827
  %5829 = vdwg.mxu0
  %5830 = vmatprep.subr.mxu0 %v5418
  %5831 = vmatpush1.msra.mxu0 %v5417
  %5832 = vmatprep.subr.mxu0 %v5434
  %5833 = vmatpush1.msra.mxu0 %v5433
  %5834 = vmatprep.subr.mxu0 %v5450
  %5835 = vmatpush1.msra.mxu0 %v5449
  %5836 = vmatprep.subr.mxu0 %v5466
  %5837 = vmatpush1.msra.mxu0 %v5465
  %5838 = vmatprep.subr.mxu0 %v5482
  %5839 = vmatpush1.msra.mxu0 %v5481
  %5840 = vmatprep.subr.mxu0 %v5498
  %5841 = vmatpush1.msra.mxu0 %v5497
  %5842 = vmatprep.subr.mxu0 %v5514
  %5843 = vmatpush1.msra.mxu0 %v5513
  %5844 = vmatprep.subr.mxu0 %v5530
  %5845 = vmatpush1.msra.mxu0 %v5529
  %5846 = vmatprep.subr.mxu0 0.0
  %5847 = vmatpush1.msra.mxu0 0.0
  %5848 = vmatprep.subr.mxu0 0.0
  %5849 = vmatpush1.msra.mxu0 0.0
  %5850 = vmatprep.subr.mxu0 0.0
  %5851 = vmatpush1.msra.mxu0 0.0
  %5852 = vmatprep.subr.mxu0 0.0
  %5853 = vmatpush1.msra.mxu0 0.0
  %5854 = vmatprep.subr.mxu0 0.0
  %5855 = vmatpush1.msra.mxu0 0.0
  %5856 = vmatprep.subr.mxu0 0.0
  %5857 = vmatpush1.msra.mxu0 0.0
  %5858 = vmatprep.subr.mxu0 0.0
  %5859 = vmatpush1.msra.mxu0 0.0
  %5860 = vmatprep.subr.mxu0 0.0
  %5861 = vmatpush1.msra.mxu0 0.0
  %5862 = vmatprep.subr.mxu0 0.0
  %5863 = vmatpush1.msra.mxu0 0.0
  %5864 = vmatprep.subr.mxu0 0.0
  %5865 = vmatpush1.msra.mxu0 0.0
  %5866 = vmatprep.subr.mxu0 0.0
  %5867 = vmatpush1.msra.mxu0 0.0
  %5868 = vmatprep.subr.mxu0 0.0
  %5869 = vmatpush1.msra.mxu0 0.0
  %5870 = vmatprep.subr.mxu0 0.0
  %5871 = vmatpush1.msra.mxu0 0.0
  %5872 = vmatprep.subr.mxu0 0.0
  %5873 = vmatpush1.msra.mxu0 0.0
  %5874 = vmatprep.subr.mxu0 0.0
  %5875 = vmatpush1.msra.mxu0 0.0
  %5876 = vmatprep.subr.mxu0 0.0
  %5877 = vmatpush1.msra.mxu0 0.0
  %5878 = vmatprep.subr.mxu0 0.0
  %5879 = vmatpush1.msra.mxu0 0.0
  %5880 = vmatprep.subr.mxu0 0.0
  %5881 = vmatpush1.msra.mxu0 0.0
  %5882 = vmatprep.subr.mxu0 0.0
  %5883 = vmatpush1.msra.mxu0 0.0
  %5884 = vmatprep.subr.mxu0 0.0
  %5885 = vmatpush1.msra.mxu0 0.0
  %5886 = vmatprep.subr.mxu0 0.0
  %5887 = vmatpush1.msra.mxu0 0.0
  %5888 = vmatprep.subr.mxu0 0.0
  %5889 = vmatpush1.msra.mxu0 0.0
  %5890 = vmatprep.subr.mxu0 0.0
  %5891 = vmatpush1.msra.mxu0 0.0
  %5892 = vmatprep.subr.mxu0 0.0
  %5893 = vmatpush1.msra.mxu0 0.0
  %5894 = vmatprep.mubr.f32.mxu0 0.0
  %5895 = vmatmul.mubr.f32.gmra.mrb[0].mxu0 %v5544
  %v5896 = vpop.f32.mrb[0].mxu0
  %v5897 = vadd.f32 %v5541, %v5896
  %v5898 = vpop.f32.mrb[0].mxu0
  %v5899 = vadd.f32 %v5541, %v5898
  %5900 = vdwg.mxu0
  %5901 = vmatprep.subr.mxu0 %v5420
  %5902 = vmatpush1.msra.mxu0 %v5419
  %5903 = vmatprep.subr.mxu0 %v5436
  %5904 = vmatpush1.msra.mxu0 %v5435
  %5905 = vmatprep.subr.mxu0 %v5452
  %5906 = vmatpush1.msra.mxu0 %v5451
  %5907 = vmatprep.subr.mxu0 %v5468
  %5908 = vmatpush1.msra.mxu0 %v5467
  %5909 = vmatprep.subr.mxu0 %v5484
  %5910 = vmatpush1.msra.mxu0 %v5483
  %5911 = vmatprep.subr.mxu0 %v5500
  %5912 = vmatpush1.msra.mxu0 %v5499
  %5913 = vmatprep.subr.mxu0 %v5516
  %5914 = vmatpush1.msra.mxu0 %v5515
  %5915 = vmatprep.subr.mxu0 %v5532
  %5916 = vmatpush1.msra.mxu0 %v5531
  %5917 = vmatprep.subr.mxu0 0.0
  %5918 = vmatpush1.msra.mxu0 0.0
  %5919 = vmatprep.subr.mxu0 0.0
  %5920 = vmatpush1.msra.mxu0 0.0
  %5921 = vmatprep.subr.mxu0 0.0
  %5922 = vmatpush1.msra.mxu0 0.0
  %5923 = vmatprep.subr.mxu0 0.0
  %5924 = vmatpush1.msra.mxu0 0.0
  %5925 = vmatprep.subr.mxu0 0.0
  %5926 = vmatpush1.msra.mxu0 0.0
  %5927 = vmatprep.subr.mxu0 0.0
  %5928 = vmatpush1.msra.mxu0 0.0
  %5929 = vmatprep.subr.mxu0 0.0
  %5930 = vmatpush1.msra.mxu0 0.0
  %5931 = vmatprep.subr.mxu0 0.0
  %5932 = vmatpush1.msra.mxu0 0.0
  %5933 = vmatprep.subr.mxu0 0.0
  %5934 = vmatpush1.msra.mxu0 0.0
  %5935 = vmatprep.subr.mxu0 0.0
  %5936 = vmatpush1.msra.mxu0 0.0
  %5937 = vmatprep.subr.mxu0 0.0
  %5938 = vmatpush1.msra.mxu0 0.0
  %5939 = vmatprep.subr.mxu0 0.0
  %5940 = vmatpush1.msra.mxu0 0.0
  %5941 = vmatprep.subr.mxu0 0.0
  %5942 = vmatpush1.msra.mxu0 0.0
  %5943 = vmatprep.subr.mxu0 0.0
  %5944 = vmatpush1.msra.mxu0 0.0
  %5945 = vmatprep.subr.mxu0 0.0
  %5946 = vmatpush1.msra.mxu0 0.0
  %5947 = vmatprep.subr.mxu0 0.0
  %5948 = vmatpush1.msra.mxu0 0.0
  %5949 = vmatprep.subr.mxu0 0.0
  %5950 = vmatpush1.msra.mxu0 0.0
  %5951 = vmatprep.subr.mxu0 0.0
  %5952 = vmatpush1.msra.mxu0 0.0
  %5953 = vmatprep.subr.mxu0 0.0
  %5954 = vmatpush1.msra.mxu0 0.0
  %5955 = vmatprep.subr.mxu0 0.0
  %5956 = vmatpush1.msra.mxu0 0.0
  %5957 = vmatprep.subr.mxu0 0.0
  %5958 = vmatpush1.msra.mxu0 0.0
  %5959 = vmatprep.subr.mxu0 0.0
  %5960 = vmatpush1.msra.mxu0 0.0
  %5961 = vmatprep.subr.mxu0 0.0
  %5962 = vmatpush1.msra.mxu0 0.0
  %5963 = vmatprep.subr.mxu0 0.0
  %5964 = vmatpush1.msra.mxu0 0.0
  %5965 = vmatprep.mubr.f32.mxu0 0.0
  %5966 = vmatmul.mubr.f32.gmra.mrb[0].mxu0 %v5544
  %v5967 = vpop.f32.mrb[0].mxu0
  %v5968 = vadd.f32 %v5541, %v5967
  %v5969 = vpop.f32.mrb[0].mxu0
  %v5970 = vadd.f32 %v5541, %v5969
  %5971 = vdwg.mxu0
  %5972 = vmatprep.subr.mxu0 %v5422
  %5973 = vmatpush1.msra.mxu0 %v5421
  %5974 = vmatprep.subr.mxu0 %v5438
  %5975 = vmatpush1.msra.mxu0 %v5437
  %5976 = vmatprep.subr.mxu0 %v5454
  %5977 = vmatpush1.msra.mxu0 %v5453
  %5978 = vmatprep.subr.mxu0 %v5470
  %5979 = vmatpush1.msra.mxu0 %v5469
  %5980 = vmatprep.subr.mxu0 %v5486
  %5981 = vmatpush1.msra.mxu0 %v5485
  %5982 = vmatprep.subr.mxu0 %v5502
  %5983 = vmatpush1.msra.mxu0 %v5501
  %5984 = vmatprep.subr.mxu0 %v5518
  %5985 = vmatpush1.msra.mxu0 %v5517
  %5986 = vmatprep.subr.mxu0 %v5534
  %5987 = vmatpush1.msra.mxu0 %v5533
  %5988 = vmatprep.subr.mxu0 0.0
  %5989 = vmatpush1.msra.mxu0 0.0
  %5990 = vmatprep.subr.mxu0 0.0
  %5991 = vmatpush1.msra.mxu0 0.0
  %5992 = vmatprep.subr.mxu0 0.0
  %5993 = vmatpush1.msra.mxu0 0.0
  %5994 = vmatprep.subr.mxu0 0.0
  %5995 = vmatpush1.msra.mxu0 0.0
  %5996 = vmatprep.subr.mxu0 0.0
  %5997 = vmatpush1.msra.mxu0 0.0
  %5998 = vmatprep.subr.mxu0 0.0
  %5999 = vmatpush1.msra.mxu0 0.0
  %6000 = vmatprep.subr.mxu0 0.0
  %6001 = vmatpush1.msra.mxu0 0.0
  %6002 = vmatprep.subr.mxu0 0.0
  %6003 = vmatpush1.msra.mxu0 0.0
  %6004 = vmatprep.subr.mxu0 0.0
  %6005 = vmatpush1.msra.mxu0 0.0
  %6006 = vmatprep.subr.mxu0 0.0
  %6007 = vmatpush1.msra.mxu0 0.0
  %6008 = vmatprep.subr.mxu0 0.0
  %6009 = vmatpush1.msra.mxu0 0.0
  %6010 = vmatprep.subr.mxu0 0.0
  %6011 = vmatpush1.msra.mxu0 0.0
  %6012 = vmatprep.subr.mxu0 0.0
  %6013 = vmatpush1.msra.mxu0 0.0
  %6014 = vmatprep.subr.mxu0 0.0
  %6015 = vmatpush1.msra.mxu0 0.0
  %6016 = vmatprep.subr.mxu0 0.0
  %6017 = vmatpush1.msra.mxu0 0.0
  %6018 = vmatprep.subr.mxu0 0.0
  %6019 = vmatpush1.msra.mxu0 0.0
  %6020 = vmatprep.subr.mxu0 0.0
  %6021 = vmatpush1.msra.mxu0 0.0
  %6022 = vmatprep.subr.mxu0 0.0
  %6023 = vmatpush1.msra.mxu0 0.0
  %6024 = vmatprep.subr.mxu0 0.0
  %6025 = vmatpush1.msra.mxu0 0.0
  %6026 = vmatprep.subr.mxu0 0.0
  %6027 = vmatpush1.msra.mxu0 0.0
  %6028 = vmatprep.subr.mxu0 0.0
  %6029 = vmatpush1.msra.mxu0 0.0
  %6030 = vmatprep.subr.mxu0 0.0
  %6031 = vmatpush1.msra.mxu0 0.0
  %6032 = vmatprep.subr.mxu0 0.0
  %6033 = vmatpush1.msra.mxu0 0.0
  %6034 = vmatprep.subr.mxu0 0.0
  %6035 = vmatpush1.msra.mxu0 0.0
  %6036 = vmatprep.mubr.f32.mxu0 0.0
  %6037 = vmatmul.mubr.f32.gmra.mrb[0].mxu0 %v5544
  %v6038 = vpop.f32.mrb[0].mxu0
  %v6039 = vadd.f32 %v5541, %v6038
  %v6040 = vpop.f32.mrb[0].mxu0
  %v6041 = vadd.f32 %v5541, %v6040
  %6042 = vdwg.mxu0
  %6043 = vmatprep.subr.mxu0 %v5424
  %6044 = vmatpush1.msra.mxu0 %v5423
  %6045 = vmatprep.subr.mxu0 %v5440
  %6046 = vmatpush1.msra.mxu0 %v5439
  %6047 = vmatprep.subr.mxu0 %v5456
  %6048 = vmatpush1.msra.mxu0 %v5455
  %6049 = vmatprep.subr.mxu0 %v5472
  %6050 = vmatpush1.msra.mxu0 %v5471
  %6051 = vmatprep.subr.mxu0 %v5488
  %6052 = vmatpush1.msra.mxu0 %v5487
  %6053 = vmatprep.subr.mxu0 %v5504
  %6054 = vmatpush1.msra.mxu0 %v5503
  %6055 = vmatprep.subr.mxu0 %v5520
  %6056 = vmatpush1.msra.mxu0 %v5519
  %6057 = vmatprep.subr.mxu0 %v5536
  %6058 = vmatpush1.msra.mxu0 %v5535
  %6059 = vmatprep.subr.mxu0 0.0
  %6060 = vmatpush1.msra.mxu0 0.0
  %6061 = vmatprep.subr.mxu0 0.0
  %6062 = vmatpush1.msra.mxu0 0.0
  %6063 = vmatprep.subr.mxu0 0.0
  %6064 = vmatpush1.msra.mxu0 0.0
  %6065 = vmatprep.subr.mxu0 0.0
  %6066 = vmatpush1.msra.mxu0 0.0
  %6067 = vmatprep.subr.mxu0 0.0
  %6068 = vmatpush1.msra.mxu0 0.0
  %6069 = vmatprep.subr.mxu0 0.0
  %6070 = vmatpush1.msra.mxu0 0.0
  %6071 = vmatprep.subr.mxu0 0.0
  %6072 = vmatpush1.msra.mxu0 0.0
  %6073 = vmatprep.subr.mxu0 0.0
  %6074 = vmatpush1.msra.mxu0 0.0
  %6075 = vmatprep.subr.mxu0 0.0
  %6076 = vmatpush1.msra.mxu0 0.0
  %6077 = vmatprep.subr.mxu0 0.0
  %6078 = vmatpush1.msra.mxu0 0.0
  %6079 = vmatprep.subr.mxu0 0.0
  %6080 = vmatpush1.msra.mxu0 0.0
  %6081 = vmatprep.subr.mxu0 0.0
  %6082 = vmatpush1.msra.mxu0 0.0
  %6083 = vmatprep.subr.mxu0 0.0
  %6084 = vmatpush1.msra.mxu0 0.0
  %6085 = vmatprep.subr.mxu0 0.0
  %6086 = vmatpush1.msra.mxu0 0.0
  %6087 = vmatprep.subr.mxu0 0.0
  %6088 = vmatpush1.msra.mxu0 0.0
  %6089 = vmatprep.subr.mxu0 0.0
  %6090 = vmatpush1.msra.mxu0 0.0
  %6091 = vmatprep.subr.mxu0 0.0
  %6092 = vmatpush1.msra.mxu0 0.0
  %6093 = vmatprep.subr.mxu0 0.0
  %6094 = vmatpush1.msra.mxu0 0.0
  %6095 = vmatprep.subr.mxu0 0.0
  %6096 = vmatpush1.msra.mxu0 0.0
  %6097 = vmatprep.subr.mxu0 0.0
  %6098 = vmatpush1.msra.mxu0 0.0
  %6099 = vmatprep.subr.mxu0 0.0
  %6100 = vmatpush1.msra.mxu0 0.0
  %6101 = vmatprep.subr.mxu0 0.0
  %6102 = vmatpush1.msra.mxu0 0.0
  %6103 = vmatprep.subr.mxu0 0.0
  %6104 = vmatpush1.msra.mxu0 0.0
  %6105 = vmatprep.subr.mxu0 0.0
  %6106 = vmatpush1.msra.mxu0 0.0
  %6107 = vmatprep.mubr.f32.mxu0 0.0
  %6108 = vmatmul.mubr.f32.gmra.mrb[0].mxu0 %v5544
  %v6109 = vpop.f32.mrb[0].mxu0
  %v6110 = vadd.f32 %v5541, %v6109
  %v6111 = vpop.f32.mrb[0].mxu0
  %v6112 = vadd.f32 %v5541, %v6111
  %6113 = vdwg.mxu0
  %v6114 = vtanh.pop %v5613
  %v6115 = vtanh.pop %v5615
  %v6116 = vtanh.pop %v5684
  %v6117 = vtanh.pop %v5686
  %v6118 = vtanh.pop %v5755
  %v6119 = vtanh.pop %v5757
  %v6120 = vtanh.pop %v5826
  %v6121 = vtanh.pop %v5828
  %v6122 = vtanh.pop %v5897
  %v6123 = vtanh.pop %v5899
  %v6124 = vtanh.pop %v5968
  %v6125 = vtanh.pop %v5970
  %v6126 = vtanh.pop %v6039
  %v6127 = vtanh.pop %v6041
  %v6128 = vtanh.pop %v6110
  %v6129 = vtanh.pop %v6112
  %v6146 = vcombine.low %v6114, %v6115
  %v6147 = vcombine.low %v6116, %v6117
  %v6148 = vcombine.low %v6118, %v6119
  %v6149 = vcombine.low %v6120, %v6121
  %v6150 = vcombine.low %v6122, %v6123
  %v6151 = vcombine.low %v6124, %v6125
  %v6152 = vcombine.low %v6126, %v6127
  %v6153 = vcombine.low %v6128, %v6129
  %6162 = vst [vmem:[%s2] sm:$0xff] %v6146
  %6163 = vst [vmem:[%s2 + $0x8] sm:$0xff] %v6147
  %6164 = vst [vmem:[%s2 + $0x10] sm:$0xff] %v6148
  %6165 = vst [vmem:[%s2 + $0x18] sm:$0xff] %v6149
  %6166 = vst [vmem:[%s2 + $0x20] sm:$0xff] %v6150
  %6167 = vst [vmem:[%s2 + $0x28] sm:$0xff] %v6151
  %6168 = vst [vmem:[%s2 + $0x30] sm:$0xff] %v6152
  %6169 = vst [vmem:[%s2 + $0x38] sm:$0xff] %v6153
  // Predicated region
  $region10: #{conv_autoencoder_forward.1} parent=0 // pred_check
    _
  $region11: #{conv_autoencoder_forward.1} parent=0 // pred_check_branch
    %6171 = sbr.rel (0) target = $region13
  $region12: #{conv_autoencoder_forward.1} parent=0 // pred_region
    _
  $region13: #{conv_autoencoder_forward.1} parent=0 // pred_fallthru
    _
  // Predicated region
  $region14: #{conv_autoencoder_forward.1} parent=0 // pred_check
    _
  $region15: #{conv_autoencoder_forward.1} parent=0 // pred_check_branch
    %6173 = sbr.rel (0) target = $region17
  $region16: #{conv_autoencoder_forward.1} parent=0 // pred_region
    _
  $region17: #{conv_autoencoder_forward.1} parent=0 // pred_fallthru
    _

</llo_original>
